<compile_context>
chip_gen: v5e
topology: v5e:2x2
jax: 0.10.0
libtpu: 0.0.40
codegen_flags: <defaults>
</compile_context>

<pallas_src>
import functools

import jax
import jax.numpy as jnp
from jax.experimental import pallas as pl
from jax.experimental.pallas import tpu as pltpu

_EPS = 1e-5                     # torch nn.LayerNorm default
_INV_SQRT2 = 0.7071067811865476


# ------------------------------ VMEM policy -----------------------------------

@functools.lru_cache(maxsize=None)
def _vmem_budget_bytes():
    """Generation-aware scoped-VMEM budget."""
    try:
        info = pltpu.get_tpu_info()
        phys = getattr(info, "vmem_capacity_bytes", None)
        if phys is not None:
            if phys <= 64 * 1024 * 1024:
                return 40 * 1024 * 1024      # v7x: leave compiler headroom
            return 96 * 1024 * 1024          # v5e / v6e: 128 MiB physical
    except Exception:
        pass
    return 48 * 1024 * 1024                  # conservative fallback


def _fused_layer_vmem_estimate(S, W, n_head):
    # bf16 layer weights (double-buffered constant blocks) + activation blocks
    # + generous allowance for in-kernel intermediates / relayouts.
    weights = 2 * 2 * (3 * W * W + W * W + 4 * W * W + 4 * W * W)   # bf16, x2 buf
    act_io = 2 * 2 * (S * W * 4)                                    # x-in + out
    interm = (S * 3 * W * 6            # qkv f32 + bf16
              + 3 * S * W * 2          # q/k/v bf16
              + 2 * n_head * S * S * 4  # scores + probs f32
              + S * 4 * W * 6          # mlp hidden f32 + bf16
              + 6 * S * W * 4)         # residuals / ln / ctx
    return weights + act_io + interm + (2 << 20)


# ------------------------------ in-kernel helpers ------------------------------

def _layernorm(x, w, b):
    # one-pass variance: E[x^2] - mu^2  (one fewer cross-lane reduction)
    mu = jnp.mean(x, axis=-1, keepdims=True)
    var = jnp.mean(x * x, axis=-1, keepdims=True) - mu * mu
    return (x - mu) * jax.lax.rsqrt(var + _EPS) * w + b


def _gelu(x):
    # exact (erf-based) GELU, matching torch.nn.GELU(); f32 math
    return 0.5 * x * (1.0 + jax.lax.erf(x * _INV_SQRT2))


def _bf16(x):
    return x.astype(jnp.bfloat16)


def _attn_body(x, ln1w, ln1b, wqkv, bqkv, wo, bo, n_head):
    """Pre-LN multi-head self-attention residual branch on one (S, W) tile."""
    S, W = x.shape
    dh = W // n_head

    h = _layernorm(x, ln1w, ln1b)
    # 1/sqrt(dh) is folded into the q columns of wqkv/bqkv at init.
    qkv = jnp.dot(_bf16(h), wqkv, preferred_element_type=jnp.float32) + bqkv
    qkv = _bf16(qkv)                         # single cast shared by q/k/v

    # head-major relayout: lane-aligned q/k/v split + one reshape/transpose
    # each (no per-head lane-unaligned slice+stack copies).
    q = jnp.transpose(qkv[:, :W].reshape(S, n_head, dh), (1, 0, 2))
    k = jnp.transpose(qkv[:, W:2 * W].reshape(S, n_head, dh), (1, 0, 2))
    v = jnp.transpose(qkv[:, 2 * W:].reshape(S, n_head, dh), (1, 0, 2))

    # batched QK^T over heads -> (n_head, S, S), f32 accumulation
    s = jax.lax.dot_general(q, k, (((2,), (2,)), ((0,), (0,))),
                            preferred_element_type=jnp.float32)
    s = s - jnp.max(s, axis=-1, keepdims=True)
    p = jnp.exp(s)
    p = p * pl.reciprocal(jnp.sum(p, axis=-1, keepdims=True), approx=True)

    # batched P@V over heads -> (n_head, S, dh)
    ctx = jax.lax.dot_general(_bf16(p), v, (((2,), (1,)), ((0,), (0,))),
                              preferred_element_type=jnp.float32)

    # repack heads along lanes with ONE relayout, then a single full-width
    # (S, W) @ (W, W) output projection.
    ctx_flat = jnp.transpose(_bf16(ctx), (1, 0, 2)).reshape(S, W)
    attn = jnp.dot(ctx_flat, wo, preferred_element_type=jnp.float32) + bo
    return x + attn


def _mlp_body(x, ln2w, ln2b, wfc, bfc, wpr, bpr):
    h = _layernorm(x, ln2w, ln2b)
    fc = jnp.dot(_bf16(h), wfc, preferred_element_type=jnp.float32) + bfc
    fc = _gelu(fc)
    mlp = jnp.dot(_bf16(fc), wpr, preferred_element_type=jnp.float32) + bpr
    return x + mlp


# ------------------------------ kernels ----------------------------------------

def _patch_embed_kernel(a_ref, b_ref, o_ref):
    # (tm, C*p*p) bf16 @ (C*p*p, W) bf16 -> f32 (conv1 has no bias)
    o_ref[...] = jnp.dot(a_ref[...], b_ref[...],
                         preferred_element_type=jnp.float32)


def _layer_kernel(*refs, n_head, fuse_pre):
    # Fully fused residual block: attention + MLP in one call (128-MiB chips).
    if fuse_pre:
        (x_ref, pos_ref, lnp_w, lnp_b,
         ln1w, ln1b, wqkv, bqkv, wo, bo,
         ln2w, ln2b, wfc, bfc, wpr, bpr, o_ref) = refs
    else:
        (x_ref, ln1w, ln1b, wqkv, bqkv, wo, bo,
         ln2w, ln2b, wfc, bfc, wpr, bpr, o_ref) = refs

    x = x_ref[0]                                    # (S, W) f32
    if fuse_pre:
        x = _layernorm(x + pos_ref[...], lnp_w[...], lnp_b[...])
    x = _attn_body(x, ln1w[...], ln1b[...], wqkv[...], bqkv[...],
                   wo[...], bo[...], n_head)
    o_ref[0] = _mlp_body(x, ln2w[...], ln2b[...], wfc[...], bfc[...],
                         wpr[...], bpr[...])


def _attn_kernel(*refs, n_head, fuse_pre):
    if fuse_pre:
        (x_ref, pos_ref, lnp_w, lnp_b,
         ln1w, ln1b, wqkv, bqkv, wo, bo, o_ref) = refs
    else:
        (x_ref, ln1w, ln1b, wqkv, bqkv, wo, bo, o_ref) = refs

    x = x_ref[0]
    if fuse_pre:
        x = _layernorm(x + pos_ref[...], lnp_w[...], lnp_b[...])
    o_ref[0] = _attn_body(x, ln1w[...], ln1b[...], wqkv[...], bqkv[...],
                          wo[...], bo[...], n_head)


def _mlp_kernel(x_ref, ln2w_ref, ln2b_ref, wfc_ref, bfc_ref, wpr_ref, bpr_ref,
                o_ref, h_scr, acc_scr):
    # grid = (nm, nk); batch-flattened row tiles, 4W hidden tiled along k.
    kk = pl.program_id(1)
    nk = pl.num_programs(1)

    @pl.when(kk == 0)
    def _():
        h_scr[...] = _bf16(_layernorm(x_ref[...], ln2w_ref[...], ln2b_ref[...]))
        acc_scr[...] = jnp.zeros_like(acc_scr)

    fc = jnp.dot(h_scr[...], wfc_ref[...],
                 preferred_element_type=jnp.float32) + bfc_ref[...]   # (tm, tk)
    fc = _gelu(fc)
    acc_scr[...] += jnp.dot(_bf16(fc), wpr_ref[...],
                            preferred_element_type=jnp.float32)       # (tm, W)

    @pl.when(kk == nk - 1)
    def _():
        o_ref[...] = x_ref[...] + acc_scr[...] + bpr_ref[...]


def _head_kernel(x_ref, w_ref, b_ref, proj_ref, o_ref):
    # ln_post on CLS token + final projection
    h = _layernorm(x_ref[...], w_ref[...], b_ref[...])
    o_ref[...] = jnp.dot(_bf16(h), proj_ref[...],
                         preferred_element_type=jnp.float32)


# ------------------------------ pallas_call wrappers ---------------------------

def _const_spec(shape):
    n = len(shape)
    return pl.BlockSpec(shape, lambda *g: (0,) * n)


def patch_embed(patches_bf16, w_bf16, vmem_limit):
    M, K = patches_bf16.shape
    _, N = w_bf16.shape
    tm = M if M <= 1024 else 1024          # big M tiles; weight stays resident
    grid = (pl.cdiv(M, tm),)
    return pl.pallas_call(
        _patch_embed_kernel,
        out_shape=jax.ShapeDtypeStruct((M, N), jnp.float32),
        grid=grid,
        in_specs=[pl.BlockSpec((tm, K), lambda i: (i, 0)),
                  pl.BlockSpec((K, N), lambda i: (0, 0))],
        out_specs=pl.BlockSpec((tm, N), lambda i: (i, 0)),
        compiler_params=pltpu.CompilerParams(
            dimension_semantics=("parallel",),
            vmem_limit_bytes=vmem_limit),
    )(patches_bf16, w_bf16)


def layer_block(x, lw, n_head, pre, vmem_limit):
    """Fused attention + MLP residual block (one pallas_call per layer)."""
    B, S, W = x.shape
    fuse_pre = pre is not None
    args = [x]
    if fuse_pre:
        pos, lnpre_w, lnpre_b = pre
        args += [pos, lnpre_w.reshape(1, W), lnpre_b.reshape(1, W)]
    args += [lw["ln1_w"], lw["ln1_b"], lw["wqkv_t"], lw["bqkv"],
             lw["wo_t"], lw["bo"],
             lw["ln2_w"], lw["ln2_b"], lw["wfc_t"], lw["bfc"],
             lw["wpr_t"], lw["bpr"]]
    in_specs = [pl.BlockSpec((1, S, W), lambda b: (b, 0, 0))]
    in_specs += [_const_spec(a.shape) for a in args[1:]]
    return pl.pallas_call(
        functools.partial(_layer_kernel, n_head=n_head, fuse_pre=fuse_pre),
        out_shape=jax.ShapeDtypeStruct((B, S, W), jnp.float32),
        grid=(B,),
        in_specs=in_specs,
        out_specs=pl.BlockSpec((1, S, W), lambda b: (b, 0, 0)),
        compiler_params=pltpu.CompilerParams(
            dimension_semantics=("parallel",),
            vmem_limit_bytes=vmem_limit),
    )(*args)


def attention_block(x, lw, n_head, pre, vmem_limit):
    B, S, W = x.shape
    fuse_pre = pre is not None
    args = [x]
    if fuse_pre:
        pos, lnpre_w, lnpre_b = pre
        args += [pos, lnpre_w.reshape(1, W), lnpre_b.reshape(1, W)]
    args += [lw["ln1_w"], lw["ln1_b"], lw["wqkv_t"], lw["bqkv"],
             lw["wo_t"], lw["bo"]]
    in_specs = [pl.BlockSpec((1, S, W), lambda b: (b, 0, 0))]
    in_specs += [_const_spec(a.shape) for a in args[1:]]
    return pl.pallas_call(
        functools.partial(_attn_kernel, n_head=n_head, fuse_pre=fuse_pre),
        out_shape=jax.ShapeDtypeStruct((B, S, W), jnp.float32),
        grid=(B,),
        in_specs=in_specs,
        out_specs=pl.BlockSpec((1, S, W), lambda b: (b, 0, 0)),
        compiler_params=pltpu.CompilerParams(
            dimension_semantics=("parallel",),
            vmem_limit_bytes=vmem_limit),
    )(*args)


def mlp_block(x, lw, vmem_limit):
    B, S, W = x.shape
    H4 = lw["wfc_t"].shape[1]
    # batch-flattened rows: fewer, bigger M tiles -> weights re-streamed per
    # large row tile instead of per sequence, better MXU fill.
    M = B * S
    x2d = x.reshape(M, W)
    tm = M if M <= 1024 else 512
    if H4 <= 512:
        tk = H4
    else:
        tk = next((t for t in (512, 384, 256, 128) if H4 % t == 0), H4)
    nm = pl.cdiv(M, tm)
    nk = H4 // tk
    out = pl.pallas_call(
        _mlp_kernel,
        out_shape=jax.ShapeDtypeStruct((M, W), jnp.float32),
        grid=(nm, nk),
        in_specs=[
            pl.BlockSpec((tm, W), lambda m, k: (m, 0)),
            _const_spec(lw["ln2_w"].shape),
            _const_spec(lw["ln2_b"].shape),
            pl.BlockSpec((W, tk), lambda m, k: (0, k)),
            pl.BlockSpec((1, tk), lambda m, k: (0, k)),
            pl.BlockSpec((tk, W), lambda m, k: (k, 0)),
            _const_spec(lw["bpr"].shape),
        ],
        out_specs=pl.BlockSpec((tm, W), lambda m, k: (m, 0)),
        scratch_shapes=[pltpu.VMEM((tm, W), jnp.bfloat16),   # ln_2(x), cached over k
                        pltpu.VMEM((tm, W), jnp.float32)],   # f32 accumulator
        compiler_params=pltpu.CompilerParams(
            dimension_semantics=("parallel", "arbitrary"),
            vmem_limit_bytes=vmem_limit),
    )(x2d, lw["ln2_w"], lw["ln2_b"], lw["wfc_t"], lw["bfc"],
      lw["wpr_t"], lw["bpr"])
    return out.reshape(B, S, W)


def head(x_cls, w, b, proj, vmem_limit):
    B, W = x_cls.shape
    _, O = proj.shape
    return pl.pallas_call(
        _head_kernel,
        out_shape=jax.ShapeDtypeStruct((B, O), jnp.float32),
        grid=(1,),
        in_specs=[_const_spec((B, W)), _const_spec((1, W)),
                  _const_spec((1, W)), _const_spec((W, O))],
        out_specs=_const_spec((B, O)),
        compiler_params=pltpu.CompilerParams(vmem_limit_bytes=vmem_limit),
    )(x_cls, w.reshape(1, -1), b.reshape(1, -1), proj)


# ------------------------------ parameters & forward ---------------------------

def init_params(key, image_size, patch_size, width, layers, heads, output_dim,
                channels=3):
    n_patches = (image_size // patch_size) ** 2
    scale = width ** (-0.5)
    qscale = float(width // heads) ** (-0.5)

    def randn(k, shape, std):
        return std * jax.random.normal(k, shape, jnp.float32)

    k_conv, k_cls, k_pos, k_proj, k_blocks = jax.random.split(key, 5)
    conv_w = randn(k_conv, (width, channels, patch_size, patch_size), 0.02)
    p = {
        # conv1 weight pre-flattened to a (C*p*p, W) matmul operand, bf16 for MXU
        "conv_w_flat": conv_w.reshape(width, channels * patch_size * patch_size)
                             .T.astype(jnp.bfloat16),
        "cls": randn(k_cls, (width,), scale),
        "pos": randn(k_pos, (n_patches + 1, width), scale),
        "ln_pre_w": jnp.ones((width,), jnp.float32),
        "ln_pre_b": jnp.zeros((width,), jnp.float32),
        "ln_post_w": jnp.ones((width,), jnp.float32),
        "ln_post_b": jnp.zeros((width,), jnp.float32),
        "proj": randn(k_proj, (width, output_dim), scale).astype(jnp.bfloat16),
        "blocks": [],
    }
    for l in range(layers):
        kl = jax.random.fold_in(k_blocks, l)
        k1, k2, k3, k4, k5, k6, k7, k8 = jax.random.split(kl, 8)
        # torch shapes: in_proj (3W,W), out_proj (W,W), c_fc (4W,W), c_proj (W,4W)
        # stored pre-transposed (x @ w_t); matmul weights bf16, biases/LN f32.
        wqkv_t = randn(k1, (3 * width, width), 0.02).T      # (W, 3W)
        bqkv = randn(k2, (1, 3 * width), 0.02)
        # fold the 1/sqrt(dh) attention scale into the q columns / bias.
        wqkv_t = wqkv_t.at[:, :width].multiply(qscale)
        bqkv = bqkv.at[:, :width].multiply(qscale)
        blk = {
            "ln1_w": jnp.ones((1, width), jnp.float32),
            "ln1_b": jnp.zeros((1, width), jnp.float32),
            "wqkv_t": wqkv_t.astype(jnp.bfloat16),
            "bqkv": bqkv,
            "wo_t": randn(k3, (width, width), 0.02).T.astype(jnp.bfloat16),
            "bo": randn(k4, (1, width), 0.02),
            "ln2_w": jnp.ones((1, width), jnp.float32),
            "ln2_b": jnp.zeros((1, width), jnp.float32),
            "wfc_t": randn(k5, (4 * width, width), 0.02).T.astype(jnp.bfloat16),
            "bfc": randn(k6, (1, 4 * width), 0.02),
            "wpr_t": randn(k7, (width, 4 * width), 0.02).T.astype(jnp.bfloat16),
            "bpr": randn(k8, (1, width), 0.02),
        }
        p["blocks"].append(blk)
    return p


def visual_transformer_forward(x_nchw, params, *, patch_size, heads):
    B, C, H, Wimg = x_nchw.shape
    pz = patch_size
    hp, wp = H // pz, Wimg // pz
    n = hp * wp
    width = params["pos"].shape[1]
    S = n + 1
    budget = _vmem_budget_bytes()

    # conv1 (stride == kernel == patch_size, no bias) as patchify + tiled matmul
    patches = (x_nchw.reshape(B, C, hp, pz, wp, pz)
               .transpose(0, 2, 4, 1, 3, 5)
               .reshape(B * n, C * pz * pz)).astype(jnp.bfloat16)
    emb = patch_embed(patches, params["conv_w_flat"], budget).reshape(B, n, width)

    # prepend class token (positional embedding + ln_pre are fused into layer 0)
    cls = jnp.broadcast_to(params["cls"].reshape(1, 1, width), (B, 1, width))
    x = jnp.concatenate([cls, emb], axis=1)                 # (B, S, W) f32

    blocks = params["blocks"]
    assert blocks, "VisualTransformer with zero layers is not supported"
    pre = (params["pos"], params["ln_pre_w"], params["ln_pre_b"])

    # Fuse attention + MLP per layer when it fits the per-generation VMEM
    # budget (v5e/v6e always for ViT-class configs); otherwise split so the
    # k-tiled MLP respects v7x's 64 MiB VMEM.
    fuse_layer = _fused_layer_vmem_estimate(S, width, heads) <= budget

    for i, lw in enumerate(blocks):
        pre_i = pre if i == 0 else None
        if fuse_layer:
            x = layer_block(x, lw, heads, pre_i, budget)
        else:
            x = attention_block(x, lw, heads, pre_i, budget)
            x = mlp_block(x, lw, budget)

    # ln_post on CLS token + projection
    return head(x[:, 0, :], params["ln_post_w"], params["ln_post_b"],
                params["proj"], budget)


# ------------------------------ main --------------------------------------------

if __name__ == "__main__":
    image_size, patch_size = 16, 8
    width, layers, heads, output_dim = 32, 2, 4, 16
    batch = 2

    key = jax.random.PRNGKey(0)
    pkey, xkey = jax.random.split(key)
    params = init_params(pkey, image_size, patch_size, width, layers, heads,
                         output_dim)
    x = jax.random.normal(xkey, (batch, 3, image_size, image_size), jnp.float32)

    fwd = jax.jit(functools.partial(visual_transformer_forward,
                                    patch_size=patch_size, heads=heads))
    out = jax.block_until_ready(fwd(x, params))
    assert out.shape == (batch, output_dim) and out.dtype == jnp.float32
    print("KERNEL_OK")
</pallas_src>

<mosaic_0001>
module attributes {stable_mosaic.version = 11 : i64} {
  func.func @_patch_embed_kernel(%arg0: i32, %arg1: memref<8x192xbf16, #tpu.memory_space<vmem>>, %arg2: memref<192x32xbf16, #tpu.memory_space<vmem>>, %arg3: memref<8x32xf32, #tpu.memory_space<vmem>>) attributes {dimension_semantics = [#tpu.dimension_semantics<parallel>], iteration_bounds = array<i64: 1>, scalar_prefetch = 0 : i64, scratch_operands = 0 : i64, tpu.core_type = #tpu.core_type<tc>, window_params = [{transform_indices = @transform_0, window_bounds = array<i64: 8, 192>}, {pipeline_mode = #tpu.pipeline_mode<synchronous>, transform_indices = @transform_1, window_bounds = array<i64: 192, 32>}, {transform_indices = @transform_2, window_bounds = array<i64: 8, 32>}]} {
    %c0 = arith.constant 0 : index
    %c0_0 = arith.constant 0 : index
    %0 = vector.load %arg1[%c0, %c0_0] : memref<8x192xbf16, #tpu.memory_space<vmem>>, vector<8x192xbf16>
    %c0_1 = arith.constant 0 : index
    %c0_2 = arith.constant 0 : index
    %1 = vector.load %arg2[%c0_1, %c0_2] : memref<192x32xbf16, #tpu.memory_space<vmem>>, vector<192x32xbf16>
    %cst = arith.constant dense<0.000000e+00> : vector<8x32xf32>
    %2 = tpu.matmul %0, %1, %cst {dimension_numbers = #tpu.dot_dimension_numbers<[1], [0], [0], [1], [0, 0, 1, 1], [], []>} : vector<8x192xbf16>, vector<192x32xbf16>, vector<8x32xf32> -> vector<8x32xf32>
    %c0_3 = arith.constant 0 : index
    %c0_4 = arith.constant 0 : index
    %3 = vector.load %arg3[%c0_3, %c0_4] : memref<8x32xf32, #tpu.memory_space<vmem>>, vector<8x32xf32>
    tpu.vector_store %arg3[%c0_3, %c0_4], %2 {strides = array<i32>} : memref<8x32xf32, #tpu.memory_space<vmem>>, vector<8x32xf32>,
    return
  }
  func.func @transform_0(%arg0: i32) -> (i32, i32) {
    %c0_i32 = arith.constant 0 : i32
    %c0_i32_0 = arith.constant 0 : i32
    return %arg0, %c0_i32 : i32, i32
  }
  func.func @transform_1(%arg0: i32) -> (i32, i32) {
    %c0_i32 = arith.constant 0 : i32
    %c0_i32_0 = arith.constant 0 : i32
    %c0_i32_1 = arith.constant 0 : i32
    return %c0_i32, %c0_i32_0 : i32, i32
  }
  func.func @transform_2(%arg0: i32) -> (i32, i32) {
    %c0_i32 = arith.constant 0 : i32
    %c0_i32_0 = arith.constant 0 : i32
    return %arg0, %c0_i32 : i32, i32
  }
}

module attributes {stable_mosaic.version = 11 : i64} {
  func.func @_head_kernel(%arg0: i32, %arg1: memref<2x32xf32, #tpu.memory_space<vmem>>, %arg2: memref<1x32xf32, #tpu.memory_space<vmem>>, %arg3: memref<1x32xf32, #tpu.memory_space<vmem>>, %arg4: memref<32x16xbf16, #tpu.memory_space<vmem>>, %arg5: memref<2x16xf32, #tpu.memory_space<vmem>>) attributes {dimension_semantics = [#tpu.dimension_semantics<arbitrary>], iteration_bounds = array<i64: 1>, scalar_prefetch = 0 : i64, scratch_operands = 0 : i64, tpu.core_type = #tpu.core_type<tc>, window_params = [{pipeline_mode = #tpu.pipeline_mode<synchronous>, transform_indices = @transform_0, window_bounds = array<i64: 2, 32>}, {pipeline_mode = #tpu.pipeline_mode<synchronous>, transform_indices = @transform_1, window_bounds = array<i64: 1, 32>}, {pipeline_mode = #tpu.pipeline_mode<synchronous>, transform_indices = @transform_2, window_bounds = array<i64: 1, 32>}, {pipeline_mode = #tpu.pipeline_mode<synchronous>, transform_indices = @transform_3, window_bounds = array<i64: 32, 16>}, {pipeline_mode = #tpu.pipeline_mode<synchronous>, transform_indices = @transform_4, window_bounds = array<i64: 2, 16>}]} {
    %c0 = arith.constant 0 : index
    %c0_0 = arith.constant 0 : index
    %0 = vector.load %arg1[%c0, %c0_0] : memref<2x32xf32, #tpu.memory_space<vmem>>, vector<2x32xf32>
    %c0_1 = arith.constant 0 : index
    %c0_2 = arith.constant 0 : index
    %1 = vector.load %arg2[%c0_1, %c0_2] : memref<1x32xf32, #tpu.memory_space<vmem>>, vector<1x32xf32>
    %c0_3 = arith.constant 0 : index
    %c0_4 = arith.constant 0 : index
    %2 = vector.load %arg3[%c0_3, %c0_4] : memref<1x32xf32, #tpu.memory_space<vmem>>, vector<1x32xf32>
    %cst = arith.constant dense<0.000000e+00> : vector<2xf32>
    %3 = vector.multi_reduction <add>, %0, %cst [1] : vector<2x32xf32> to vector<2xf32>
    %4 = vector.shape_cast %3 : vector<2xf32> to vector<2x1xf32>
    %cst_5 = arith.constant 3.200000e+01 : f32
    %5 = vector.broadcast %cst_5 : f32 to vector<2x1xf32>
    %6 = arith.divf %4, %5 : vector<2x1xf32>
    %7 = arith.mulf %0, %0 : vector<2x32xf32>
    %cst_6 = arith.constant dense<0.000000e+00> : vector<2xf32>
    %8 = vector.multi_reduction <add>, %7, %cst_6 [1] : vector<2x32xf32> to vector<2xf32>
    %9 = vector.shape_cast %8 : vector<2xf32> to vector<2x1xf32>
    %cst_7 = arith.constant 3.200000e+01 : f32
    %10 = vector.broadcast %cst_7 : f32 to vector<2x1xf32>
    %11 = arith.divf %9, %10 : vector<2x1xf32>
    %12 = arith.mulf %6, %6 : vector<2x1xf32>
    %13 = arith.subf %11, %12 : vector<2x1xf32>
    %14 = vector.broadcast %6 : vector<2x1xf32> to vector<2x32xf32>
    %15 = arith.subf %0, %14 : vector<2x32xf32>
    %cst_8 = arith.constant 9.99999974E-6 : f32
    %16 = vector.broadcast %cst_8 : f32 to vector<2x1xf32>
    %17 = arith.addf %13, %16 : vector<2x1xf32>
    %18 = math.rsqrt %17 : vector<2x1xf32>
    %19 = vector.broadcast %18 : vector<2x1xf32> to vector<2x32xf32>
    %20 = arith.mulf %15, %19 : vector<2x32xf32>
    %21 = vector.broadcast %1 : vector<1x32xf32> to vector<2x32xf32>
    %22 = arith.mulf %20, %21 : vector<2x32xf32>
    %23 = vector.broadcast %2 : vector<1x32xf32> to vector<2x32xf32>
    %24 = arith.addf %22, %23 : vector<2x32xf32>
    %25 = arith.truncf %24 : vector<2x32xf32> to vector<2x32xbf16>
    %c0_9 = arith.constant 0 : index
    %c0_10 = arith.constant 0 : index
    %26 = vector.load %arg4[%c0_9, %c0_10] : memref<32x16xbf16, #tpu.memory_space<vmem>>, vector<32x16xbf16>
    %cst_11 = arith.constant dense<0.000000e+00> : vector<2x16xf32>
    %27 = tpu.matmul %25, %26, %cst_11 {dimension_numbers = #tpu.dot_dimension_numbers<[1], [0], [0], [1], [0, 0, 1, 1], [], []>} : vector<2x32xbf16>, vector<32x16xbf16>, vector<2x16xf32> -> vector<2x16xf32>
    %c0_12 = arith.constant 0 : index
    %c0_13 = arith.constant 0 : index
    %28 = vector.load %arg5[%c0_12, %c0_13] : memref<2x16xf32, #tpu.memory_space<vmem>>, vector<2x16xf32>
    tpu.vector_store %arg5[%c0_12, %c0_13], %27 {strides = array<i32>} : memref<2x16xf32, #tpu.memory_space<vmem>>, vector<2x16xf32>,
    return
  }
  func.func @transform_0(%arg0: i32) -> (i32, i32) {
    %c0_i32 = arith.constant 0 : i32
    %c0_i32_0 = arith.constant 0 : i32
    %c0_i32_1 = arith.constant 0 : i32
    return %c0_i32, %c0_i32_0 : i32, i32
  }
  func.func @transform_1(%arg0: i32) -> (i32, i32) {
    %c0_i32 = arith.constant 0 : i32
    %c0_i32_0 = arith.constant 0 : i32
    %c0_i32_1 = arith.constant 0 : i32
    return %c0_i32, %c0_i32_0 : i32, i32
  }
  func.func @transform_2(%arg0: i32) -> (i32, i32) {
    %c0_i32 = arith.constant 0 : i32
    %c0_i32_0 = arith.constant 0 : i32
    %c0_i32_1 = arith.constant 0 : i32
    return %c0_i32, %c0_i32_0 : i32, i32
  }
  func.func @transform_3(%arg0: i32) -> (i32, i32) {
    %c0_i32 = arith.constant 0 : i32
    %c0_i32_0 = arith.constant 0 : i32
    %c0_i32_1 = arith.constant 0 : i32
    return %c0_i32, %c0_i32_0 : i32, i32
  }
  func.func @transform_4(%arg0: i32) -> (i32, i32) {
    %c0_i32 = arith.constant 0 : i32
    %c0_i32_0 = arith.constant 0 : i32
    %c0_i32_1 = arith.constant 0 : i32
    return %c0_i32, %c0_i32_0 : i32, i32
  }
}

module attributes {stable_mosaic.version = 11 : i64} {
  func.func @_layer_kernel(%arg0: i32, %arg1: memref<1x5x32xf32, #tpu.memory_space<vmem>>, %arg2: memref<5x32xf32, #tpu.memory_space<vmem>>, %arg3: memref<1x32xf32, #tpu.memory_space<vmem>>, %arg4: memref<1x32xf32, #tpu.memory_space<vmem>>, %arg5: memref<1x32xf32, #tpu.memory_space<vmem>>, %arg6: memref<1x32xf32, #tpu.memory_space<vmem>>, %arg7: memref<32x96xbf16, #tpu.memory_space<vmem>>, %arg8: memref<1x96xf32, #tpu.memory_space<vmem>>, %arg9: memref<32x32xbf16, #tpu.memory_space<vmem>>, %arg10: memref<1x32xf32, #tpu.memory_space<vmem>>, %arg11: memref<1x32xf32, #tpu.memory_space<vmem>>, %arg12: memref<1x32xf32, #tpu.memory_space<vmem>>, %arg13: memref<32x128xbf16, #tpu.memory_space<vmem>>, %arg14: memref<1x128xf32, #tpu.memory_space<vmem>>, %arg15: memref<128x32xbf16, #tpu.memory_space<vmem>>, %arg16: memref<1x32xf32, #tpu.memory_space<vmem>>, %arg17: memref<1x5x32xf32, #tpu.memory_space<vmem>>) attributes {dimension_semantics = [#tpu.dimension_semantics<parallel>], iteration_bounds = array<i64: 2>, scalar_prefetch = 0 : i64, scratch_operands = 0 : i64, tpu.core_type = #tpu.core_type<tc>, window_params = [{transform_indices = @transform_0, window_bounds = array<i64: 1, 5, 32>}, {pipeline_mode = #tpu.pipeline_mode<synchronous>, transform_indices = @transform_1, window_bounds = array<i64: 5, 32>}, {pipeline_mode = #tpu.pipeline_mode<synchronous>, transform_indices = @transform_2, window_bounds = array<i64: 1, 32>}, {pipeline_mode = #tpu.pipeline_mode<synchronous>, transform_indices = @transform_3, window_bounds = array<i64: 1, 32>}, {pipeline_mode = #tpu.pipeline_mode<synchronous>, transform_indices = @transform_4, window_bounds = array<i64: 1, 32>}, {pipeline_mode = #tpu.pipeline_mode<synchronous>, transform_indices = @transform_5, window_bounds = array<i64: 1, 32>}, {pipeline_mode = #tpu.pipeline_mode<synchronous>, transform_indices = @transform_6, window_bounds = array<i64: 32, 96>}, {pipeline_mode = #tpu.pipeline_mode<synchronous>, transform_indices = @transform_7, window_bounds = array<i64: 1, 96>}, {pipeline_mode = #tpu.pipeline_mode<synchronous>, transform_indices = @transform_8, window_bounds = array<i64: 32, 32>}, {pipeline_mode = #tpu.pipeline_mode<synchronous>, transform_indices = @transform_9, window_bounds = array<i64: 1, 32>}, {pipeline_mode = #tpu.pipeline_mode<synchronous>, transform_indices = @transform_10, window_bounds = array<i64: 1, 32>}, {pipeline_mode = #tpu.pipeline_mode<synchronous>, transform_indices = @transform_11, window_bounds = array<i64: 1, 32>}, {pipeline_mode = #tpu.pipeline_mode<synchronous>, transform_indices = @transform_12, window_bounds = array<i64: 32, 128>}, {pipeline_mode = #tpu.pipeline_mode<synchronous>, transform_indices = @transform_13, window_bounds = array<i64: 1, 128>}, {pipeline_mode = #tpu.pipeline_mode<synchronous>, transform_indices = @transform_14, window_bounds = array<i64: 128, 32>}, {pipeline_mode = #tpu.pipeline_mode<synchronous>, transform_indices = @transform_15, window_bounds = array<i64: 1, 32>}, {transform_indices = @transform_16, window_bounds = array<i64: 1, 5, 32>}]} {
    %c0 = arith.constant 0 : index
    %c0_0 = arith.constant 0 : index
    %c0_1 = arith.constant 0 : index
    %0 = vector.load %arg1[%c0, %c0_0, %c0_1] : memref<1x5x32xf32, #tpu.memory_space<vmem>>, vector<1x5x32xf32>
    %1 = vector.shape_cast %0 : vector<1x5x32xf32> to vector<5x32xf32>
    %c0_2 = arith.constant 0 : index
    %c0_3 = arith.constant 0 : index
    %2 = vector.load %arg2[%c0_2, %c0_3] : memref<5x32xf32, #tpu.memory_space<vmem>>, vector<5x32xf32>
    %3 = arith.addf %1, %2 : vector<5x32xf32>
    %c0_4 = arith.constant 0 : index
    %c0_5 = arith.constant 0 : index
    %4 = vector.load %arg3[%c0_4, %c0_5] : memref<1x32xf32, #tpu.memory_space<vmem>>, vector<1x32xf32>
    %c0_6 = arith.constant 0 : index
    %c0_7 = arith.constant 0 : index
    %5 = vector.load %arg4[%c0_6, %c0_7] : memref<1x32xf32, #tpu.memory_space<vmem>>, vector<1x32xf32>
    %cst = arith.constant dense<0.000000e+00> : vector<5xf32>
    %6 = vector.multi_reduction <add>, %3, %cst [1] : vector<5x32xf32> to vector<5xf32>
    %7 = vector.shape_cast %6 : vector<5xf32> to vector<5x1xf32>
    %cst_8 = arith.constant 3.200000e+01 : f32
    %8 = vector.broadcast %cst_8 : f32 to vector<5x1xf32>
    %9 = arith.divf %7, %8 : vector<5x1xf32>
    %10 = arith.mulf %3, %3 : vector<5x32xf32>
    %cst_9 = arith.constant dense<0.000000e+00> : vector<5xf32>
    %11 = vector.multi_reduction <add>, %10, %cst_9 [1] : vector<5x32xf32> to vector<5xf32>
    %12 = vector.shape_cast %11 : vector<5xf32> to vector<5x1xf32>
    %cst_10 = arith.constant 3.200000e+01 : f32
    %13 = vector.broadcast %cst_10 : f32 to vector<5x1xf32>
    %14 = arith.divf %12, %13 : vector<5x1xf32>
    %15 = arith.mulf %9, %9 : vector<5x1xf32>
    %16 = arith.subf %14, %15 : vector<5x1xf32>
    %17 = vector.broadcast %9 : vector<5x1xf32> to vector<5x32xf32>
    %18 = arith.subf %3, %17 : vector<5x32xf32>
    %cst_11 = arith.constant 9.99999974E-6 : f32
    %19 = vector.broadcast %cst_11 : f32 to vector<5x1xf32>
    %20 = arith.addf %16, %19 : vector<5x1xf32>
    %21 = math.rsqrt %20 : vector<5x1xf32>
    %22 = vector.broadcast %21 : vector<5x1xf32> to vector<5x32xf32>
    %23 = arith.mulf %18, %22 : vector<5x32xf32>
    %24 = vector.broadcast %4 : vector<1x32xf32> to vector<5x32xf32>
    %25 = arith.mulf %23, %24 : vector<5x32xf32>
    %26 = vector.broadcast %5 : vector<1x32xf32> to vector<5x32xf32>
    %27 = arith.addf %25, %26 : vector<5x32xf32>
    %c0_12 = arith.constant 0 : index
    %c0_13 = arith.constant 0 : index
    %28 = vector.load %arg5[%c0_12, %c0_13] : memref<1x32xf32, #tpu.memory_space<vmem>>, vector<1x32xf32>
    %c0_14 = arith.constant 0 : index
    %c0_15 = arith.constant 0 : index
    %29 = vector.load %arg6[%c0_14, %c0_15] : memref<1x32xf32, #tpu.memory_space<vmem>>, vector<1x32xf32>
    %c0_16 = arith.constant 0 : index
    %c0_17 = arith.constant 0 : index
    %30 = vector.load %arg7[%c0_16, %c0_17] : memref<32x96xbf16, #tpu.memory_space<vmem>>, vector<32x96xbf16>
    %c0_18 = arith.constant 0 : index
    %c0_19 = arith.constant 0 : index
    %31 = vector.load %arg8[%c0_18, %c0_19] : memref<1x96xf32, #tpu.memory_space<vmem>>, vector<1x96xf32>
    %c0_20 = arith.constant 0 : index
    %c0_21 = arith.constant 0 : index
    %32 = vector.load %arg9[%c0_20, %c0_21] : memref<32x32xbf16, #tpu.memory_space<vmem>>, vector<32x32xbf16>
    %c0_22 = arith.constant 0 : index
    %c0_23 = arith.constant 0 : index
    %33 = vector.load %arg10[%c0_22, %c0_23] : memref<1x32xf32, #tpu.memory_space<vmem>>, vector<1x32xf32>
    %cst_24 = arith.constant dense<0.000000e+00> : vector<5xf32>
    %34 = vector.multi_reduction <add>, %27, %cst_24 [1] : vector<5x32xf32> to vector<5xf32>
    %35 = vector.shape_cast %34 : vector<5xf32> to vector<5x1xf32>
    %cst_25 = arith.constant 3.200000e+01 : f32
    %36 = vector.broadcast %cst_25 : f32 to vector<5x1xf32>
    %37 = arith.divf %35, %36 : vector<5x1xf32>
    %38 = arith.mulf %27, %27 : vector<5x32xf32>
    %cst_26 = arith.constant dense<0.000000e+00> : vector<5xf32>
    %39 = vector.multi_reduction <add>, %38, %cst_26 [1] : vector<5x32xf32> to vector<5xf32>
    %40 = vector.shape_cast %39 : vector<5xf32> to vector<5x1xf32>
    %cst_27 = arith.constant 3.200000e+01 : f32
    %41 = vector.broadcast %cst_27 : f32 to vector<5x1xf32>
    %42 = arith.divf %40, %41 : vector<5x1xf32>
    %43 = arith.mulf %37, %37 : vector<5x1xf32>
    %44 = arith.subf %42, %43 : vector<5x1xf32>
    %45 = vector.broadcast %37 : vector<5x1xf32> to vector<5x32xf32>
    %46 = arith.subf %27, %45 : vector<5x32xf32>
    %cst_28 = arith.constant 9.99999974E-6 : f32
    %47 = vector.broadcast %cst_28 : f32 to vector<5x1xf32>
    %48 = arith.addf %44, %47 : vector<5x1xf32>
    %49 = math.rsqrt %48 : vector<5x1xf32>
    %50 = vector.broadcast %49 : vector<5x1xf32> to vector<5x32xf32>
    %51 = arith.mulf %46, %50 : vector<5x32xf32>
    %52 = vector.broadcast %28 : vector<1x32xf32> to vector<5x32xf32>
    %53 = arith.mulf %51, %52 : vector<5x32xf32>
    %54 = vector.broadcast %29 : vector<1x32xf32> to vector<5x32xf32>
    %55 = arith.addf %53, %54 : vector<5x32xf32>
    %56 = arith.truncf %55 : vector<5x32xf32> to vector<5x32xbf16>
    %cst_29 = arith.constant dense<0.000000e+00> : vector<5x96xf32>
    %57 = tpu.matmul %56, %30, %cst_29 {dimension_numbers = #tpu.dot_dimension_numbers<[1], [0], [0], [1], [0, 0, 1, 1], [], []>} : vector<5x32xbf16>, vector<32x96xbf16>, vector<5x96xf32> -> vector<5x96xf32>
    %58 = vector.broadcast %31 : vector<1x96xf32> to vector<5x96xf32>
    %59 = arith.addf %57, %58 : vector<5x96xf32>
    %60 = arith.truncf %59 : vector<5x96xf32> to vector<5x96xbf16>
    %61 = vector.extract_strided_slice %60 {offsets = [0, 0], sizes = [5, 32], strides = [1, 1]} : vector<5x96xbf16> to vector<5x32xbf16>
    %62 = vector.shape_cast %61 : vector<5x32xbf16> to vector<5x4x8xbf16>
    %63 = tpu.transpose %62, [1, 0, 2] : vector<5x4x8xbf16> -> vector<4x5x8xbf16>
    %64 = vector.extract_strided_slice %60 {offsets = [0, 32], sizes = [5, 32], strides = [1, 1]} : vector<5x96xbf16> to vector<5x32xbf16>
    %65 = vector.shape_cast %64 : vector<5x32xbf16> to vector<5x4x8xbf16>
    %66 = tpu.transpose %65, [1, 0, 2] : vector<5x4x8xbf16> -> vector<4x5x8xbf16>
    %67 = vector.extract_strided_slice %60 {offsets = [0, 64], sizes = [5, 32], strides = [1, 1]} : vector<5x96xbf16> to vector<5x32xbf16>
    %68 = vector.shape_cast %67 : vector<5x32xbf16> to vector<5x4x8xbf16>
    %69 = tpu.transpose %68, [1, 0, 2] : vector<5x4x8xbf16> -> vector<4x5x8xbf16>
    %cst_30 = arith.constant dense<0.000000e+00> : vector<4x5x5xf32>
    %70 = tpu.matmul %63, %66, %cst_30 {dimension_numbers = #tpu.dot_dimension_numbers<[2], [2], [1], [1], [0, 0, 0, 1, 1, 1], [0], [0]>} : vector<4x5x8xbf16>, vector<4x5x8xbf16>, vector<4x5x5xf32> -> vector<4x5x5xf32>
    %cst_31 = arith.constant dense<0xFF800000> : vector<4x5xf32>
    %71 = vector.multi_reduction <maximumf>, %70, %cst_31 [2] : vector<4x5x5xf32> to vector<4x5xf32>
    %72 = vector.shape_cast %71 : vector<4x5xf32> to vector<4x5x1xf32>
    %73 = vector.broadcast %72 : vector<4x5x1xf32> to vector<4x5x5xf32>
    %74 = arith.subf %70, %73 : vector<4x5x5xf32>
    %75 = math.exp %74 : vector<4x5x5xf32>
    %cst_32 = arith.constant dense<0.000000e+00> : vector<4x5xf32>
    %76 = vector.multi_reduction <add>, %75, %cst_32 [2] : vector<4x5x5xf32> to vector<4x5xf32>
    %77 = vector.shape_cast %76 : vector<4x5xf32> to vector<4x5x1xf32>
    %78 = tpu.reciprocal %77 {approx = true} : vector<4x5x1xf32> -> vector<4x5x1xf32>
    %79 = vector.broadcast %78 : vector<4x5x1xf32> to vector<4x5x5xf32>
    %80 = arith.mulf %75, %79 : vector<4x5x5xf32>
    %81 = arith.truncf %80 : vector<4x5x5xf32> to vector<4x5x5xbf16>
    %cst_33 = arith.constant dense<0.000000e+00> : vector<4x5x8xf32>
    %82 = tpu.matmul %81, %69, %cst_33 {dimension_numbers = #tpu.dot_dimension_numbers<[2], [1], [1], [2], [0, 0, 0, 1, 1, 2], [0], [0]>} : vector<4x5x5xbf16>, vector<4x5x8xbf16>, vector<4x5x8xf32> -> vector<4x5x8xf32>
    %83 = arith.truncf %82 : vector<4x5x8xf32> to vector<4x5x8xbf16>
    %84 = tpu.transpose %83, [1, 0, 2] : vector<4x5x8xbf16> -> vector<5x4x8xbf16>
    %85 = vector.shape_cast %84 : vector<5x4x8xbf16> to vector<5x32xbf16>
    %cst_34 = arith.constant dense<0.000000e+00> : vector<5x32xf32>
    %86 = tpu.matmul %85, %32, %cst_34 {dimension_numbers = #tpu.dot_dimension_numbers<[1], [0], [0], [1], [0, 0, 1, 1], [], []>} : vector<5x32xbf16>, vector<32x32xbf16>, vector<5x32xf32> -> vector<5x32xf32>
    %87 = vector.broadcast %33 : vector<1x32xf32> to vector<5x32xf32>
    %88 = arith.addf %86, %87 : vector<5x32xf32>
    %89 = arith.addf %27, %88 : vector<5x32xf32>
    %c0_35 = arith.constant 0 : index
    %c0_36 = arith.constant 0 : index
    %90 = vector.load %arg11[%c0_35, %c0_36] : memref<1x32xf32, #tpu.memory_space<vmem>>, vector<1x32xf32>
    %c0_37 = arith.constant 0 : index
    %c0_38 = arith.constant 0 : index
    %91 = vector.load %arg12[%c0_37, %c0_38] : memref<1x32xf32, #tpu.memory_space<vmem>>, vector<1x32xf32>
    %c0_39 = arith.constant 0 : index
    %c0_40 = arith.constant 0 : index
    %92 = vector.load %arg13[%c0_39, %c0_40] : memref<32x128xbf16, #tpu.memory_space<vmem>>, vector<32x128xbf16>
    %c0_41 = arith.constant 0 : index
    %c0_42 = arith.constant 0 : index
    %93 = vector.load %arg14[%c0_41, %c0_42] : memref<1x128xf32, #tpu.memory_space<vmem>>, vector<1x128xf32>
    %c0_43 = arith.constant 0 : index
    %c0_44 = arith.constant 0 : index
    %94 = vector.load %arg15[%c0_43, %c0_44] : memref<128x32xbf16, #tpu.memory_space<vmem>>, vector<128x32xbf16>
    %c0_45 = arith.constant 0 : index
    %c0_46 = arith.constant 0 : index
    %95 = vector.load %arg16[%c0_45, %c0_46] : memref<1x32xf32, #tpu.memory_space<vmem>>, vector<1x32xf32>
    %cst_47 = arith.constant dense<0.000000e+00> : vector<5xf32>
    %96 = vector.multi_reduction <add>, %89, %cst_47 [1] : vector<5x32xf32> to vector<5xf32>
    %97 = vector.shape_cast %96 : vector<5xf32> to vector<5x1xf32>
    %cst_48 = arith.constant 3.200000e+01 : f32
    %98 = vector.broadcast %cst_48 : f32 to vector<5x1xf32>
    %99 = arith.divf %97, %98 : vector<5x1xf32>
    %100 = arith.mulf %89, %89 : vector<5x32xf32>
    %cst_49 = arith.constant dense<0.000000e+00> : vector<5xf32>
    %101 = vector.multi_reduction <add>, %100, %cst_49 [1] : vector<5x32xf32> to vector<5xf32>
    %102 = vector.shape_cast %101 : vector<5xf32> to vector<5x1xf32>
    %cst_50 = arith.constant 3.200000e+01 : f32
    %103 = vector.broadcast %cst_50 : f32 to vector<5x1xf32>
    %104 = arith.divf %102, %103 : vector<5x1xf32>
    %105 = arith.mulf %99, %99 : vector<5x1xf32>
    %106 = arith.subf %104, %105 : vector<5x1xf32>
    %107 = vector.broadcast %99 : vector<5x1xf32> to vector<5x32xf32>
    %108 = arith.subf %89, %107 : vector<5x32xf32>
    %cst_51 = arith.constant 9.99999974E-6 : f32
    %109 = vector.broadcast %cst_51 : f32 to vector<5x1xf32>
    %110 = arith.addf %106, %109 : vector<5x1xf32>
    %111 = math.rsqrt %110 : vector<5x1xf32>
    %112 = vector.broadcast %111 : vector<5x1xf32> to vector<5x32xf32>
    %113 = arith.mulf %108, %112 : vector<5x32xf32>
    %114 = vector.broadcast %90 : vector<1x32xf32> to vector<5x32xf32>
    %115 = arith.mulf %113, %114 : vector<5x32xf32>
    %116 = vector.broadcast %91 : vector<1x32xf32> to vector<5x32xf32>
    %117 = arith.addf %115, %116 : vector<5x32xf32>
    %118 = arith.truncf %117 : vector<5x32xf32> to vector<5x32xbf16>
    %cst_52 = arith.constant dense<0.000000e+00> : vector<5x128xf32>
    %119 = tpu.matmul %118, %92, %cst_52 {dimension_numbers = #tpu.dot_dimension_numbers<[1], [0], [0], [1], [0, 0, 1, 1], [], []>} : vector<5x32xbf16>, vector<32x128xbf16>, vector<5x128xf32> -> vector<5x128xf32>
    %120 = vector.broadcast %93 : vector<1x128xf32> to vector<5x128xf32>
    %121 = arith.addf %119, %120 : vector<5x128xf32>
    %cst_53 = arith.constant 5.000000e-01 : f32
    %122 = vector.broadcast %cst_53 : f32 to vector<5x128xf32>
    %123 = arith.mulf %122, %121 : vector<5x128xf32>
    %cst_54 = arith.constant 0.707106769 : f32
    %124 = vector.broadcast %cst_54 : f32 to vector<5x128xf32>
    %125 = arith.mulf %121, %124 : vector<5x128xf32>
    %126 = math.erf %125 : vector<5x128xf32>
    %cst_55 = arith.constant 1.000000e+00 : f32
    %127 = vector.broadcast %cst_55 : f32 to vector<5x128xf32>
    %128 = arith.addf %127, %126 : vector<5x128xf32>
    %129 = arith.mulf %123, %128 : vector<5x128xf32>
    %130 = arith.truncf %129 : vector<5x128xf32> to vector<5x128xbf16>
    %cst_56 = arith.constant dense<0.000000e+00> : vector<5x32xf32>
    %131 = tpu.matmul %130, %94, %cst_56 {dimension_numbers = #tpu.dot_dimension_numbers<[1], [0], [0], [1], [0, 0, 1, 1], [], []>} : vector<5x128xbf16>, vector<128x32xbf16>, vector<5x32xf32> -> vector<5x32xf32>
    %132 = vector.broadcast %95 : vector<1x32xf32> to vector<5x32xf32>
    %133 = arith.addf %131, %132 : vector<5x32xf32>
    %134 = arith.addf %89, %133 : vector<5x32xf32>
    %c0_57 = arith.constant 0 : index
    %c0_58 = arith.constant 0 : index
    %c0_59 = arith.constant 0 : index
    %135 = vector.load %arg17[%c0_57, %c0_58, %c0_59] : memref<1x5x32xf32, #tpu.memory_space<vmem>>, vector<1x5x32xf32>
    %136 = vector.shape_cast %135 : vector<1x5x32xf32> to vector<5x32xf32>
    %137 = vector.shape_cast %134 : vector<5x32xf32> to vector<1x5x32xf32>
    tpu.vector_store %arg17[%c0_57, %c0_58, %c0_59], %137 {strides = array<i32>} : memref<1x5x32xf32, #tpu.memory_space<vmem>>, vector<1x5x32xf32>,
    return
  }
  func.func @transform_0(%arg0: i32) -> (i32, i32, i32) {
    %c0_i32 = arith.constant 0 : i32
    %c0_i32_0 = arith.constant 0 : i32
    %c0_i32_1 = arith.constant 0 : i32
    return %arg0, %c0_i32, %c0_i32_0 : i32, i32, i32
  }
  func.func @transform_1(%arg0: i32) -> (i32, i32) {
    %c0_i32 = arith.constant 0 : i32
    %c0_i32_0 = arith.constant 0 : i32
    %c0_i32_1 = arith.constant 0 : i32
    return %c0_i32, %c0_i32_0 : i32, i32
  }
  func.func @transform_2(%arg0: i32) -> (i32, i32) {
    %c0_i32 = arith.constant 0 : i32
    %c0_i32_0 = arith.constant 0 : i32
    %c0_i32_1 = arith.constant 0 : i32
    return %c0_i32, %c0_i32_0 : i32, i32
  }
  func.func @transform_3(%arg0: i32) -> (i32, i32) {
    %c0_i32 = arith.constant 0 : i32
    %c0_i32_0 = arith.constant 0 : i32
    %c0_i32_1 = arith.constant 0 : i32
    return %c0_i32, %c0_i32_0 : i32, i32
  }
  func.func @transform_4(%arg0: i32) -> (i32, i32) {
    %c0_i32 = arith.constant 0 : i32
    %c0_i32_0 = arith.constant 0 : i32
    %c0_i32_1 = arith.constant 0 : i32
    return %c0_i32, %c0_i32_0 : i32, i32
  }
  func.func @transform_5(%arg0: i32) -> (i32, i32) {
    %c0_i32 = arith.constant 0 : i32
    %c0_i32_0 = arith.constant 0 : i32
    %c0_i32_1 = arith.constant 0 : i32
    return %c0_i32, %c0_i32_0 : i32, i32
  }
  func.func @transform_6(%arg0: i32) -> (i32, i32) {
    %c0_i32 = arith.constant 0 : i32
    %c0_i32_0 = arith.constant 0 : i32
    %c0_i32_1 = arith.constant 0 : i32
    return %c0_i32, %c0_i32_0 : i32, i32
  }
  func.func @transform_7(%arg0: i32) -> (i32, i32) {
    %c0_i32 = arith.constant 0 : i32
    %c0_i32_0 = arith.constant 0 : i32
    %c0_i32_1 = arith.constant 0 : i32
    return %c0_i32, %c0_i32_0 : i32, i32
  }
  func.func @transform_8(%arg0: i32) -> (i32, i32) {
    %c0_i32 = arith.constant 0 : i32
    %c0_i32_0 = arith.constant 0 : i32
    %c0_i32_1 = arith.constant 0 : i32
    return %c0_i32, %c0_i32_0 : i32, i32
  }
  func.func @transform_9(%arg0: i32) -> (i32, i32) {
    %c0_i32 = arith.constant 0 : i32
    %c0_i32_0 = arith.constant 0 : i32
    %c0_i32_1 = arith.constant 0 : i32
    return %c0_i32, %c0_i32_0 : i32, i32
  }
  func.func @transform_10(%arg0: i32) -> (i32, i32) {
    %c0_i32 = arith.constant 0 : i32
    %c0_i32_0 = arith.constant 0 : i32
    %c0_i32_1 = arith.constant 0 : i32
    return %c0_i32, %c0_i32_0 : i32, i32
  }
  func.func @transform_11(%arg0: i32) -> (i32, i32) {
    %c0_i32 = arith.constant 0 : i32
    %c0_i32_0 = arith.constant 0 : i32
    %c0_i32_1 = arith.constant 0 : i32
    return %c0_i32, %c0_i32_0 : i32, i32
  }
  func.func @transform_12(%arg0: i32) -> (i32, i32) {
    %c0_i32 = arith.constant 0 : i32
    %c0_i32_0 = arith.constant 0 : i32
    %c0_i32_1 = arith.constant 0 : i32
    return %c0_i32, %c0_i32_0 : i32, i32
  }
  func.func @transform_13(%arg0: i32) -> (i32, i32) {
    %c0_i32 = arith.constant 0 : i32
    %c0_i32_0 = arith.constant 0 : i32
    %c0_i32_1 = arith.constant 0 : i32
    return %c0_i32, %c0_i32_0 : i32, i32
  }
  func.func @transform_14(%arg0: i32) -> (i32, i32) {
    %c0_i32 = arith.constant 0 : i32
    %c0_i32_0 = arith.constant 0 : i32
    %c0_i32_1 = arith.constant 0 : i32
    return %c0_i32, %c0_i32_0 : i32, i32
  }
  func.func @transform_15(%arg0: i32) -> (i32, i32) {
    %c0_i32 = arith.constant 0 : i32
    %c0_i32_0 = arith.constant 0 : i32
    %c0_i32_1 = arith.constant 0 : i32
    return %c0_i32, %c0_i32_0 : i32, i32
  }
  func.func @transform_16(%arg0: i32) -> (i32, i32, i32) {
    %c0_i32 = arith.constant 0 : i32
    %c0_i32_0 = arith.constant 0 : i32
    %c0_i32_1 = arith.constant 0 : i32
    return %arg0, %c0_i32, %c0_i32_0 : i32, i32, i32
  }
}

module attributes {stable_mosaic.version = 11 : i64} {
  func.func @_layer_kernel(%arg0: i32, %arg1: memref<1x5x32xf32, #tpu.memory_space<vmem>>, %arg2: memref<1x32xf32, #tpu.memory_space<vmem>>, %arg3: memref<1x32xf32, #tpu.memory_space<vmem>>, %arg4: memref<32x96xbf16, #tpu.memory_space<vmem>>, %arg5: memref<1x96xf32, #tpu.memory_space<vmem>>, %arg6: memref<32x32xbf16, #tpu.memory_space<vmem>>, %arg7: memref<1x32xf32, #tpu.memory_space<vmem>>, %arg8: memref<1x32xf32, #tpu.memory_space<vmem>>, %arg9: memref<1x32xf32, #tpu.memory_space<vmem>>, %arg10: memref<32x128xbf16, #tpu.memory_space<vmem>>, %arg11: memref<1x128xf32, #tpu.memory_space<vmem>>, %arg12: memref<128x32xbf16, #tpu.memory_space<vmem>>, %arg13: memref<1x32xf32, #tpu.memory_space<vmem>>, %arg14: memref<1x5x32xf32, #tpu.memory_space<vmem>>) attributes {dimension_semantics = [#tpu.dimension_semantics<parallel>], iteration_bounds = array<i64: 2>, scalar_prefetch = 0 : i64, scratch_operands = 0 : i64, tpu.core_type = #tpu.core_type<tc>, window_params = [{transform_indices = @transform_0, window_bounds = array<i64: 1, 5, 32>}, {pipeline_mode = #tpu.pipeline_mode<synchronous>, transform_indices = @transform_1, window_bounds = array<i64: 1, 32>}, {pipeline_mode = #tpu.pipeline_mode<synchronous>, transform_indices = @transform_2, window_bounds = array<i64: 1, 32>}, {pipeline_mode = #tpu.pipeline_mode<synchronous>, transform_indices = @transform_3, window_bounds = array<i64: 32, 96>}, {pipeline_mode = #tpu.pipeline_mode<synchronous>, transform_indices = @transform_4, window_bounds = array<i64: 1, 96>}, {pipeline_mode = #tpu.pipeline_mode<synchronous>, transform_indices = @transform_5, window_bounds = array<i64: 32, 32>}, {pipeline_mode = #tpu.pipeline_mode<synchronous>, transform_indices = @transform_6, window_bounds = array<i64: 1, 32>}, {pipeline_mode = #tpu.pipeline_mode<synchronous>, transform_indices = @transform_7, window_bounds = array<i64: 1, 32>}, {pipeline_mode = #tpu.pipeline_mode<synchronous>, transform_indices = @transform_8, window_bounds = array<i64: 1, 32>}, {pipeline_mode = #tpu.pipeline_mode<synchronous>, transform_indices = @transform_9, window_bounds = array<i64: 32, 128>}, {pipeline_mode = #tpu.pipeline_mode<synchronous>, transform_indices = @transform_10, window_bounds = array<i64: 1, 128>}, {pipeline_mode = #tpu.pipeline_mode<synchronous>, transform_indices = @transform_11, window_bounds = array<i64: 128, 32>}, {pipeline_mode = #tpu.pipeline_mode<synchronous>, transform_indices = @transform_12, window_bounds = array<i64: 1, 32>}, {transform_indices = @transform_13, window_bounds = array<i64: 1, 5, 32>}]} {
    %c0 = arith.constant 0 : index
    %c0_0 = arith.constant 0 : index
    %c0_1 = arith.constant 0 : index
    %0 = vector.load %arg1[%c0, %c0_0, %c0_1] : memref<1x5x32xf32, #tpu.memory_space<vmem>>, vector<1x5x32xf32>
    %1 = vector.shape_cast %0 : vector<1x5x32xf32> to vector<5x32xf32>
    %c0_2 = arith.constant 0 : index
    %c0_3 = arith.constant 0 : index
    %2 = vector.load %arg2[%c0_2, %c0_3] : memref<1x32xf32, #tpu.memory_space<vmem>>, vector<1x32xf32>
    %c0_4 = arith.constant 0 : index
    %c0_5 = arith.constant 0 : index
    %3 = vector.load %arg3[%c0_4, %c0_5] : memref<1x32xf32, #tpu.memory_space<vmem>>, vector<1x32xf32>
    %c0_6 = arith.constant 0 : index
    %c0_7 = arith.constant 0 : index
    %4 = vector.load %arg4[%c0_6, %c0_7] : memref<32x96xbf16, #tpu.memory_space<vmem>>, vector<32x96xbf16>
    %c0_8 = arith.constant 0 : index
    %c0_9 = arith.constant 0 : index
    %5 = vector.load %arg5[%c0_8, %c0_9] : memref<1x96xf32, #tpu.memory_space<vmem>>, vector<1x96xf32>
    %c0_10 = arith.constant 0 : index
    %c0_11 = arith.constant 0 : index
    %6 = vector.load %arg6[%c0_10, %c0_11] : memref<32x32xbf16, #tpu.memory_space<vmem>>, vector<32x32xbf16>
    %c0_12 = arith.constant 0 : index
    %c0_13 = arith.constant 0 : index
    %7 = vector.load %arg7[%c0_12, %c0_13] : memref<1x32xf32, #tpu.memory_space<vmem>>, vector<1x32xf32>
    %cst = arith.constant dense<0.000000e+00> : vector<5xf32>
    %8 = vector.multi_reduction <add>, %1, %cst [1] : vector<5x32xf32> to vector<5xf32>
    %9 = vector.shape_cast %8 : vector<5xf32> to vector<5x1xf32>
    %cst_14 = arith.constant 3.200000e+01 : f32
    %10 = vector.broadcast %cst_14 : f32 to vector<5x1xf32>
    %11 = arith.divf %9, %10 : vector<5x1xf32>
    %12 = arith.mulf %1, %1 : vector<5x32xf32>
    %cst_15 = arith.constant dense<0.000000e+00> : vector<5xf32>
    %13 = vector.multi_reduction <add>, %12, %cst_15 [1] : vector<5x32xf32> to vector<5xf32>
    %14 = vector.shape_cast %13 : vector<5xf32> to vector<5x1xf32>
    %cst_16 = arith.constant 3.200000e+01 : f32
    %15 = vector.broadcast %cst_16 : f32 to vector<5x1xf32>
    %16 = arith.divf %14, %15 : vector<5x1xf32>
    %17 = arith.mulf %11, %11 : vector<5x1xf32>
    %18 = arith.subf %16, %17 : vector<5x1xf32>
    %19 = vector.broadcast %11 : vector<5x1xf32> to vector<5x32xf32>
    %20 = arith.subf %1, %19 : vector<5x32xf32>
    %cst_17 = arith.constant 9.99999974E-6 : f32
    %21 = vector.broadcast %cst_17 : f32 to vector<5x1xf32>
    %22 = arith.addf %18, %21 : vector<5x1xf32>
    %23 = math.rsqrt %22 : vector<5x1xf32>
    %24 = vector.broadcast %23 : vector<5x1xf32> to vector<5x32xf32>
    %25 = arith.mulf %20, %24 : vector<5x32xf32>
    %26 = vector.broadcast %2 : vector<1x32xf32> to vector<5x32xf32>
    %27 = arith.mulf %25, %26 : vector<5x32xf32>
    %28 = vector.broadcast %3 : vector<1x32xf32> to vector<5x32xf32>
    %29 = arith.addf %27, %28 : vector<5x32xf32>
    %30 = arith.truncf %29 : vector<5x32xf32> to vector<5x32xbf16>
    %cst_18 = arith.constant dense<0.000000e+00> : vector<5x96xf32>
    %31 = tpu.matmul %30, %4, %cst_18 {dimension_numbers = #tpu.dot_dimension_numbers<[1], [0], [0], [1], [0, 0, 1, 1], [], []>} : vector<5x32xbf16>, vector<32x96xbf16>, vector<5x96xf32> -> vector<5x96xf32>
    %32 = vector.broadcast %5 : vector<1x96xf32> to vector<5x96xf32>
    %33 = arith.addf %31, %32 : vector<5x96xf32>
    %34 = arith.truncf %33 : vector<5x96xf32> to vector<5x96xbf16>
    %35 = vector.extract_strided_slice %34 {offsets = [0, 0], sizes = [5, 32], strides = [1, 1]} : vector<5x96xbf16> to vector<5x32xbf16>
    %36 = vector.shape_cast %35 : vector<5x32xbf16> to vector<5x4x8xbf16>
    %37 = tpu.transpose %36, [1, 0, 2] : vector<5x4x8xbf16> -> vector<4x5x8xbf16>
    %38 = vector.extract_strided_slice %34 {offsets = [0, 32], sizes = [5, 32], strides = [1, 1]} : vector<5x96xbf16> to vector<5x32xbf16>
    %39 = vector.shape_cast %38 : vector<5x32xbf16> to vector<5x4x8xbf16>
    %40 = tpu.transpose %39, [1, 0, 2] : vector<5x4x8xbf16> -> vector<4x5x8xbf16>
    %41 = vector.extract_strided_slice %34 {offsets = [0, 64], sizes = [5, 32], strides = [1, 1]} : vector<5x96xbf16> to vector<5x32xbf16>
    %42 = vector.shape_cast %41 : vector<5x32xbf16> to vector<5x4x8xbf16>
    %43 = tpu.transpose %42, [1, 0, 2] : vector<5x4x8xbf16> -> vector<4x5x8xbf16>
    %cst_19 = arith.constant dense<0.000000e+00> : vector<4x5x5xf32>
    %44 = tpu.matmul %37, %40, %cst_19 {dimension_numbers = #tpu.dot_dimension_numbers<[2], [2], [1], [1], [0, 0, 0, 1, 1, 1], [0], [0]>} : vector<4x5x8xbf16>, vector<4x5x8xbf16>, vector<4x5x5xf32> -> vector<4x5x5xf32>
    %cst_20 = arith.constant dense<0xFF800000> : vector<4x5xf32>
    %45 = vector.multi_reduction <maximumf>, %44, %cst_20 [2] : vector<4x5x5xf32> to vector<4x5xf32>
    %46 = vector.shape_cast %45 : vector<4x5xf32> to vector<4x5x1xf32>
    %47 = vector.broadcast %46 : vector<4x5x1xf32> to vector<4x5x5xf32>
    %48 = arith.subf %44, %47 : vector<4x5x5xf32>
    %49 = math.exp %48 : vector<4x5x5xf32>
    %cst_21 = arith.constant dense<0.000000e+00> : vector<4x5xf32>
    %50 = vector.multi_reduction <add>, %49, %cst_21 [2] : vector<4x5x5xf32> to vector<4x5xf32>
    %51 = vector.shape_cast %50 : vector<4x5xf32> to vector<4x5x1xf32>
    %52 = tpu.reciprocal %51 {approx = true} : vector<4x5x1xf32> -> vector<4x5x1xf32>
    %53 = vector.broadcast %52 : vector<4x5x1xf32> to vector<4x5x5xf32>
    %54 = arith.mulf %49, %53 : vector<4x5x5xf32>
    %55 = arith.truncf %54 : vector<4x5x5xf32> to vector<4x5x5xbf16>
    %cst_22 = arith.constant dense<0.000000e+00> : vector<4x5x8xf32>
    %56 = tpu.matmul %55, %43, %cst_22 {dimension_numbers = #tpu.dot_dimension_numbers<[2], [1], [1], [2], [0, 0, 0, 1, 1, 2], [0], [0]>} : vector<4x5x5xbf16>, vector<4x5x8xbf16>, vector<4x5x8xf32> -> vector<4x5x8xf32>
    %57 = arith.truncf %56 : vector<4x5x8xf32> to vector<4x5x8xbf16>
    %58 = tpu.transpose %57, [1, 0, 2] : vector<4x5x8xbf16> -> vector<5x4x8xbf16>
    %59 = vector.shape_cast %58 : vector<5x4x8xbf16> to vector<5x32xbf16>
    %cst_23 = arith.constant dense<0.000000e+00> : vector<5x32xf32>
    %60 = tpu.matmul %59, %6, %cst_23 {dimension_numbers = #tpu.dot_dimension_numbers<[1], [0], [0], [1], [0, 0, 1, 1], [], []>} : vector<5x32xbf16>, vector<32x32xbf16>, vector<5x32xf32> -> vector<5x32xf32>
    %61 = vector.broadcast %7 : vector<1x32xf32> to vector<5x32xf32>
    %62 = arith.addf %60, %61 : vector<5x32xf32>
    %63 = arith.addf %1, %62 : vector<5x32xf32>
    %c0_24 = arith.constant 0 : index
    %c0_25 = arith.constant 0 : index
    %64 = vector.load %arg8[%c0_24, %c0_25] : memref<1x32xf32, #tpu.memory_space<vmem>>, vector<1x32xf32>
    %c0_26 = arith.constant 0 : index
    %c0_27 = arith.constant 0 : index
    %65 = vector.load %arg9[%c0_26, %c0_27] : memref<1x32xf32, #tpu.memory_space<vmem>>, vector<1x32xf32>
    %c0_28 = arith.constant 0 : index
    %c0_29 = arith.constant 0 : index
    %66 = vector.load %arg10[%c0_28, %c0_29] : memref<32x128xbf16, #tpu.memory_space<vmem>>, vector<32x128xbf16>
    %c0_30 = arith.constant 0 : index
    %c0_31 = arith.constant 0 : index
    %67 = vector.load %arg11[%c0_30, %c0_31] : memref<1x128xf32, #tpu.memory_space<vmem>>, vector<1x128xf32>
    %c0_32 = arith.constant 0 : index
    %c0_33 = arith.constant 0 : index
    %68 = vector.load %arg12[%c0_32, %c0_33] : memref<128x32xbf16, #tpu.memory_space<vmem>>, vector<128x32xbf16>
    %c0_34 = arith.constant 0 : index
    %c0_35 = arith.constant 0 : index
    %69 = vector.load %arg13[%c0_34, %c0_35] : memref<1x32xf32, #tpu.memory_space<vmem>>, vector<1x32xf32>
    %cst_36 = arith.constant dense<0.000000e+00> : vector<5xf32>
    %70 = vector.multi_reduction <add>, %63, %cst_36 [1] : vector<5x32xf32> to vector<5xf32>
    %71 = vector.shape_cast %70 : vector<5xf32> to vector<5x1xf32>
    %cst_37 = arith.constant 3.200000e+01 : f32
    %72 = vector.broadcast %cst_37 : f32 to vector<5x1xf32>
    %73 = arith.divf %71, %72 : vector<5x1xf32>
    %74 = arith.mulf %63, %63 : vector<5x32xf32>
    %cst_38 = arith.constant dense<0.000000e+00> : vector<5xf32>
    %75 = vector.multi_reduction <add>, %74, %cst_38 [1] : vector<5x32xf32> to vector<5xf32>
    %76 = vector.shape_cast %75 : vector<5xf32> to vector<5x1xf32>
    %cst_39 = arith.constant 3.200000e+01 : f32
    %77 = vector.broadcast %cst_39 : f32 to vector<5x1xf32>
    %78 = arith.divf %76, %77 : vector<5x1xf32>
    %79 = arith.mulf %73, %73 : vector<5x1xf32>
    %80 = arith.subf %78, %79 : vector<5x1xf32>
    %81 = vector.broadcast %73 : vector<5x1xf32> to vector<5x32xf32>
    %82 = arith.subf %63, %81 : vector<5x32xf32>
    %cst_40 = arith.constant 9.99999974E-6 : f32
    %83 = vector.broadcast %cst_40 : f32 to vector<5x1xf32>
    %84 = arith.addf %80, %83 : vector<5x1xf32>
    %85 = math.rsqrt %84 : vector<5x1xf32>
    %86 = vector.broadcast %85 : vector<5x1xf32> to vector<5x32xf32>
    %87 = arith.mulf %82, %86 : vector<5x32xf32>
    %88 = vector.broadcast %64 : vector<1x32xf32> to vector<5x32xf32>
    %89 = arith.mulf %87, %88 : vector<5x32xf32>
    %90 = vector.broadcast %65 : vector<1x32xf32> to vector<5x32xf32>
    %91 = arith.addf %89, %90 : vector<5x32xf32>
    %92 = arith.truncf %91 : vector<5x32xf32> to vector<5x32xbf16>
    %cst_41 = arith.constant dense<0.000000e+00> : vector<5x128xf32>
    %93 = tpu.matmul %92, %66, %cst_41 {dimension_numbers = #tpu.dot_dimension_numbers<[1], [0], [0], [1], [0, 0, 1, 1], [], []>} : vector<5x32xbf16>, vector<32x128xbf16>, vector<5x128xf32> -> vector<5x128xf32>
    %94 = vector.broadcast %67 : vector<1x128xf32> to vector<5x128xf32>
    %95 = arith.addf %93, %94 : vector<5x128xf32>
    %cst_42 = arith.constant 5.000000e-01 : f32
    %96 = vector.broadcast %cst_42 : f32 to vector<5x128xf32>
    %97 = arith.mulf %96, %95 : vector<5x128xf32>
    %cst_43 = arith.constant 0.707106769 : f32
    %98 = vector.broadcast %cst_43 : f32 to vector<5x128xf32>
    %99 = arith.mulf %95, %98 : vector<5x128xf32>
    %100 = math.erf %99 : vector<5x128xf32>
    %cst_44 = arith.constant 1.000000e+00 : f32
    %101 = vector.broadcast %cst_44 : f32 to vector<5x128xf32>
    %102 = arith.addf %101, %100 : vector<5x128xf32>
    %103 = arith.mulf %97, %102 : vector<5x128xf32>
    %104 = arith.truncf %103 : vector<5x128xf32> to vector<5x128xbf16>
    %cst_45 = arith.constant dense<0.000000e+00> : vector<5x32xf32>
    %105 = tpu.matmul %104, %68, %cst_45 {dimension_numbers = #tpu.dot_dimension_numbers<[1], [0], [0], [1], [0, 0, 1, 1], [], []>} : vector<5x128xbf16>, vector<128x32xbf16>, vector<5x32xf32> -> vector<5x32xf32>
    %106 = vector.broadcast %69 : vector<1x32xf32> to vector<5x32xf32>
    %107 = arith.addf %105, %106 : vector<5x32xf32>
    %108 = arith.addf %63, %107 : vector<5x32xf32>
    %c0_46 = arith.constant 0 : index
    %c0_47 = arith.constant 0 : index
    %c0_48 = arith.constant 0 : index
    %109 = vector.load %arg14[%c0_46, %c0_47, %c0_48] : memref<1x5x32xf32, #tpu.memory_space<vmem>>, vector<1x5x32xf32>
    %110 = vector.shape_cast %109 : vector<1x5x32xf32> to vector<5x32xf32>
    %111 = vector.shape_cast %108 : vector<5x32xf32> to vector<1x5x32xf32>
    tpu.vector_store %arg14[%c0_46, %c0_47, %c0_48], %111 {strides = array<i32>} : memref<1x5x32xf32, #tpu.memory_space<vmem>>, vector<1x5x32xf32>,
    return
  }
  func.func @transform_0(%arg0: i32) -> (i32, i32, i32) {
    %c0_i32 = arith.constant 0 : i32
    %c0_i32_0 = arith.constant 0 : i32
    %c0_i32_1 = arith.constant 0 : i32
    return %arg0, %c0_i32, %c0_i32_0 : i32, i32, i32
  }
  func.func @transform_1(%arg0: i32) -> (i32, i32) {
    %c0_i32 = arith.constant 0 : i32
    %c0_i32_0 = arith.constant 0 : i32
    %c0_i32_1 = arith.constant 0 : i32
    return %c0_i32, %c0_i32_0 : i32, i32
  }
  func.func @transform_2(%arg0: i32) -> (i32, i32) {
    %c0_i32 = arith.constant 0 : i32
    %c0_i32_0 = arith.constant 0 : i32
    %c0_i32_1 = arith.constant 0 : i32
    return %c0_i32, %c0_i32_0 : i32, i32
  }
  func.func @transform_3(%arg0: i32) -> (i32, i32) {
    %c0_i32 = arith.constant 0 : i32
    %c0_i32_0 = arith.constant 0 : i32
    %c0_i32_1 = arith.constant 0 : i32
    return %c0_i32, %c0_i32_0 : i32, i32
  }
  func.func @transform_4(%arg0: i32) -> (i32, i32) {
    %c0_i32 = arith.constant 0 : i32
    %c0_i32_0 = arith.constant 0 : i32
    %c0_i32_1 = arith.constant 0 : i32
    return %c0_i32, %c0_i32_0 : i32, i32
  }
  func.func @transform_5(%arg0: i32) -> (i32, i32) {
    %c0_i32 = arith.constant 0 : i32
    %c0_i32_0 = arith.constant 0 : i32
    %c0_i32_1 = arith.constant 0 : i32
    return %c0_i32, %c0_i32_0 : i32, i32
  }
  func.func @transform_6(%arg0: i32) -> (i32, i32) {
    %c0_i32 = arith.constant 0 : i32
    %c0_i32_0 = arith.constant 0 : i32
    %c0_i32_1 = arith.constant 0 : i32
    return %c0_i32, %c0_i32_0 : i32, i32
  }
  func.func @transform_7(%arg0: i32) -> (i32, i32) {
    %c0_i32 = arith.constant 0 : i32
    %c0_i32_0 = arith.constant 0 : i32
    %c0_i32_1 = arith.constant 0 : i32
    return %c0_i32, %c0_i32_0 : i32, i32
  }
  func.func @transform_8(%arg0: i32) -> (i32, i32) {
    %c0_i32 = arith.constant 0 : i32
    %c0_i32_0 = arith.constant 0 : i32
    %c0_i32_1 = arith.constant 0 : i32
    return %c0_i32, %c0_i32_0 : i32, i32
  }
  func.func @transform_9(%arg0: i32) -> (i32, i32) {
    %c0_i32 = arith.constant 0 : i32
    %c0_i32_0 = arith.constant 0 : i32
    %c0_i32_1 = arith.constant 0 : i32
    return %c0_i32, %c0_i32_0 : i32, i32
  }
  func.func @transform_10(%arg0: i32) -> (i32, i32) {
    %c0_i32 = arith.constant 0 : i32
    %c0_i32_0 = arith.constant 0 : i32
    %c0_i32_1 = arith.constant 0 : i32
    return %c0_i32, %c0_i32_0 : i32, i32
  }
  func.func @transform_11(%arg0: i32) -> (i32, i32) {
    %c0_i32 = arith.constant 0 : i32
    %c0_i32_0 = arith.constant 0 : i32
    %c0_i32_1 = arith.constant 0 : i32
    return %c0_i32, %c0_i32_0 : i32, i32
  }
  func.func @transform_12(%arg0: i32) -> (i32, i32) {
    %c0_i32 = arith.constant 0 : i32
    %c0_i32_0 = arith.constant 0 : i32
    %c0_i32_1 = arith.constant 0 : i32
    return %c0_i32, %c0_i32_0 : i32, i32
  }
  func.func @transform_13(%arg0: i32) -> (i32, i32, i32) {
    %c0_i32 = arith.constant 0 : i32
    %c0_i32_0 = arith.constant 0 : i32
    %c0_i32_1 = arith.constant 0 : i32
    return %arg0, %c0_i32, %c0_i32_0 : i32, i32, i32
  }
}

</mosaic_0001>

<llo_original>
// kernel: visual_transformer_forward.4
$region0: #{visual_transformer_forward.4}
  #allocation0 [shape = 'u32[]', space=smem, size = 0x4, offset = 0x4, fixed_abs, tag = 'smem constant byte address 0x4 - core index']
  #allocation1 [shape = 'u32[72,128]{1,0:T(1,128)}', space=vmem, size = 0x9000, scoped, tag = 'internal scratch']
  %s0 = inlined_call_operand.vmem [shape: bf16[8,192], index: 0, kind: input, shape index: {}]
  %s1 = inlined_call_operand.vmem [shape: bf16[192,32], index: 1, kind: input, shape index: {}]
  %s2 = inlined_call_operand.vmem [shape: f32[8,32], index: 2, kind: output, shape index: {}]
  %s3 = sld [smem:[#allocation0]]
  $region18: #{visual_transformer_forward.4} parent=0
    _
  %s5 = ssub.s32 1, %s3
  %s6 = scalar_select 0, %s5, %s3
  // Predicated region
  $region2: #{visual_transformer_forward.4} parent=0 // pred_check
    _
  $region3: #{visual_transformer_forward.4} parent=0 // pred_check_branch
    %8 = sbr.rel (0) target = $region5
  $region4: #{visual_transformer_forward.4} parent=0 // pred_region
    _
  $region5: #{visual_transformer_forward.4} parent=0 // pred_fallthru
    _
  // Predicated region
  $region6: #{visual_transformer_forward.4} parent=0 // pred_check
    _
  $region7: #{visual_transformer_forward.4} parent=0 // pred_check_branch
    %10 = sbr.rel (0) target = $region9
  $region8: #{visual_transformer_forward.4} parent=0 // pred_region
    _
  $region9: #{visual_transformer_forward.4} parent=0 // pred_fallthru
    _
  %v12 = vld [vmem:[%s0] sm:$0xff]
  %v13 = vld [vmem:[%s1] sm:$0xf]
  %v14 = vld [vmem:[%s1 + $0x4] sm:$0xf]
  %v15 = vld [vmem:[%s1 + $0x8] sm:$0xf]
  %v16 = vld [vmem:[%s1 + $0xc] sm:$0xf]
  %v17 = vld [vmem:[%s1 + $0x10] sm:$0xf]
  %v18 = vld [vmem:[%s1 + $0x14] sm:$0xf]
  %v19 = vld [vmem:[%s1 + $0x18] sm:$0xf]
  %v20 = vld [vmem:[%s1 + $0x1c] sm:$0xf]
  %v21 = vld [vmem:[%s1 + $0x20] sm:$0xf]
  %v22 = vld [vmem:[%s1 + $0x24] sm:$0xf]
  %v23 = vld [vmem:[%s1 + $0x28] sm:$0xf]
  %v24 = vld [vmem:[%s1 + $0x2c] sm:$0xf]
  %v25 = vld [vmem:[%s1 + $0x30] sm:$0xf]
  %v26 = vld [vmem:[%s1 + $0x34] sm:$0xf]
  %v27 = vld [vmem:[%s1 + $0x38] sm:$0xf]
  %v28 = vld [vmem:[%s1 + $0x3c] sm:$0xf]
  %v29 = vld [vmem:[%s1 + $0x40] sm:$0xf]
  %v30 = vld [vmem:[%s1 + $0x44] sm:$0xf]
  %v31 = vld [vmem:[%s1 + $0x48] sm:$0xf]
  %v32 = vld [vmem:[%s1 + $0x4c] sm:$0xf]
  %v33 = vld [vmem:[%s1 + $0x50] sm:$0xf]
  %v34 = vld [vmem:[%s1 + $0x54] sm:$0xf]
  %v35 = vld [vmem:[%s1 + $0x58] sm:$0xf]
  %v36 = vld [vmem:[%s1 + $0x5c] sm:$0xf]
  %v38 = vunpack.c.l.b16 %v12
  %v39 = vunpack.c.h.b16 %v12
  %v40 = vpack.c.b16 %v38, %v38
  %v41 = vpack.c.b16 %v39, %v39
  %v67 = vunpack.c.l.b16 %v13
  %v68 = vunpack.c.l.b16 %v14
  %v69 = vunpack.c.l.b16 %v15
  %v70 = vunpack.c.l.b16 %v16
  %v71 = vunpack.c.l.b16 %v17
  %v72 = vunpack.c.l.b16 %v18
  %v73 = vunpack.c.l.b16 %v19
  %v74 = vunpack.c.l.b16 %v20
  %v75 = vunpack.c.l.b16 %v21
  %v76 = vunpack.c.l.b16 %v22
  %v77 = vunpack.c.l.b16 %v23
  %v78 = vunpack.c.l.b16 %v24
  %v79 = vunpack.c.l.b16 %v25
  %v80 = vunpack.c.l.b16 %v26
  %v81 = vunpack.c.l.b16 %v27
  %v82 = vunpack.c.l.b16 %v28
  %v83 = vunpack.c.l.b16 %v29
  %v84 = vunpack.c.l.b16 %v30
  %v85 = vunpack.c.l.b16 %v31
  %v86 = vunpack.c.l.b16 %v32
  %v87 = vunpack.c.l.b16 %v33
  %v88 = vunpack.c.l.b16 %v34
  %v89 = vunpack.c.l.b16 %v35
  %v90 = vunpack.c.l.b16 %v36
  %v91 = vpack.c.b16 %v68, %v67
  %v92 = vpack.c.b16 %v70, %v69
  %v93 = vpack.c.b16 %v72, %v71
  %v94 = vpack.c.b16 %v74, %v73
  %v95 = vpack.c.b16 %v76, %v75
  %v96 = vpack.c.b16 %v78, %v77
  %v97 = vpack.c.b16 %v80, %v79
  %v98 = vpack.c.b16 %v82, %v81
  %v99 = vpack.c.b16 %v84, %v83
  %v100 = vpack.c.b16 %v86, %v85
  %v101 = vpack.c.b16 %v88, %v87
  %v102 = vpack.c.b16 %v90, %v89
  %vm115 = vcmask 523264
  %v117 = vsel %vm115, %v41, 0
  %119 = vmatpush.bf16.msra.mxu0 %v98
  %120 = vmatpush.bf16.msra.mxu0 %v97
  %121 = vmatpush.bf16.msra.mxu0 %v96
  %122 = vmatpush.bf16.msra.mxu0 %v95
  %123 = vmatpush.bf16.msra.mxu0 %v94
  %124 = vmatpush.bf16.msra.mxu0 %v93
  %125 = vmatpush.bf16.msra.mxu0 %v92
  %126 = vmatpush.bf16.msra.mxu0 %v91
  %127 = vmatmul.bf16.gmra.mxu0 %v40
  %v128 = vpop.f32.mrf.mxu0
  %v129 = vadd.f32 0.0, %v128
  %v130 = vpop.f32.mrf.mxu0
  %131 = vdwg.mxu0
  %132 = vmatpush.bf16.msra.mxu0 0
  %133 = vmatpush.bf16.msra.mxu0 0
  %134 = vmatpush.bf16.msra.mxu0 0
  %135 = vmatpush.bf16.msra.mxu0 0
  %136 = vmatpush.bf16.msra.mxu0 %v102
  %137 = vmatpush.bf16.msra.mxu0 %v101
  %138 = vmatpush.bf16.msra.mxu0 %v100
  %139 = vmatpush.bf16.msra.mxu0 %v99
  %140 = vmatmul.bf16.gmra.mxu0 %v117
  %v141 = vpop.f32.mrf.mxu0
  %v142 = vadd.f32 %v129, %v141
  %v143 = vpop.f32.mrf.mxu0
  %144 = vdwg.mxu0
  %vm145 = vcmask 261120
  %146 = vst.msk [vmem:[%s2] sm:$0xff] %vm145, %v142
  // Predicated region
  $region10: #{visual_transformer_forward.4} parent=0 // pred_check
    _
  $region11: #{visual_transformer_forward.4} parent=0 // pred_check_branch
    %148 = sbr.rel (0) target = $region13
  $region12: #{visual_transformer_forward.4} parent=0 // pred_region
    _
  $region13: #{visual_transformer_forward.4} parent=0 // pred_fallthru
    _
  // Predicated region
  $region14: #{visual_transformer_forward.4} parent=0 // pred_check
    _
  $region15: #{visual_transformer_forward.4} parent=0 // pred_check_branch
    %150 = sbr.rel (0) target = $region17
  $region16: #{visual_transformer_forward.4} parent=0 // pred_region
    _
  $region17: #{visual_transformer_forward.4} parent=0 // pred_fallthru
    _

// kernel: visual_transformer_forward.7
$region0: #{visual_transformer_forward.7}
  #allocation0 [shape = 'u32[]', space=smem, size = 0x4, offset = 0x4, fixed_abs, tag = 'smem constant byte address 0x4 - core index']
  #allocation1 [shape = 'u32[72,128]{1,0:T(1,128)}', space=vmem, size = 0x9000, scoped, tag = 'internal scratch']
  %s0 = inlined_call_operand.vmem [shape: f32[2,32], index: 0, kind: input, shape index: {}]
  %s1 = inlined_call_operand.vmem [shape: f32[1,32], index: 1, kind: input, shape index: {}]
  %s2 = inlined_call_operand.vmem [shape: f32[1,32], index: 2, kind: input, shape index: {}]
  %s3 = inlined_call_operand.vmem [shape: bf16[32,16], index: 3, kind: input, shape index: {}]
  %s4 = inlined_call_operand.hbm [shape: f32[2,16], index: 4, kind: output, shape index: {}]
  %s5 = sld [smem:[#allocation0]]
  $region26: #{visual_transformer_forward.7} parent=0
    _
  %s7 = ssub.s32 1, %s5
  %s8 = scalar_select 0, %s7, %s5
  $region1: #{visual_transformer_forward.7} parent=0
    #allocation2 [shape = 'u8[1024]{0}', space=vmem, size = 0x400, scoped, tag = 'output window, operand 0, single buffered']
    #allocation3 [shape = 's32[1]{0}', space=sflag, size = 0x4, scoped, tag = 'scoped memory for visual_transformer_forward.7']
    %9 = vsyncpa [#allocation3], 0
    // Predicated region
    $region2: #{visual_transformer_forward.7} parent=1 // pred_check
      _
    $region3: #{visual_transformer_forward.7} parent=1 // pred_check_branch
      %11 = sbr.rel (0) target = $region5
    $region4: #{visual_transformer_forward.7} parent=1 // pred_region
      _
    $region5: #{visual_transformer_forward.7} parent=1 // pred_fallthru
      _
    // Predicated region
    $region6: #{visual_transformer_forward.7} parent=1 // pred_check
      _
    $region7: #{visual_transformer_forward.7} parent=1 // pred_check_branch
      %13 = sbr.rel (0) target = $region9
    $region8: #{visual_transformer_forward.7} parent=1 // pred_region
      _
    $region9: #{visual_transformer_forward.7} parent=1 // pred_fallthru
      _
    // Predicated region
    $region10: #{visual_transformer_forward.7} parent=1 // pred_check
      _
    $region11: #{visual_transformer_forward.7} parent=1 // pred_check_branch
      %15 = sbr.rel (0) target = $region13
    $region12: #{visual_transformer_forward.7} parent=1 // pred_region
      _
    $region13: #{visual_transformer_forward.7} parent=1 // pred_fallthru
      _
    // Predicated region
    $region14: #{visual_transformer_forward.7} parent=1 // pred_check
      _
    $region15: #{visual_transformer_forward.7} parent=1 // pred_check_branch
      %17 = sbr.rel (0) target = $region17
    $region16: #{visual_transformer_forward.7} parent=1 // pred_region
      _
    $region17: #{visual_transformer_forward.7} parent=1 // pred_fallthru
      _
    %v19 = vld [vmem:[%s0] sm:$0x3]
    %v20 = vld [vmem:[%s1] sm:$0x1]
    %v21 = vld [vmem:[%s2] sm:$0x1]
    %vm22 = vcmask 254976
    %v23 = vsel %vm22, %v19, 0.0
    %24 = vadd.xlane.f32.xlu0 %v23
    %v25 = vpop.xlane.xlu0 %24
    %v26 = vrcp.pop 32.0
    %v27 = vmul.f32 32.0, %v26
    %v28 = vsub.f32 1.0, %v27
    %v29 = vmul.f32 %v26, %v28
    %v30 = vadd.f32 %v26, %v29
    %vm31 = vweird.f32 %v26
    %v32 = vsel %vm31, %v26, %v30
    %v33 = vmul.f32 %v25, %v32
    %v34 = vmul.f32 %v19, %v19
    %v35 = vsel %vm22, %v34, 0.0
    %36 = vadd.xlane.f32.xlu0 %v35
    %v37 = vpop.xlane.xlu0 %36
    %v38 = vmul.f32 %v37, %v32
    %v39 = vmul.f32 %v33, %v33
    %v40 = vsub.f32 %v38, %v39
    %v41 = vsub.f32 %v19, %v33
    %v42 = vadd.f32 %v40, 1e-05
    %v43 = vrsqrt.pop %v42
    %v44 = vmul.f32 %v43, %v42
    %v45 = vmul.f32 %v44, %v43
    %v46 = vmul.f32 0.5, %v45
    %v47 = vsub.f32 1.5, %v46
    %v48 = vmul.f32 %v43, %v47
    %vm49 = vweird.f32 %v42
    %vm50 = vweird.f32 %v43
    %vm51 = vmor %vm49, %vm50
    %v52 = vsel %vm51, %v43, %v48
    %v53 = vmul.f32 %v41, %v52
    %v55 = vperm.slane %v20, 0
    %v57 = vmul.f32 %v53, %v55
    %v59 = vperm.slane %v21, 0
    %v61 = vadd.f32 %v57, %v59
    %v62 = vpack.c.bf16 %v61, %v61
    %v63 = vld [vmem:[%s3] sm:$0xf]
    %v64 = vld [vmem:[%s3 + $0x4] sm:$0xf]
    %v65 = vld [vmem:[%s3 + $0x8] sm:$0xf]
    %v66 = vld [vmem:[%s3 + $0xc] sm:$0xf]
    %v71 = vunpack.c.l.b16 %v63
    %v72 = vunpack.c.l.b16 %v64
    %v73 = vunpack.c.l.b16 %v65
    %v74 = vunpack.c.l.b16 %v66
    %v75 = vpack.c.b16 %v72, %v71
    %v76 = vpack.c.b16 %v74, %v73
    %vm79 = vcmask 261120
    %v81 = vsel %vm79, %v62, 0
    %83 = vmatpush.bf16.msra.mxu0 0
    %84 = vmatpush.bf16.msra.mxu0 0
    %85 = vmatpush.bf16.msra.mxu0 0
    %86 = vmatpush.bf16.msra.mxu0 0
    %87 = vmatpush.bf16.msra.mxu0 0
    %88 = vmatpush.bf16.msra.mxu0 0
    %89 = vmatpush.bf16.msra.mxu0 %v76
    %90 = vmatpush.bf16.msra.mxu0 %v75
    %91 = vmatmul.bf16.gmra.mxu0 %v81
    %v92 = vpop.f32.mrf.mxu0
    %v93 = vadd.f32 0.0, %v92
    %v94 = vpop.f32.mrf.mxu0
    %95 = vdwg.mxu0
    %vm96 = vcmask 123904
    %97 = vst.msk [vmem:[#allocation2] sm:$0x3] %vm96, %v93
    // Predicated region
    $region18: #{visual_transformer_forward.7} parent=1 // pred_check
      _
    $region19: #{visual_transformer_forward.7} parent=1 // pred_check_branch
      %99 = sbr.rel (0) target = $region21
    $region20: #{visual_transformer_forward.7} parent=1 // pred_region
      %101 = vsyncadd [#allocation3], 0
      %s103 = sshll.u32 [#allocation2], 4
      %s104 = int_to_ptr.vmem [resolvable:$true] %s103
      %s105 = sshll.u32 %s4, 4
      %s106 = int_to_ptr.hbm [resolvable:$true] %s105
      %108 = dma.vmem_to_hbm [thread:$0]  %s104, 32, %s106, [#allocation3]
    $region21: #{visual_transformer_forward.7} parent=1 // pred_fallthru
      _
    // Predicated region
    $region22: #{visual_transformer_forward.7} parent=1 // pred_check
      _
    $region23: #{visual_transformer_forward.7} parent=1 // pred_check_branch
      %110 = sbr.rel (0) target = $region25
    $region24: #{visual_transformer_forward.7} parent=1 // pred_region
      %112 = dma.done [#allocation3], 32
    $region25: #{visual_transformer_forward.7} parent=1 // pred_fallthru
      _
    %113 = vsyncpa [#allocation3], 1

// kernel: visual_transformer_forward.6
$region0: #{visual_transformer_forward.6}
  #allocation0 [shape = 'u32[]', space=smem, size = 0x4, offset = 0x4, fixed_abs, tag = 'smem constant byte address 0x4 - core index']
  #allocation1 [shape = 'u32[72,128]{1,0:T(1,128)}', space=vmem, size = 0x9000, scoped, tag = 'internal scratch']
  %s0 = inlined_call_operand.vmem [shape: f32[2,5,32], index: 0, kind: input, shape index: {}]
  %s1 = inlined_call_operand.vmem [shape: f32[1,32], index: 1, kind: input, shape index: {}]
  %s2 = inlined_call_operand.vmem [shape: f32[1,32], index: 2, kind: input, shape index: {}]
  %s3 = inlined_call_operand.vmem [shape: bf16[32,96], index: 3, kind: input, shape index: {}]
  %s4 = inlined_call_operand.vmem [shape: f32[1,96], index: 4, kind: input, shape index: {}]
  %s5 = inlined_call_operand.vmem [shape: bf16[32,32], index: 5, kind: input, shape index: {}]
  %s6 = inlined_call_operand.vmem [shape: f32[1,32], index: 6, kind: input, shape index: {}]
  %s7 = inlined_call_operand.vmem [shape: f32[1,32], index: 7, kind: input, shape index: {}]
  %s8 = inlined_call_operand.vmem [shape: f32[1,32], index: 8, kind: input, shape index: {}]
  %s9 = inlined_call_operand.vmem [shape: bf16[32,128], index: 9, kind: input, shape index: {}]
  %s10 = inlined_call_operand.vmem [shape: f32[1,128], index: 10, kind: input, shape index: {}]
  %s11 = inlined_call_operand.vmem [shape: bf16[128,32], index: 11, kind: input, shape index: {}]
  %s12 = inlined_call_operand.vmem [shape: f32[1,32], index: 12, kind: input, shape index: {}]
  %s13 = inlined_call_operand.vmem [shape: f32[2,5,32], index: 13, kind: output, shape index: {}]
  %s14 = sld [smem:[#allocation0]]
  $region85: #{visual_transformer_forward.6} parent=0
    _
  %s16 = ssub.s32 1, %s14
  %s17 = scalar_select 0, %s16, %s14
  loop: start=0, step=1, limit=4
  $region2: #{visual_transformer_forward.6} parent=0 // loop_pre_header
    _
  $region3: #{visual_transformer_forward.6} parent=0 // loop_header
    %s19 = sphi 0, %s23
    %p20 = scmp.ge.s32.totalorder %s19, 4
    %s29 = sphi 0, %s31
    %s32 = sphi 0, %s29
    %s33 = sphi 0, %s32
    %s49 = sphi 0, %s33
    %s53 = sphi 0, %s53
    %s55 = sphi 0, %s53
    %s56 = sphi 0, %s55
    %s70 = sphi 0, %s56
    %s74 = sphi 0, %s74
    %s76 = sphi 0, %s74
    %s77 = sphi 0, %s76
    %s91 = sphi 0, %s77
    %s95 = sphi 0, %s95
    %s97 = sphi 0, %s95
    %s98 = sphi 0, %s97
    %s112 = sphi 0, %s98
    %s116 = sphi 0, %s116
    %s118 = sphi 0, %s116
    %s119 = sphi 0, %s118
    %s133 = sphi 0, %s119
    %s137 = sphi 0, %s137
    %s139 = sphi 0, %s137
    %s140 = sphi 0, %s139
    %s154 = sphi 0, %s140
    %s158 = sphi 0, %s158
    %s160 = sphi 0, %s158
    %s161 = sphi 0, %s160
    %s175 = sphi 0, %s161
    %s179 = sphi 0, %s179
    %s181 = sphi 0, %s179
    %s182 = sphi 0, %s181
    %s196 = sphi 0, %s182
    %s200 = sphi 0, %s200
    %s202 = sphi 0, %s200
    %s203 = sphi 0, %s202
    %s217 = sphi 0, %s203
    %s221 = sphi 0, %s221
    %s223 = sphi 0, %s221
    %s224 = sphi 0, %s223
    %s238 = sphi 0, %s224
    %s242 = sphi 0, %s242
    %s244 = sphi 0, %s242
    %s245 = sphi 0, %s244
    %s259 = sphi 0, %s245
    %s263 = sphi 0, %s263
    %s265 = sphi 0, %s263
    %s266 = sphi 0, %s265
    %s280 = sphi 0, %s266
    %s284 = sphi 0, %s284
    %s286 = sphi 0, %s284
    %s287 = sphi 0, %s286
    %s301 = sphi 0, %s287
    %s307 = sphi 0, %s309
    %s310 = sphi 0, %s307
    %s311 = sphi 0, %s310
    %s327 = sphi 0, %s311
  $region4: #{visual_transformer_forward.6} parent=0 // loop_header_branch
    %22 = sbr.rel (%p20) target = $region8
  $region5: #{visual_transformer_forward.6} parent=0 // loop_body
    %s24 = ssub.s32 %s19, 1
    %s25 = ssub.s32 %s19, 2
    %s26 = sadd.s32 %s19, 1
    %s27 = ssub.s32 %s19, %s26
    %p28 = scmp.eq.s32.totalorder %s27, 0
    %s30 = sadd.s32 %s29, 1
    %s31 = scalar_select %p28, %s29, %s30
    %p34 = pneg %p28
    %p35 = scmp.eq.s32.totalorder %s19, 1
    %p36 = por %p34, %p35
    %p37 = scmp.ne.s32.totalorder %s29, %s32
    %p38 = scmp.eq.s32.totalorder %s19, 0
    %p39 = por %p37, %p38
    %p40 = scmp.ne.s32.totalorder %s29, %s32
    %p41 = scmp.eq.s32.totalorder %s24, 1
    %p42 = por %p40, %p41
    %p43 = scmp.ne.s32.totalorder %s32, %s33
    %p44 = scmp.eq.s32.totalorder %s24, 0
    %p45 = por %p43, %p44
    %p46 = scmp.ne.s32.totalorder %s32, %s33
    %p47 = scmp.eq.s32.totalorder %s25, 1
    %p48 = por %p46, %p47
    %p50 = scmp.ne.s32.totalorder %s33, %s49
    %p51 = scmp.eq.s32.totalorder %s25, 0
    %p52 = por %p50, %p51
    %s54 = sadd.s32 %s53, 1
    %p57 = scmp.eq.s32.totalorder %s19, 1
    %p58 = scmp.ne.s32.totalorder %s53, %s55
    %p59 = scmp.eq.s32.totalorder %s19, 0
    %p60 = por %p58, %p59
    %p61 = scmp.ne.s32.totalorder %s53, %s55
    %p62 = scmp.eq.s32.totalorder %s24, 1
    %p63 = por %p61, %p62
    %p64 = scmp.ne.s32.totalorder %s55, %s56
    %p65 = scmp.eq.s32.totalorder %s24, 0
    %p66 = por %p64, %p65
    %p67 = scmp.ne.s32.totalorder %s55, %s56
    %p68 = scmp.eq.s32.totalorder %s25, 1
    %p69 = por %p67, %p68
    %p71 = scmp.ne.s32.totalorder %s56, %s70
    %p72 = scmp.eq.s32.totalorder %s25, 0
    %p73 = por %p71, %p72
    %s75 = sadd.s32 %s74, 1
    %p78 = scmp.eq.s32.totalorder %s19, 1
    %p79 = scmp.ne.s32.totalorder %s74, %s76
    %p80 = scmp.eq.s32.totalorder %s19, 0
    %p81 = por %p79, %p80
    %p82 = scmp.ne.s32.totalorder %s74, %s76
    %p83 = scmp.eq.s32.totalorder %s24, 1
    %p84 = por %p82, %p83
    %p85 = scmp.ne.s32.totalorder %s76, %s77
    %p86 = scmp.eq.s32.totalorder %s24, 0
    %p87 = por %p85, %p86
    %p88 = scmp.ne.s32.totalorder %s76, %s77
    %p89 = scmp.eq.s32.totalorder %s25, 1
    %p90 = por %p88, %p89
    %p92 = scmp.ne.s32.totalorder %s77, %s91
    %p93 = scmp.eq.s32.totalorder %s25, 0
    %p94 = por %p92, %p93
    %s96 = sadd.s32 %s95, 1
    %p99 = scmp.eq.s32.totalorder %s19, 1
    %p100 = scmp.ne.s32.totalorder %s95, %s97
    %p101 = scmp.eq.s32.totalorder %s19, 0
    %p102 = por %p100, %p101
    %p103 = scmp.ne.s32.totalorder %s95, %s97
    %p104 = scmp.eq.s32.totalorder %s24, 1
    %p105 = por %p103, %p104
    %p106 = scmp.ne.s32.totalorder %s97, %s98
    %p107 = scmp.eq.s32.totalorder %s24, 0
    %p108 = por %p106, %p107
    %p109 = scmp.ne.s32.totalorder %s97, %s98
    %p110 = scmp.eq.s32.totalorder %s25, 1
    %p111 = por %p109, %p110
    %p113 = scmp.ne.s32.totalorder %s98, %s112
    %p114 = scmp.eq.s32.totalorder %s25, 0
    %p115 = por %p113, %p114
    %s117 = sadd.s32 %s116, 1
    %p120 = scmp.eq.s32.totalorder %s19, 1
    %p121 = scmp.ne.s32.totalorder %s116, %s118
    %p122 = scmp.eq.s32.totalorder %s19, 0
    %p123 = por %p121, %p122
    %p124 = scmp.ne.s32.totalorder %s116, %s118
    %p125 = scmp.eq.s32.totalorder %s24, 1
    %p126 = por %p124, %p125
    %p127 = scmp.ne.s32.totalorder %s118, %s119
    %p128 = scmp.eq.s32.totalorder %s24, 0
    %p129 = por %p127, %p128
    %p130 = scmp.ne.s32.totalorder %s118, %s119
    %p131 = scmp.eq.s32.totalorder %s25, 1
    %p132 = por %p130, %p131
    %p134 = scmp.ne.s32.totalorder %s119, %s133
    %p135 = scmp.eq.s32.totalorder %s25, 0
    %p136 = por %p134, %p135
    %s138 = sadd.s32 %s137, 1
    %p141 = scmp.eq.s32.totalorder %s19, 1
    %p142 = scmp.ne.s32.totalorder %s137, %s139
    %p143 = scmp.eq.s32.totalorder %s19, 0
    %p144 = por %p142, %p143
    %p145 = scmp.ne.s32.totalorder %s137, %s139
    %p146 = scmp.eq.s32.totalorder %s24, 1
    %p147 = por %p145, %p146
    %p148 = scmp.ne.s32.totalorder %s139, %s140
    %p149 = scmp.eq.s32.totalorder %s24, 0
    %p150 = por %p148, %p149
    %p151 = scmp.ne.s32.totalorder %s139, %s140
    %p152 = scmp.eq.s32.totalorder %s25, 1
    %p153 = por %p151, %p152
    %p155 = scmp.ne.s32.totalorder %s140, %s154
    %p156 = scmp.eq.s32.totalorder %s25, 0
    %p157 = por %p155, %p156
    %s159 = sadd.s32 %s158, 1
    %p162 = scmp.eq.s32.totalorder %s19, 1
    %p163 = scmp.ne.s32.totalorder %s158, %s160
    %p164 = scmp.eq.s32.totalorder %s19, 0
    %p165 = por %p163, %p164
    %p166 = scmp.ne.s32.totalorder %s158, %s160
    %p167 = scmp.eq.s32.totalorder %s24, 1
    %p168 = por %p166, %p167
    %p169 = scmp.ne.s32.totalorder %s160, %s161
    %p170 = scmp.eq.s32.totalorder %s24, 0
    %p171 = por %p169, %p170
    %p172 = scmp.ne.s32.totalorder %s160, %s161
    %p173 = scmp.eq.s32.totalorder %s25, 1
    %p174 = por %p172, %p173
    %p176 = scmp.ne.s32.totalorder %s161, %s175
    %p177 = scmp.eq.s32.totalorder %s25, 0
    %p178 = por %p176, %p177
    %s180 = sadd.s32 %s179, 1
    %p183 = scmp.eq.s32.totalorder %s19, 1
    %p184 = scmp.ne.s32.totalorder %s179, %s181
    %p185 = scmp.eq.s32.totalorder %s19, 0
    %p186 = por %p184, %p185
    %p187 = scmp.ne.s32.totalorder %s179, %s181
    %p188 = scmp.eq.s32.totalorder %s24, 1
    %p189 = por %p187, %p188
    %p190 = scmp.ne.s32.totalorder %s181, %s182
    %p191 = scmp.eq.s32.totalorder %s24, 0
    %p192 = por %p190, %p191
    %p193 = scmp.ne.s32.totalorder %s181, %s182
    %p194 = scmp.eq.s32.totalorder %s25, 1
    %p195 = por %p193, %p194
    %p197 = scmp.ne.s32.totalorder %s182, %s196
    %p198 = scmp.eq.s32.totalorder %s25, 0
    %p199 = por %p197, %p198
    %s201 = sadd.s32 %s200, 1
    %p204 = scmp.eq.s32.totalorder %s19, 1
    %p205 = scmp.ne.s32.totalorder %s200, %s202
    %p206 = scmp.eq.s32.totalorder %s19, 0
    %p207 = por %p205, %p206
    %p208 = scmp.ne.s32.totalorder %s200, %s202
    %p209 = scmp.eq.s32.totalorder %s24, 1
    %p210 = por %p208, %p209
    %p211 = scmp.ne.s32.totalorder %s202, %s203
    %p212 = scmp.eq.s32.totalorder %s24, 0
    %p213 = por %p211, %p212
    %p214 = scmp.ne.s32.totalorder %s202, %s203
    %p215 = scmp.eq.s32.totalorder %s25, 1
    %p216 = por %p214, %p215
    %p218 = scmp.ne.s32.totalorder %s203, %s217
    %p219 = scmp.eq.s32.totalorder %s25, 0
    %p220 = por %p218, %p219
    %s222 = sadd.s32 %s221, 1
    %p225 = scmp.eq.s32.totalorder %s19, 1
    %p226 = scmp.ne.s32.totalorder %s221, %s223
    %p227 = scmp.eq.s32.totalorder %s19, 0
    %p228 = por %p226, %p227
    %p229 = scmp.ne.s32.totalorder %s221, %s223
    %p230 = scmp.eq.s32.totalorder %s24, 1
    %p231 = por %p229, %p230
    %p232 = scmp.ne.s32.totalorder %s223, %s224
    %p233 = scmp.eq.s32.totalorder %s24, 0
    %p234 = por %p232, %p233
    %p235 = scmp.ne.s32.totalorder %s223, %s224
    %p236 = scmp.eq.s32.totalorder %s25, 1
    %p237 = por %p235, %p236
    %p239 = scmp.ne.s32.totalorder %s224, %s238
    %p240 = scmp.eq.s32.totalorder %s25, 0
    %p241 = por %p239, %p240
    %s243 = sadd.s32 %s242, 1
    %p246 = scmp.eq.s32.totalorder %s19, 1
    %p247 = scmp.ne.s32.totalorder %s242, %s244
    %p248 = scmp.eq.s32.totalorder %s19, 0
    %p249 = por %p247, %p248
    %p250 = scmp.ne.s32.totalorder %s242, %s244
    %p251 = scmp.eq.s32.totalorder %s24, 1
    %p252 = por %p250, %p251
    %p253 = scmp.ne.s32.totalorder %s244, %s245
    %p254 = scmp.eq.s32.totalorder %s24, 0
    %p255 = por %p253, %p254
    %p256 = scmp.ne.s32.totalorder %s244, %s245
    %p257 = scmp.eq.s32.totalorder %s25, 1
    %p258 = por %p256, %p257
    %p260 = scmp.ne.s32.totalorder %s245, %s259
    %p261 = scmp.eq.s32.totalorder %s25, 0
    %p262 = por %p260, %p261
    %s264 = sadd.s32 %s263, 1
    %p267 = scmp.eq.s32.totalorder %s19, 1
    %p268 = scmp.ne.s32.totalorder %s263, %s265
    %p269 = scmp.eq.s32.totalorder %s19, 0
    %p270 = por %p268, %p269
    %p271 = scmp.ne.s32.totalorder %s263, %s265
    %p272 = scmp.eq.s32.totalorder %s24, 1
    %p273 = por %p271, %p272
    %p274 = scmp.ne.s32.totalorder %s265, %s266
    %p275 = scmp.eq.s32.totalorder %s24, 0
    %p276 = por %p274, %p275
    %p277 = scmp.ne.s32.totalorder %s265, %s266
    %p278 = scmp.eq.s32.totalorder %s25, 1
    %p279 = por %p277, %p278
    %p281 = scmp.ne.s32.totalorder %s266, %s280
    %p282 = scmp.eq.s32.totalorder %s25, 0
    %p283 = por %p281, %p282
    %s285 = sadd.s32 %s284, 1
    %p288 = scmp.eq.s32.totalorder %s19, 1
    %p289 = scmp.ne.s32.totalorder %s284, %s286
    %p290 = scmp.eq.s32.totalorder %s19, 0
    %p291 = por %p289, %p290
    %p292 = scmp.ne.s32.totalorder %s284, %s286
    %p293 = scmp.eq.s32.totalorder %s24, 1
    %p294 = por %p292, %p293
    %p295 = scmp.ne.s32.totalorder %s286, %s287
    %p296 = scmp.eq.s32.totalorder %s24, 0
    %p297 = por %p295, %p296
    %p298 = scmp.ne.s32.totalorder %s286, %s287
    %p299 = scmp.eq.s32.totalorder %s25, 1
    %p300 = por %p298, %p299
    %p302 = scmp.ne.s32.totalorder %s287, %s301
    %p303 = scmp.eq.s32.totalorder %s25, 0
    %p304 = por %p302, %p303
    %s305 = ssub.s32 %s19, %s26
    %p306 = scmp.eq.s32.totalorder %s305, 0
    %s308 = sadd.s32 %s307, 1
    %s309 = scalar_select %p306, %s307, %s308
    %p312 = pneg %p306
    %p313 = scmp.eq.s32.totalorder %s19, 1
    %p314 = por %p312, %p313
    %p315 = scmp.ne.s32.totalorder %s307, %s310
    %p316 = scmp.eq.s32.totalorder %s19, 0
    %p317 = por %p315, %p316
    %p318 = scmp.ne.s32.totalorder %s307, %s310
    %p319 = scmp.eq.s32.totalorder %s24, 1
    %p320 = por %p318, %p319
    %p321 = scmp.ne.s32.totalorder %s310, %s311
    %p322 = scmp.eq.s32.totalorder %s24, 0
    %p323 = por %p321, %p322
    %p324 = scmp.ne.s32.totalorder %s310, %s311
    %p325 = scmp.eq.s32.totalorder %s25, 1
    %p326 = por %p324, %p325
    %p328 = scmp.ne.s32.totalorder %s311, %s327
    %p329 = scmp.eq.s32.totalorder %s25, 0
    %p330 = por %p328, %p329
    %p331 = scmp.le.s32.totalorder 1, %s19
    %p332 = scmp.lt.s32.totalorder %s19, 3
    %p333 = pnand %p331, %p332
    %p334 = pneg %p333
    // Predicated region
    $region9: #{visual_transformer_forward.6} parent=5 // pred_check
      _
    $region10: #{visual_transformer_forward.6} parent=5 // pred_check_branch
      %336 = sbr.rel (%p333) target = $region12
    $region11: #{visual_transformer_forward.6} parent=5 // pred_region
      %s337 = ssub.s32 %s19, 1
      // Predicated region
      $region13: #{visual_transformer_forward.6} parent=11 // pred_check
        %p338 = pneg %p66
      $region14: #{visual_transformer_forward.6} parent=11 // pred_check_branch
        %340 = sbr.rel (%p338) target = $region16
      $region15: #{visual_transformer_forward.6} parent=11 // pred_region
        _
      $region16: #{visual_transformer_forward.6} parent=11 // pred_fallthru
        _
      // Predicated region
      $region17: #{visual_transformer_forward.6} parent=11 // pred_check
        %p341 = pneg %p87
      $region18: #{visual_transformer_forward.6} parent=11 // pred_check_branch
        %343 = sbr.rel (%p341) target = $region20
      $region19: #{visual_transformer_forward.6} parent=11 // pred_region
        _
      $region20: #{visual_transformer_forward.6} parent=11 // pred_fallthru
        _
      // Predicated region
      $region21: #{visual_transformer_forward.6} parent=11 // pred_check
        %p344 = pneg %p108
      $region22: #{visual_transformer_forward.6} parent=11 // pred_check_branch
        %346 = sbr.rel (%p344) target = $region24
      $region23: #{visual_transformer_forward.6} parent=11 // pred_region
        _
      $region24: #{visual_transformer_forward.6} parent=11 // pred_fallthru
        _
      // Predicated region
      $region25: #{visual_transformer_forward.6} parent=11 // pred_check
        %p347 = pneg %p129
      $region26: #{visual_transformer_forward.6} parent=11 // pred_check_branch
        %349 = sbr.rel (%p347) target = $region28
      $region27: #{visual_transformer_forward.6} parent=11 // pred_region
        _
      $region28: #{visual_transformer_forward.6} parent=11 // pred_fallthru
        _
      // Predicated region
      $region29: #{visual_transformer_forward.6} parent=11 // pred_check
        %p350 = pneg %p150
      $region30: #{visual_transformer_forward.6} parent=11 // pred_check_branch
        %352 = sbr.rel (%p350) target = $region32
      $region31: #{visual_transformer_forward.6} parent=11 // pred_region
        _
      $region32: #{visual_transformer_forward.6} parent=11 // pred_fallthru
        _
      // Predicated region
      $region33: #{visual_transformer_forward.6} parent=11 // pred_check
        %p353 = pneg %p171
      $region34: #{visual_transformer_forward.6} parent=11 // pred_check_branch
        %355 = sbr.rel (%p353) target = $region36
      $region35: #{visual_transformer_forward.6} parent=11 // pred_region
        _
      $region36: #{visual_transformer_forward.6} parent=11 // pred_fallthru
        _
      // Predicated region
      $region37: #{visual_transformer_forward.6} parent=11 // pred_check
        %p356 = pneg %p192
      $region38: #{visual_transformer_forward.6} parent=11 // pred_check_branch
        %358 = sbr.rel (%p356) target = $region40
      $region39: #{visual_transformer_forward.6} parent=11 // pred_region
        _
      $region40: #{visual_transformer_forward.6} parent=11 // pred_fallthru
        _
      // Predicated region
      $region41: #{visual_transformer_forward.6} parent=11 // pred_check
        %p359 = pneg %p213
      $region42: #{visual_transformer_forward.6} parent=11 // pred_check_branch
        %361 = sbr.rel (%p359) target = $region44
      $region43: #{visual_transformer_forward.6} parent=11 // pred_region
        _
      $region44: #{visual_transformer_forward.6} parent=11 // pred_fallthru
        _
      // Predicated region
      $region45: #{visual_transformer_forward.6} parent=11 // pred_check
        %p362 = pneg %p234
      $region46: #{visual_transformer_forward.6} parent=11 // pred_check_branch
        %364 = sbr.rel (%p362) target = $region48
      $region47: #{visual_transformer_forward.6} parent=11 // pred_region
        _
      $region48: #{visual_transformer_forward.6} parent=11 // pred_fallthru
        _
      // Predicated region
      $region49: #{visual_transformer_forward.6} parent=11 // pred_check
        %p365 = pneg %p255
      $region50: #{visual_transformer_forward.6} parent=11 // pred_check_branch
        %367 = sbr.rel (%p365) target = $region52
      $region51: #{visual_transformer_forward.6} parent=11 // pred_region
        _
      $region52: #{visual_transformer_forward.6} parent=11 // pred_fallthru
        _
      // Predicated region
      $region53: #{visual_transformer_forward.6} parent=11 // pred_check
        %p368 = pneg %p276
      $region54: #{visual_transformer_forward.6} parent=11 // pred_check_branch
        %370 = sbr.rel (%p368) target = $region56
      $region55: #{visual_transformer_forward.6} parent=11 // pred_region
        _
      $region56: #{visual_transformer_forward.6} parent=11 // pred_fallthru
        _
      // Predicated region
      $region57: #{visual_transformer_forward.6} parent=11 // pred_check
        %p371 = pneg %p297
      $region58: #{visual_transformer_forward.6} parent=11 // pred_check_branch
        %373 = sbr.rel (%p371) target = $region60
      $region59: #{visual_transformer_forward.6} parent=11 // pred_region
        _
      $region60: #{visual_transformer_forward.6} parent=11 // pred_fallthru
        _
    $region12: #{visual_transformer_forward.6} parent=5 // pred_fallthru
      _
    %p374 = scmp.lt.s32.totalorder %s19, 2
    // Predicated region
    $region61: #{visual_transformer_forward.6} parent=5 // pred_check
      %p375 = pneg %p374
    $region62: #{visual_transformer_forward.6} parent=5 // pred_check_branch
      %377 = sbr.rel (%p375) target = $region64
    $region63: #{visual_transformer_forward.6} parent=5 // pred_region
      // Predicated region
      $region65: #{visual_transformer_forward.6} parent=63 // pred_check
        %p378 = pneg %p39
      $region66: #{visual_transformer_forward.6} parent=63 // pred_check_branch
        %380 = sbr.rel (%p378) target = $region68
      $region67: #{visual_transformer_forward.6} parent=63 // pred_region
        %p381 = scmp.lt.s32.totalorder %s19, 1
        %s382 = scalar_select %p381, %s19, 1
        %s383 = smul.addr %s382, 8
        %s384 = scalar_lea.vmem %s0, %s383
      $region68: #{visual_transformer_forward.6} parent=63 // pred_fallthru
        _
    $region64: #{visual_transformer_forward.6} parent=5 // pred_fallthru
      _
    %p385 = scmp.le.s32.totalorder 1, %s19
    %p386 = scmp.lt.s32.totalorder %s19, 3
    %p387 = pnand %p385, %p386
    %p388 = pneg %p387
    // Predicated region
    $region69: #{visual_transformer_forward.6} parent=5 // pred_check
      _
    $region70: #{visual_transformer_forward.6} parent=5 // pred_check_branch
      %390 = sbr.rel (%p387) target = $region72
    $region71: #{visual_transformer_forward.6} parent=5 // pred_region
      %s391 = ssub.s32 %s19, 1
      %p392 = scmp.lt.s32.totalorder %s24, 1
      %s393 = scalar_select %p392, %s24, 1
      %s394 = smul.addr %s393, 8
      %s395 = scalar_lea.vmem %s0, %s394
      %p396 = pneg %p45
      %p397 = pneg %p42
      %p398 = pneg %p66
      %p399 = pneg %p63
      %p400 = pneg %p87
      %p401 = pneg %p84
      %p402 = pneg %p108
      %p403 = pneg %p105
      %p404 = pneg %p129
      %p405 = pneg %p126
      %p406 = pneg %p150
      %p407 = pneg %p147
      %p408 = pneg %p171
      %p409 = pneg %p168
      %p410 = pneg %p192
      %p411 = pneg %p189
      %p412 = pneg %p213
      %p413 = pneg %p210
      %p414 = pneg %p234
      %p415 = pneg %p231
      %p416 = pneg %p255
      %p417 = pneg %p252
      %p418 = pneg %p276
      %p419 = pneg %p273
      %p420 = pneg %p297
      %p421 = pneg %p294
      %p422 = pneg %p323
      %p423 = pneg %p320
      %p424 = scmp.lt.s32.totalorder %s24, 1
      %s425 = scalar_select %p424, %s24, 1
      %s426 = smul.addr %s425, 8
      %s427 = scalar_lea.vmem %s13, %s426
      %p428 = scmp.lt.s32.totalorder %s24, 1
      %s429 = scalar_select %p428, %s24, 1
      %s430 = smul.addr %s429, 8
      %s431 = scalar_lea.vmem %s0, %s430
      %p432 = scmp.lt.s32.totalorder %s24, 1
      %s433 = scalar_select %p432, %s24, 1
      %s434 = smul.addr %s433, 8
      %s435 = scalar_lea.vmem %s13, %s434
      %v437 = vld [vmem:[%s431] sm:$0x1f]
      %v438 = vld [vmem:[%s1] sm:$0x1]
      %v439 = vld [vmem:[%s2] sm:$0x1]
      %v440 = vld [vmem:[%s3] sm:$0xf]
      %v441 = vld [vmem:[%s3 + $0x4] sm:$0xf]
      %v442 = vld [vmem:[%s3 + $0x8] sm:$0xf]
      %v443 = vld [vmem:[%s3 + $0xc] sm:$0xf]
      %v444 = vld [vmem:[%s4] sm:$0x1]
      %v445 = vld [vmem:[%s5] sm:$0xf]
      %v446 = vld [vmem:[%s5 + $0x4] sm:$0xf]
      %v447 = vld [vmem:[%s5 + $0x8] sm:$0xf]
      %v448 = vld [vmem:[%s5 + $0xc] sm:$0xf]
      %v449 = vld [vmem:[%s6] sm:$0x1]
      %vm450 = vcmask 258048
      %v451 = vsel %vm450, %v437, 0.0
      %452 = vadd.xlane.f32.xlu0 %v451
      %v453 = vpop.xlane.xlu0 %452
      %v454 = vrcp.pop 32.0
      %v455 = vmul.f32 32.0, %v454
      %v456 = vsub.f32 1.0, %v455
      %v457 = vmul.f32 %v454, %v456
      %v458 = vadd.f32 %v454, %v457
      %vm459 = vweird.f32 %v454
      %v460 = vsel %vm459, %v454, %v458
      %v461 = vmul.f32 %v453, %v460
      %v462 = vmul.f32 %v437, %v437
      %v463 = vsel %vm450, %v462, 0.0
      %464 = vadd.xlane.f32.xlu0 %v463
      %v465 = vpop.xlane.xlu0 %464
      %v466 = vmul.f32 %v465, %v460
      %v467 = vmul.f32 %v461, %v461
      %v468 = vsub.f32 %v466, %v467
      %v469 = vsub.f32 %v437, %v461
      %v470 = vadd.f32 %v468, 1e-05
      %v471 = vrsqrt.pop %v470
      %v472 = vmul.f32 %v471, %v470
      %v473 = vmul.f32 %v472, %v471
      %v474 = vmul.f32 0.5, %v473
      %v475 = vsub.f32 1.5, %v474
      %v476 = vmul.f32 %v471, %v475
      %vm477 = vweird.f32 %v470
      %vm478 = vweird.f32 %v471
      %vm479 = vmor %vm477, %vm478
      %v480 = vsel %vm479, %v471, %v476
      %v481 = vmul.f32 %v469, %v480
      %v483 = vperm.slane %v438, 0
      %v485 = vmul.f32 %v481, %v483
      %v487 = vperm.slane %v439, 0
      %v489 = vadd.f32 %v485, %v487
      %v490 = vpack.c.bf16 %v489, %v489
      %v492 = vperm.slane %v444, 0
      %v498 = vunpack.c.l.b16 %v440
      %v499 = vunpack.c.l.b16 %v441
      %v500 = vunpack.c.l.b16 %v442
      %v501 = vunpack.c.l.b16 %v443
      %v502 = vpack.c.b16 %v499, %v498
      %v503 = vpack.c.b16 %v501, %v500
      %vm506 = vcmask 261120
      %v508 = vsel %vm506, %v490, 0
      %510 = vmatpush.bf16.msra.mxu0 0
      %511 = vmatpush.bf16.msra.mxu0 0
      %512 = vmatpush.bf16.msra.mxu0 0
      %513 = vmatpush.bf16.msra.mxu0 0
      %514 = vmatpush.bf16.msra.mxu0 0
      %515 = vmatpush.bf16.msra.mxu0 0
      %516 = vmatpush.bf16.msra.mxu0 %v503
      %517 = vmatpush.bf16.msra.mxu0 %v502
      %518 = vmatmul.bf16.gmra.mxu0 %v508
      %v519 = vpop.f32.mrf.mxu0
      %v520 = vadd.f32 %v492, %v519
      %v521 = vpop.f32.mrf.mxu0
      %522 = vdwg.mxu0
      %v523 = vpack.c.bf16 %v520, %v520
      %525 = vrot.lane.b32.xlu0 %v523, 120
      %v526 = vpop.permute.xlu0 %525
      %527 = vrot.lane.b32.xlu0 %v523, 112
      %v528 = vpop.permute.xlu0 %527
      %529 = vrot.lane.b32.xlu0 %v523, 104
      %v530 = vpop.permute.xlu0 %529
      %v532 = vunpack.c.l.s4 1983009808
      %v533 = vunpack.c.0.s8 %v532
      %v534 = vperm.slane %v523, %v533
      %v537 = vunpack.c.l.s4 1983009808
      %v538 = vunpack.c.0.s8 %v537
      %v539 = vperm.slane %v528, %v538
      %v540 = vrot.slane %v539, 4
      %vm541 = vcmask 1047556
      %v542 = vsel %vm541, %v540, %v534
      %v543 = vrot.slane %v534, 4
      %v544 = vsel %vm541, %v539, %v543
      %v546 = vunpack.c.l.s4 1934713408
      %v547 = vunpack.c.0.s8 %v546
      %v548 = vperm.slane %v542, %v547
      %v549 = vrot.slane %v548, 4
      %v550 = vsel %vm541, 0, %v549
      %v552 = vunpack.c.l.s4 1934713408
      %v553 = vunpack.c.0.s8 %v552
      %v554 = vperm.slane %v544, %v553
      %v557 = vunpack.c.l.s4 1983009808
      %v558 = vunpack.c.0.s8 %v557
      %v559 = vperm.slane %v526, %v558
      %v562 = vunpack.c.l.s4 1983009808
      %v563 = vunpack.c.0.s8 %v562
      %v564 = vperm.slane %v530, %v563
      %v565 = vrot.slane %v564, 4
      %v566 = vsel %vm541, %v565, %v559
      %v567 = vrot.slane %v559, 4
      %v568 = vsel %vm541, %v564, %v567
      %v570 = vunpack.c.l.s4 1934713408
      %v571 = vunpack.c.0.s8 %v570
      %v572 = vperm.slane %v566, %v571
      %v573 = vrot.slane %v572, 4
      %v574 = vsel %vm541, 0, %v573
      %v576 = vunpack.c.l.s4 1934713408
      %v577 = vunpack.c.0.s8 %v576
      %v578 = vperm.slane %v568, %v577
      %v581 = vpack.i.b16 %v572, %v548
      %v583 = vshrl.u32 %v548, 16
      %v584 = vshrl.u32 %v572, 16
      %v585 = vpack.i.b16 %v584, %v583
      %v588 = vpack.i.b16 %v574, %v550
      %v589 = vshrl.u32 %v550, 16
      %v590 = vshrl.u32 %v574, 16
      %v591 = vpack.i.b16 %v590, %v589
      %v594 = vpack.i.b16 %v578, %v554
      %v596 = vrot.slane %v594, 4
      %v597 = vsel %vm541, %v596, %v581
      %v599 = vunpack.c.l.s4 1983009808
      %v600 = vunpack.c.0.s8 %v599
      %v601 = vperm.slane %v597, %v600
      %v603 = vrot.slane %v588, 4
      %v604 = vsel %vm541, %v603, %v601
      %v606 = vunpack.c.l.s4 1934713408
      %v607 = vunpack.c.0.s8 %v606
      %v608 = vperm.slane %v604, %v607
      %v609 = vrot.slane %v608, 4
      %v610 = vsel %vm541, 0, %v609
      %v613 = vrot.slane %v591, 4
      %v614 = vsel %vm541, %v613, %v585
      %v616 = vunpack.c.l.s4 1934713408
      %v617 = vunpack.c.0.s8 %v616
      %v618 = vperm.slane %v614, %v617
      %v619 = vrot.slane %v618, 4
      %v620 = vsel %vm541, 0, %v619
      %v623 = vpack.i.b16 %v618, %v608
      %v624 = vshrl.u32 %v608, 16
      %v625 = vshrl.u32 %v618, 16
      %v626 = vpack.i.b16 %v625, %v624
      %v629 = vpack.i.b16 %v620, %v610
      %v630 = vshrl.u32 %v610, 16
      %v631 = vshrl.u32 %v620, 16
      %v632 = vpack.i.b16 %v631, %v630
      %633 = vrot.lane.b32.xlu0 %v523, 96
      %v634 = vpop.permute.xlu0 %633
      %635 = vrot.lane.b32.xlu0 %v526, 96
      %v636 = vpop.permute.xlu0 %635
      %637 = vrot.lane.b32.xlu0 %v528, 96
      %v638 = vpop.permute.xlu0 %637
      %639 = vrot.lane.b32.xlu0 %v530, 96
      %v640 = vpop.permute.xlu0 %639
      %v643 = vunpack.c.l.s4 1983009808
      %v644 = vunpack.c.0.s8 %v643
      %v645 = vperm.slane %v634, %v644
      %v648 = vunpack.c.l.s4 1983009808
      %v649 = vunpack.c.0.s8 %v648
      %v650 = vperm.slane %v638, %v649
      %v651 = vrot.slane %v650, 4
      %v652 = vsel %vm541, %v651, %v645
      %v653 = vrot.slane %v645, 4
      %v654 = vsel %vm541, %v650, %v653
      %v656 = vunpack.c.l.s4 1934713408
      %v657 = vunpack.c.0.s8 %v656
      %v658 = vperm.slane %v652, %v657
      %v659 = vrot.slane %v658, 4
      %v660 = vsel %vm541, 0, %v659
      %v662 = vunpack.c.l.s4 1934713408
      %v663 = vunpack.c.0.s8 %v662
      %v664 = vperm.slane %v654, %v663
      %v667 = vunpack.c.l.s4 1983009808
      %v668 = vunpack.c.0.s8 %v667
      %v669 = vperm.slane %v636, %v668
      %v672 = vunpack.c.l.s4 1983009808
      %v673 = vunpack.c.0.s8 %v672
      %v674 = vperm.slane %v640, %v673
      %v675 = vrot.slane %v674, 4
      %v676 = vsel %vm541, %v675, %v669
      %v677 = vrot.slane %v669, 4
      %v678 = vsel %vm541, %v674, %v677
      %v680 = vunpack.c.l.s4 1934713408
      %v681 = vunpack.c.0.s8 %v680
      %v682 = vperm.slane %v676, %v681
      %v683 = vrot.slane %v682, 4
      %v684 = vsel %vm541, 0, %v683
      %v686 = vunpack.c.l.s4 1934713408
      %v687 = vunpack.c.0.s8 %v686
      %v688 = vperm.slane %v678, %v687
      %v691 = vpack.i.b16 %v682, %v658
      %v693 = vshrl.u32 %v658, 16
      %v694 = vshrl.u32 %v682, 16
      %v695 = vpack.i.b16 %v694, %v693
      %v698 = vpack.i.b16 %v684, %v660
      %v699 = vshrl.u32 %v660, 16
      %v700 = vshrl.u32 %v684, 16
      %v701 = vpack.i.b16 %v700, %v699
      %v704 = vpack.i.b16 %v688, %v664
      %v706 = vrot.slane %v704, 4
      %v707 = vsel %vm541, %v706, %v691
      %v709 = vunpack.c.l.s4 1983009808
      %v710 = vunpack.c.0.s8 %v709
      %v711 = vperm.slane %v707, %v710
      %v713 = vrot.slane %v698, 4
      %v714 = vsel %vm541, %v713, %v711
      %v716 = vunpack.c.l.s4 1934713408
      %v717 = vunpack.c.0.s8 %v716
      %v718 = vperm.slane %v714, %v717
      %v719 = vrot.slane %v718, 4
      %v720 = vsel %vm541, 0, %v719
      %v723 = vrot.slane %v701, 4
      %v724 = vsel %vm541, %v723, %v695
      %v726 = vunpack.c.l.s4 1934713408
      %v727 = vunpack.c.0.s8 %v726
      %v728 = vperm.slane %v724, %v727
      %v729 = vrot.slane %v728, 4
      %v730 = vsel %vm541, 0, %v729
      %v733 = vpack.i.b16 %v728, %v718
      %v734 = vshrl.u32 %v718, 16
      %v735 = vshrl.u32 %v728, 16
      %v736 = vpack.i.b16 %v735, %v734
      %v739 = vpack.i.b16 %v730, %v720
      %v740 = vshrl.u32 %v720, 16
      %v741 = vshrl.u32 %v730, 16
      %v742 = vpack.i.b16 %v741, %v740
      %743 = vrot.lane.b32.xlu0 %v523, 64
      %v744 = vpop.permute.xlu0 %743
      %745 = vrot.lane.b32.xlu0 %v526, 64
      %v746 = vpop.permute.xlu0 %745
      %747 = vrot.lane.b32.xlu0 %v528, 64
      %v748 = vpop.permute.xlu0 %747
      %749 = vrot.lane.b32.xlu0 %v530, 64
      %v750 = vpop.permute.xlu0 %749
      %v753 = vunpack.c.l.s4 1983009808
      %v754 = vunpack.c.0.s8 %v753
      %v755 = vperm.slane %v744, %v754
      %v758 = vunpack.c.l.s4 1983009808
      %v759 = vunpack.c.0.s8 %v758
      %v760 = vperm.slane %v748, %v759
      %v761 = vrot.slane %v760, 4
      %v762 = vsel %vm541, %v761, %v755
      %v763 = vrot.slane %v755, 4
      %v764 = vsel %vm541, %v760, %v763
      %v766 = vunpack.c.l.s4 1934713408
      %v767 = vunpack.c.0.s8 %v766
      %v768 = vperm.slane %v762, %v767
      %v769 = vrot.slane %v768, 4
      %v770 = vsel %vm541, 0, %v769
      %v772 = vunpack.c.l.s4 1934713408
      %v773 = vunpack.c.0.s8 %v772
      %v774 = vperm.slane %v764, %v773
      %v777 = vunpack.c.l.s4 1983009808
      %v778 = vunpack.c.0.s8 %v777
      %v779 = vperm.slane %v746, %v778
      %v782 = vunpack.c.l.s4 1983009808
      %v783 = vunpack.c.0.s8 %v782
      %v784 = vperm.slane %v750, %v783
      %v785 = vrot.slane %v784, 4
      %v786 = vsel %vm541, %v785, %v779
      %v787 = vrot.slane %v779, 4
      %v788 = vsel %vm541, %v784, %v787
      %v790 = vunpack.c.l.s4 1934713408
      %v791 = vunpack.c.0.s8 %v790
      %v792 = vperm.slane %v786, %v791
      %v793 = vrot.slane %v792, 4
      %v794 = vsel %vm541, 0, %v793
      %v796 = vunpack.c.l.s4 1934713408
      %v797 = vunpack.c.0.s8 %v796
      %v798 = vperm.slane %v788, %v797
      %v801 = vpack.i.b16 %v792, %v768
      %v803 = vshrl.u32 %v768, 16
      %v804 = vshrl.u32 %v792, 16
      %v805 = vpack.i.b16 %v804, %v803
      %v808 = vpack.i.b16 %v794, %v770
      %v809 = vshrl.u32 %v770, 16
      %v810 = vshrl.u32 %v794, 16
      %v811 = vpack.i.b16 %v810, %v809
      %v814 = vpack.i.b16 %v798, %v774
      %v816 = vrot.slane %v814, 4
      %v817 = vsel %vm541, %v816, %v801
      %v819 = vunpack.c.l.s4 1983009808
      %v820 = vunpack.c.0.s8 %v819
      %v821 = vperm.slane %v817, %v820
      %v823 = vrot.slane %v808, 4
      %v824 = vsel %vm541, %v823, %v821
      %v826 = vunpack.c.l.s4 1934713408
      %v827 = vunpack.c.0.s8 %v826
      %v828 = vperm.slane %v824, %v827
      %v829 = vrot.slane %v828, 4
      %v830 = vsel %vm541, 0, %v829
      %v833 = vrot.slane %v811, 4
      %v834 = vsel %vm541, %v833, %v805
      %v836 = vunpack.c.l.s4 1934713408
      %v837 = vunpack.c.0.s8 %v836
      %v838 = vperm.slane %v834, %v837
      %v839 = vrot.slane %v838, 4
      %v840 = vsel %vm541, 0, %v839
      %v843 = vpack.i.b16 %v838, %v828
      %v844 = vshrl.u32 %v828, 16
      %v845 = vshrl.u32 %v838, 16
      %v846 = vpack.i.b16 %v845, %v844
      %v849 = vpack.i.b16 %v840, %v830
      %v850 = vshrl.u32 %v830, 16
      %v851 = vshrl.u32 %v840, 16
      %v852 = vpack.i.b16 %v851, %v850
      %vm853 = vcmask 64512
      %v855 = vsel %vm853, %v623, 0
      %v858 = vsel %vm853, %v733, 0
      %860 = vmatpush.bf16.xpose.msra.mxu0 0
      %861 = vmatpush.bf16.xpose.msra.mxu0 0
      %862 = vmatpush.bf16.xpose.msra.mxu0 0
      %863 = vmatpush.bf16.xpose.msra.mxu0 0
      %864 = vmatpush.bf16.xpose.msra.mxu0 0
      %865 = vmatpush.bf16.xpose.msra.mxu0 0
      %866 = vmatpush.bf16.xpose.msra.mxu0 0
      %867 = vmatpush.bf16.xpose.msra.mxu0 %v858
      %868 = vmatmul.bf16.gmra.mxu0 %v855
      %v869 = vpop.f32.mrf.mxu0
      %v870 = vadd.f32 0.0, %v869
      %v871 = vpop.f32.mrf.mxu0
      %872 = vdwg.mxu0
      %v874 = vsel %vm853, %v626, 0
      %v877 = vsel %vm853, %v736, 0
      %879 = vmatpush.bf16.xpose.msra.mxu0 0
      %880 = vmatpush.bf16.xpose.msra.mxu0 0
      %881 = vmatpush.bf16.xpose.msra.mxu0 0
      %882 = vmatpush.bf16.xpose.msra.mxu0 0
      %883 = vmatpush.bf16.xpose.msra.mxu0 0
      %884 = vmatpush.bf16.xpose.msra.mxu0 0
      %885 = vmatpush.bf16.xpose.msra.mxu0 0
      %886 = vmatpush.bf16.xpose.msra.mxu0 %v877
      %887 = vmatmul.bf16.gmra.mxu0 %v874
      %v888 = vpop.f32.mrf.mxu0
      %v889 = vadd.f32 0.0, %v888
      %v890 = vpop.f32.mrf.mxu0
      %891 = vdwg.mxu0
      %v893 = vsel %vm853, %v629, 0
      %v896 = vsel %vm853, %v739, 0
      %898 = vmatpush.bf16.xpose.msra.mxu0 0
      %899 = vmatpush.bf16.xpose.msra.mxu0 0
      %900 = vmatpush.bf16.xpose.msra.mxu0 0
      %901 = vmatpush.bf16.xpose.msra.mxu0 0
      %902 = vmatpush.bf16.xpose.msra.mxu0 0
      %903 = vmatpush.bf16.xpose.msra.mxu0 0
      %904 = vmatpush.bf16.xpose.msra.mxu0 0
      %905 = vmatpush.bf16.xpose.msra.mxu0 %v896
      %906 = vmatmul.bf16.gmra.mxu0 %v893
      %v907 = vpop.f32.mrf.mxu0
      %v908 = vadd.f32 0.0, %v907
      %v909 = vpop.f32.mrf.mxu0
      %910 = vdwg.mxu0
      %v912 = vsel %vm853, %v632, 0
      %v915 = vsel %vm853, %v742, 0
      %917 = vmatpush.bf16.xpose.msra.mxu0 0
      %918 = vmatpush.bf16.xpose.msra.mxu0 0
      %919 = vmatpush.bf16.xpose.msra.mxu0 0
      %920 = vmatpush.bf16.xpose.msra.mxu0 0
      %921 = vmatpush.bf16.xpose.msra.mxu0 0
      %922 = vmatpush.bf16.xpose.msra.mxu0 0
      %923 = vmatpush.bf16.xpose.msra.mxu0 0
      %924 = vmatpush.bf16.xpose.msra.mxu0 %v915
      %925 = vmatmul.bf16.gmra.mxu0 %v912
      %v926 = vpop.f32.mrf.mxu0
      %v927 = vadd.f32 0.0, %v926
      %v928 = vpop.f32.mrf.mxu0
      %929 = vdwg.mxu0
      %vm930 = vcmask 36864
      %v931 = vsel %vm930, %v870, -inf
      %932 = vmax.xlane.f32.xlu0 %v931
      %v933 = vpop.xlane.xlu0 %932
      %v934 = vsel %vm930, %v889, -inf
      %935 = vmax.xlane.f32.xlu0 %v934
      %v936 = vpop.xlane.xlu0 %935
      %v937 = vsel %vm930, %v908, -inf
      %938 = vmax.xlane.f32.xlu0 %v937
      %v939 = vpop.xlane.xlu0 %938
      %v940 = vsel %vm930, %v927, -inf
      %941 = vmax.xlane.f32.xlu0 %v940
      %v942 = vpop.xlane.xlu0 %941
      %v943 = vsub.f32 %v870, %v933
      %v944 = vsub.f32 %v889, %v936
      %v945 = vsub.f32 %v908, %v939
      %v946 = vsub.f32 %v927, %v942
      %v947 = vmul.f32 %v943, 1.442695
      %v948 = vpow.pop %v947
      %v949 = vmul.f32 %v944, 1.442695
      %v950 = vpow.pop %v949
      %v951 = vmul.f32 %v945, 1.442695
      %v952 = vpow.pop %v951
      %v953 = vmul.f32 %v946, 1.442695
      %v954 = vpow.pop %v953
      %v955 = vsel %vm930, %v948, 0.0
      %956 = vadd.xlane.f32.xlu0 %v955
      %v957 = vpop.xlane.xlu0 %956
      %v958 = vsel %vm930, %v950, 0.0
      %959 = vadd.xlane.f32.xlu0 %v958
      %v960 = vpop.xlane.xlu0 %959
      %v961 = vsel %vm930, %v952, 0.0
      %962 = vadd.xlane.f32.xlu0 %v961
      %v963 = vpop.xlane.xlu0 %962
      %v964 = vsel %vm930, %v954, 0.0
      %965 = vadd.xlane.f32.xlu0 %v964
      %v966 = vpop.xlane.xlu0 %965
      %v967 = vrcp.pop %v957
      %v968 = vrcp.pop %v960
      %v969 = vrcp.pop %v963
      %v970 = vrcp.pop %v966
      %v971 = vmul.f32 %v948, %v967
      %v972 = vmul.f32 %v950, %v968
      %v973 = vmul.f32 %v952, %v969
      %v974 = vmul.f32 %v954, %v970
      %v975 = vpack.c.bf16 %v971, %v971
      %v976 = vpack.c.bf16 %v972, %v972
      %v977 = vpack.c.bf16 %v973, %v973
      %v978 = vpack.c.bf16 %v974, %v974
      %vm979 = vcmask 39936
      %v981 = vsel %vm979, %v975, 0
      %vm983 = vcmask 1041408
      %vm984 = vcmask 1042432
      %v985 = vsel %vm983, 4294967295, 65535
      %v986 = vsel %vm984, %v985, 0
      %v988 = vand.u32 %v843, %v986
      %990 = vmatpush.bf16.msra.mxu0 0
      %991 = vmatpush.bf16.msra.mxu0 0
      %992 = vmatpush.bf16.msra.mxu0 0
      %993 = vmatpush.bf16.msra.mxu0 0
      %994 = vmatpush.bf16.msra.mxu0 0
      %995 = vmatpush.bf16.msra.mxu0 0
      %996 = vmatpush.bf16.msra.mxu0 0
      %997 = vmatpush.bf16.msra.mxu0 %v988
      %998 = vmatmul.bf16.gmra.mxu0 %v981
      %v999 = vpop.f32.mrf.mxu0
      %v1000 = vadd.f32 0.0, %v999
      %v1001 = vpop.f32.mrf.mxu0
      %1002 = vdwg.mxu0
      %v1004 = vsel %vm979, %v976, 0
      %v1007 = vand.u32 %v846, %v986
      %1009 = vmatpush.bf16.msra.mxu0 0
      %1010 = vmatpush.bf16.msra.mxu0 0
      %1011 = vmatpush.bf16.msra.mxu0 0
      %1012 = vmatpush.bf16.msra.mxu0 0
      %1013 = vmatpush.bf16.msra.mxu0 0
      %1014 = vmatpush.bf16.msra.mxu0 0
      %1015 = vmatpush.bf16.msra.mxu0 0
      %1016 = vmatpush.bf16.msra.mxu0 %v1007
      %1017 = vmatmul.bf16.gmra.mxu0 %v1004
      %v1018 = vpop.f32.mrf.mxu0
      %v1019 = vadd.f32 0.0, %v1018
      %v1020 = vpop.f32.mrf.mxu0
      %1021 = vdwg.mxu0
      %v1023 = vsel %vm979, %v977, 0
      %v1026 = vand.u32 %v849, %v986
      %1028 = vmatpush.bf16.msra.mxu0 0
      %1029 = vmatpush.bf16.msra.mxu0 0
      %1030 = vmatpush.bf16.msra.mxu0 0
      %1031 = vmatpush.bf16.msra.mxu0 0
      %1032 = vmatpush.bf16.msra.mxu0 0
      %1033 = vmatpush.bf16.msra.mxu0 0
      %1034 = vmatpush.bf16.msra.mxu0 0
      %1035 = vmatpush.bf16.msra.mxu0 %v1026
      %1036 = vmatmul.bf16.gmra.mxu0 %v1023
      %v1037 = vpop.f32.mrf.mxu0
      %v1038 = vadd.f32 0.0, %v1037
      %v1039 = vpop.f32.mrf.mxu0
      %1040 = vdwg.mxu0
      %v1042 = vsel %vm979, %v978, 0
      %v1045 = vand.u32 %v852, %v986
      %1047 = vmatpush.bf16.msra.mxu0 0
      %1048 = vmatpush.bf16.msra.mxu0 0
      %1049 = vmatpush.bf16.msra.mxu0 0
      %1050 = vmatpush.bf16.msra.mxu0 0
      %1051 = vmatpush.bf16.msra.mxu0 0
      %1052 = vmatpush.bf16.msra.mxu0 0
      %1053 = vmatpush.bf16.msra.mxu0 0
      %1054 = vmatpush.bf16.msra.mxu0 %v1045
      %1055 = vmatmul.bf16.gmra.mxu0 %v1042
      %v1056 = vpop.f32.mrf.mxu0
      %v1057 = vadd.f32 0.0, %v1056
      %v1058 = vpop.f32.mrf.mxu0
      %1059 = vdwg.mxu0
      %v1060 = vpack.c.bf16 %v1000, %v1000
      %v1062 = vunpack.c.l.s4 1983009808
      %v1063 = vunpack.c.0.s8 %v1062
      %v1064 = vperm.slane %v1060, %v1063
      %v1065 = vpack.c.bf16 %v1038, %v1038
      %v1067 = vunpack.c.l.s4 1983009808
      %v1068 = vunpack.c.0.s8 %v1067
      %v1069 = vperm.slane %v1065, %v1068
      %v1070 = vrot.slane %v1069, 4
      %v1071 = vsel %vm541, %v1070, %v1064
      %v1072 = vrot.slane %v1064, 4
      %v1073 = vsel %vm541, %v1069, %v1072
      %v1075 = vunpack.c.l.s4 1934713408
      %v1076 = vunpack.c.0.s8 %v1075
      %v1077 = vperm.slane %v1071, %v1076
      %v1078 = vrot.slane %v1077, 4
      %v1079 = vsel %vm541, 0, %v1078
      %v1081 = vunpack.c.l.s4 1934713408
      %v1082 = vunpack.c.0.s8 %v1081
      %v1083 = vperm.slane %v1073, %v1082
      %v1084 = vpack.c.bf16 %v1019, %v1019
      %v1086 = vunpack.c.l.s4 1983009808
      %v1087 = vunpack.c.0.s8 %v1086
      %v1088 = vperm.slane %v1084, %v1087
      %v1089 = vpack.c.bf16 %v1057, %v1057
      %v1091 = vunpack.c.l.s4 1983009808
      %v1092 = vunpack.c.0.s8 %v1091
      %v1093 = vperm.slane %v1089, %v1092
      %v1094 = vrot.slane %v1093, 4
      %v1095 = vsel %vm541, %v1094, %v1088
      %v1096 = vrot.slane %v1088, 4
      %v1097 = vsel %vm541, %v1093, %v1096
      %v1099 = vunpack.c.l.s4 1934713408
      %v1100 = vunpack.c.0.s8 %v1099
      %v1101 = vperm.slane %v1095, %v1100
      %v1102 = vrot.slane %v1101, 4
      %v1103 = vsel %vm541, 0, %v1102
      %v1105 = vunpack.c.l.s4 1934713408
      %v1106 = vunpack.c.0.s8 %v1105
      %v1107 = vperm.slane %v1097, %v1106
      %v1110 = vpack.i.b16 %v1101, %v1077
      %v1112 = vshrl.u32 %v1077, 16
      %v1113 = vshrl.u32 %v1101, 16
      %v1114 = vpack.i.b16 %v1113, %v1112
      %v1117 = vpack.i.b16 %v1103, %v1079
      %v1118 = vshrl.u32 %v1079, 16
      %v1119 = vshrl.u32 %v1103, 16
      %v1120 = vpack.i.b16 %v1119, %v1118
      %v1123 = vpack.i.b16 %v1107, %v1083
      %v1125 = vrot.slane %v1123, 4
      %v1126 = vsel %vm541, %v1125, %v1110
      %v1128 = vunpack.c.l.s4 1983009808
      %v1129 = vunpack.c.0.s8 %v1128
      %v1130 = vperm.slane %v1126, %v1129
      %v1132 = vrot.slane %v1117, 4
      %v1133 = vsel %vm541, %v1132, %v1130
      %v1135 = vunpack.c.l.s4 1934713408
      %v1136 = vunpack.c.0.s8 %v1135
      %v1137 = vperm.slane %v1133, %v1136
      %v1138 = vrot.slane %v1137, 4
      %v1139 = vsel %vm541, 0, %v1138
      %v1142 = vrot.slane %v1120, 4
      %v1143 = vsel %vm541, %v1142, %v1114
      %v1145 = vunpack.c.l.s4 1934713408
      %v1146 = vunpack.c.0.s8 %v1145
      %v1147 = vperm.slane %v1143, %v1146
      %v1148 = vrot.slane %v1147, 4
      %v1149 = vsel %vm541, 0, %v1148
      %v1152 = vpack.i.b16 %v1147, %v1137
      %v1153 = vshrl.u32 %v1137, 16
      %v1154 = vshrl.u32 %v1147, 16
      %v1155 = vpack.i.b16 %v1154, %v1153
      %v1158 = vpack.i.b16 %v1149, %v1139
      %v1159 = vshrl.u32 %v1139, 16
      %v1160 = vshrl.u32 %v1149, 16
      %v1161 = vpack.i.b16 %v1160, %v1159
      %v1162 = vunpack.c.l.b16 %v1155
      %v1163 = vpack.c.b16 %v1162, %v1162
      %1164 = vrot.lane.b32.xlu0 %v1163, 8
      %v1165 = vpop.permute.xlu0 %1164
      %v1166 = vunpack.c.l.b16 %v1158
      %v1167 = vpack.c.b16 %v1166, %v1166
      %1168 = vrot.lane.b32.xlu0 %v1167, 16
      %v1169 = vpop.permute.xlu0 %1168
      %v1170 = vunpack.c.l.b16 %v1161
      %v1171 = vpack.c.b16 %v1170, %v1170
      %1172 = vrot.lane.b32.xlu0 %v1171, 24
      %v1173 = vpop.permute.xlu0 %1172
      %v1176 = vsel %vm853, %v1152, %v1165
      %vm1177 = vcmask 130048
      %v1179 = vsel %vm1177, %v1176, %v1169
      %vm1180 = vcmask 195584
      %v1182 = vsel %vm1180, %v1179, %v1173
      %v1184 = vperm.slane %v449, 0
      %v1190 = vunpack.c.l.b16 %v445
      %v1191 = vunpack.c.l.b16 %v446
      %v1192 = vunpack.c.l.b16 %v447
      %v1193 = vunpack.c.l.b16 %v448
      %v1194 = vpack.c.b16 %v1191, %v1190
      %v1195 = vpack.c.b16 %v1193, %v1192
      %v1198 = vsel %vm506, %v1182, 0
      %1200 = vmatpush.bf16.msra.mxu0 0
      %1201 = vmatpush.bf16.msra.mxu0 0
      %1202 = vmatpush.bf16.msra.mxu0 0
      %1203 = vmatpush.bf16.msra.mxu0 0
      %1204 = vmatpush.bf16.msra.mxu0 0
      %1205 = vmatpush.bf16.msra.mxu0 0
      %1206 = vmatpush.bf16.msra.mxu0 %v1195
      %1207 = vmatpush.bf16.msra.mxu0 %v1194
      %1208 = vmatmul.bf16.gmra.mxu0 %v1198
      %v1209 = vpop.f32.mrf.mxu0
      %v1210 = vadd.f32 %v1184, %v1209
      %v1211 = vpop.f32.mrf.mxu0
      %1212 = vdwg.mxu0
      %v1213 = vadd.f32 %v437, %v1210
      %v1214 = vld [vmem:[%s7] sm:$0x1]
      %v1215 = vld [vmem:[%s8] sm:$0x1]
      %v1216 = vld [vmem:[%s9] sm:$0xf]
      %v1217 = vld [vmem:[%s9 + $0x4] sm:$0xf]
      %v1218 = vld [vmem:[%s9 + $0x8] sm:$0xf]
      %v1219 = vld [vmem:[%s9 + $0xc] sm:$0xf]
      %v1220 = vld [vmem:[%s10] sm:$0x1]
      %v1221 = vld [vmem:[%s11] sm:$0xf]
      %v1222 = vld [vmem:[%s11 + $0x4] sm:$0xf]
      %v1223 = vld [vmem:[%s11 + $0x8] sm:$0xf]
      %v1224 = vld [vmem:[%s11 + $0xc] sm:$0xf]
      %v1225 = vld [vmem:[%s11 + $0x10] sm:$0xf]
      %v1226 = vld [vmem:[%s11 + $0x14] sm:$0xf]
      %v1227 = vld [vmem:[%s11 + $0x18] sm:$0xf]
      %v1228 = vld [vmem:[%s11 + $0x1c] sm:$0xf]
      %v1229 = vld [vmem:[%s11 + $0x20] sm:$0xf]
      %v1230 = vld [vmem:[%s11 + $0x24] sm:$0xf]
      %v1231 = vld [vmem:[%s11 + $0x28] sm:$0xf]
      %v1232 = vld [vmem:[%s11 + $0x2c] sm:$0xf]
      %v1233 = vld [vmem:[%s11 + $0x30] sm:$0xf]
      %v1234 = vld [vmem:[%s11 + $0x34] sm:$0xf]
      %v1235 = vld [vmem:[%s11 + $0x38] sm:$0xf]
      %v1236 = vld [vmem:[%s11 + $0x3c] sm:$0xf]
      %v1237 = vld [vmem:[%s12] sm:$0x1]
      %v1238 = vsel %vm450, %v1213, 0.0
      %1239 = vadd.xlane.f32.xlu0 %v1238
      %v1240 = vpop.xlane.xlu0 %1239
      %v1241 = vmul.f32 %v1240, %v460
      %v1242 = vmul.f32 %v1213, %v1213
      %v1243 = vsel %vm450, %v1242, 0.0
      %1244 = vadd.xlane.f32.xlu0 %v1243
      %v1245 = vpop.xlane.xlu0 %1244
      %v1246 = vmul.f32 %v1245, %v460
      %v1247 = vmul.f32 %v1241, %v1241
      %v1248 = vsub.f32 %v1246, %v1247
      %v1249 = vsub.f32 %v1213, %v1241
      %v1250 = vadd.f32 %v1248, 1e-05
      %v1251 = vrsqrt.pop %v1250
      %v1252 = vmul.f32 %v1251, %v1250
      %v1253 = vmul.f32 %v1252, %v1251
      %v1254 = vmul.f32 0.5, %v1253
      %v1255 = vsub.f32 1.5, %v1254
      %v1256 = vmul.f32 %v1251, %v1255
      %vm1257 = vweird.f32 %v1250
      %vm1258 = vweird.f32 %v1251
      %vm1259 = vmor %vm1257, %vm1258
      %v1260 = vsel %vm1259, %v1251, %v1256
      %v1261 = vmul.f32 %v1249, %v1260
      %v1263 = vperm.slane %v1214, 0
      %v1265 = vmul.f32 %v1261, %v1263
      %v1267 = vperm.slane %v1215, 0
      %v1269 = vadd.f32 %v1265, %v1267
      %v1270 = vpack.c.bf16 %v1269, %v1269
      %v1272 = vperm.slane %v1220, 0
      %v1278 = vunpack.c.l.b16 %v1216
      %v1279 = vunpack.c.l.b16 %v1217
      %v1280 = vunpack.c.l.b16 %v1218
      %v1281 = vunpack.c.l.b16 %v1219
      %v1282 = vpack.c.b16 %v1279, %v1278
      %v1283 = vpack.c.b16 %v1281, %v1280
      %v1287 = vsel %vm506, %v1270, 0
      %1289 = vmatpush.bf16.msra.mxu0 0
      %1290 = vmatpush.bf16.msra.mxu0 0
      %1291 = vmatpush.bf16.msra.mxu0 0
      %1292 = vmatpush.bf16.msra.mxu0 0
      %1293 = vmatpush.bf16.msra.mxu0 0
      %1294 = vmatpush.bf16.msra.mxu0 0
      %1295 = vmatpush.bf16.msra.mxu0 %v1283
      %1296 = vmatpush.bf16.msra.mxu0 %v1282
      %1297 = vmatmul.bf16.gmra.mxu0 %v1287
      %v1298 = vpop.f32.mrf.mxu0
      %v1299 = vadd.f32 %v1272, %v1298
      %v1300 = vpop.f32.mrf.mxu0
      %1301 = vdwg.mxu0
      %v1302 = vmul.f32 %v1299, 0.5
      %v1303 = vmul.f32 %v1299, 0.70710677
      %v1304 = vmul.f32 %v1303, %v1303
      %v1305 = vmin.f32 16.0, %v1304
      %v1306 = vmul.f32 %v1305, 2.1237322e-06
      %v1307 = vadd.f32 %v1306, 0.00028619796
      %v1308 = vmul.f32 %v1305, %v1307
      %v1309 = vadd.f32 %v1308, 0.0036580483
      %v1310 = vmul.f32 %v1305, %v1309
      %v1311 = vadd.f32 %v1310, 0.05243302
      %v1312 = vmul.f32 %v1305, %v1311
      %v1313 = vadd.f32 %v1312, 0.18741608
      %v1314 = vmul.f32 %v1305, %v1313
      %v1315 = vadd.f32 %v1314, 1.1283791
      %v1316 = vmul.f32 %v1303, %v1315
      %v1317 = vmul.f32 %v1305, 3.8918573e-05
      %v1318 = vadd.f32 %v1317, 0.001143296
      %v1319 = vmul.f32 %v1305, %v1318
      %v1320 = vadd.f32 %v1319, 0.014752088
      %v1321 = vmul.f32 %v1305, %v1320
      %v1322 = vadd.f32 %v1321, 0.112945676
      %v1323 = vmul.f32 %v1305, %v1322
      %v1324 = vadd.f32 %v1323, 0.4994258
      %v1325 = vmul.f32 %v1305, %v1324
      %v1326 = vadd.f32 %v1325, 1.0
      %v1327 = vrcp.pop %v1326
      %v1328 = vmul.f32 %v1326, %v1327
      %v1329 = vsub.f32 1.0, %v1328
      %v1330 = vmul.f32 %v1327, %v1329
      %v1331 = vadd.f32 %v1327, %v1330
      %vm1332 = vweird.f32 %v1326
      %vm1333 = vweird.f32 %v1327
      %vm1334 = vmor %vm1332, %vm1333
      %v1335 = vsel %vm1334, %v1327, %v1331
      %v1336 = vand.u32 2147483647, %v1326
      %vm1337 = vcmp.eq.f32.partialorder %v1336, 8.507059e+37
      %v1338 = vand.u32 %v1326, 2147483648
      %v1339 = vor.u32 1.1754944e-38, %v1338
      %v1340 = vsel %vm1337, %v1339, %v1335
      %v1341 = vmul.f32 %v1316, %v1340
      %v1342 = vmin.f32 %v1341, 1.0
      %v1343 = vmax.f32 %v1342, -1.0
      %v1344 = vadd.f32 %v1343, 1.0
      %v1345 = vmul.f32 %v1302, %v1344
      %v1346 = vpack.c.bf16 %v1345, %v1345
      %v1348 = vperm.slane %v1237, 0
      %v1366 = vunpack.c.l.b16 %v1221
      %v1367 = vunpack.c.l.b16 %v1222
      %v1368 = vunpack.c.l.b16 %v1223
      %v1369 = vunpack.c.l.b16 %v1224
      %v1370 = vunpack.c.l.b16 %v1225
      %v1371 = vunpack.c.l.b16 %v1226
      %v1372 = vunpack.c.l.b16 %v1227
      %v1373 = vunpack.c.l.b16 %v1228
      %v1374 = vunpack.c.l.b16 %v1229
      %v1375 = vunpack.c.l.b16 %v1230
      %v1376 = vunpack.c.l.b16 %v1231
      %v1377 = vunpack.c.l.b16 %v1232
      %v1378 = vunpack.c.l.b16 %v1233
      %v1379 = vunpack.c.l.b16 %v1234
      %v1380 = vunpack.c.l.b16 %v1235
      %v1381 = vunpack.c.l.b16 %v1236
      %v1382 = vpack.c.b16 %v1367, %v1366
      %v1383 = vpack.c.b16 %v1369, %v1368
      %v1384 = vpack.c.b16 %v1371, %v1370
      %v1385 = vpack.c.b16 %v1373, %v1372
      %v1386 = vpack.c.b16 %v1375, %v1374
      %v1387 = vpack.c.b16 %v1377, %v1376
      %v1388 = vpack.c.b16 %v1379, %v1378
      %v1389 = vpack.c.b16 %v1381, %v1380
      %1398 = vmatpush.bf16.msra.mxu0 %v1389
      %1399 = vmatpush.bf16.msra.mxu0 %v1388
      %1400 = vmatpush.bf16.msra.mxu0 %v1387
      %1401 = vmatpush.bf16.msra.mxu0 %v1386
      %1402 = vmatpush.bf16.msra.mxu0 %v1385
      %1403 = vmatpush.bf16.msra.mxu0 %v1384
      %1404 = vmatpush.bf16.msra.mxu0 %v1383
      %1405 = vmatpush.bf16.msra.mxu0 %v1382
      %1406 = vmatmul.bf16.gmra.mxu0 %v1346
      %v1407 = vpop.f32.mrf.mxu0
      %v1408 = vadd.f32 %v1348, %v1407
      %v1409 = vpop.f32.mrf.mxu0
      %1410 = vdwg.mxu0
      %v1411 = vadd.f32 %v1213, %v1408
      %1412 = vst.msk [vmem:[%s435] sm:$0x1f] %vm450, %v1411
      %p1413 = scmp.lt.s32.totalorder %s24, 1
      %s1414 = scalar_select %p1413, %s24, 1
      %s1415 = smul.addr %s1414, 8
      %s1416 = scalar_lea.vmem %s13, %s1415
      // Predicated region
      $region73: #{visual_transformer_forward.6} parent=71 // pred_check
        %p1417 = pneg %p320
      $region74: #{visual_transformer_forward.6} parent=71 // pred_check_branch
        %1419 = sbr.rel (%p1417) target = $region76
      $region75: #{visual_transformer_forward.6} parent=71 // pred_region
        _
      $region76: #{visual_transformer_forward.6} parent=71 // pred_fallthru
        _
    $region72: #{visual_transformer_forward.6} parent=5 // pred_fallthru
      _
    %p1420 = scmp.le.s32.totalorder 2, %s19
    // Predicated region
    $region77: #{visual_transformer_forward.6} parent=5 // pred_check
      %p1421 = pneg %p1420
    $region78: #{visual_transformer_forward.6} parent=5 // pred_check_branch
      %1423 = sbr.rel (%p1421) target = $region80
    $region79: #{visual_transformer_forward.6} parent=5 // pred_region
      %s1424 = ssub.s32 %s19, 2
      // Predicated region
      $region81: #{visual_transformer_forward.6} parent=79 // pred_check
        %p1425 = pneg %p326
      $region82: #{visual_transformer_forward.6} parent=79 // pred_check_branch
        %1427 = sbr.rel (%p1425) target = $region84
      $region83: #{visual_transformer_forward.6} parent=79 // pred_region
        %p1428 = scmp.lt.s32.totalorder %s25, 1
        %s1429 = scalar_select %p1428, %s25, 1
        %s1430 = smul.addr %s1429, 8
        %s1431 = scalar_lea.vmem %s13, %s1430
      $region84: #{visual_transformer_forward.6} parent=79 // pred_fallthru
        _
    $region80: #{visual_transformer_forward.6} parent=5 // pred_fallthru
      _
  $region6: #{visual_transformer_forward.6} parent=0 // loop_footer
    %s23 = sadd.s32 1, %s19
  $region7: #{visual_transformer_forward.6} parent=0 // loop_footer_branch
    %18 = sbr.rel target = $region3
  $region8: #{visual_transformer_forward.6} parent=0 // loop_exit
    _

// kernel: visual_transformer_forward.5
$region0: #{visual_transformer_forward.5}
  #allocation0 [shape = 'u32[]', space=smem, size = 0x4, offset = 0x4, fixed_abs, tag = 'smem constant byte address 0x4 - core index']
  #allocation1 [shape = 'u32[72,128]{1,0:T(1,128)}', space=vmem, size = 0x9000, scoped, tag = 'internal scratch']
  %s0 = inlined_call_operand.vmem [shape: f32[2,5,32], index: 0, kind: input, shape index: {}]
  %s1 = inlined_call_operand.vmem [shape: f32[5,32], index: 1, kind: input, shape index: {}]
  %s2 = inlined_call_operand.vmem [shape: f32[1,32], index: 2, kind: input, shape index: {}]
  %s3 = inlined_call_operand.vmem [shape: f32[1,32], index: 3, kind: input, shape index: {}]
  %s4 = inlined_call_operand.vmem [shape: f32[1,32], index: 4, kind: input, shape index: {}]
  %s5 = inlined_call_operand.vmem [shape: f32[1,32], index: 5, kind: input, shape index: {}]
  %s6 = inlined_call_operand.vmem [shape: bf16[32,96], index: 6, kind: input, shape index: {}]
  %s7 = inlined_call_operand.vmem [shape: f32[1,96], index: 7, kind: input, shape index: {}]
  %s8 = inlined_call_operand.vmem [shape: bf16[32,32], index: 8, kind: input, shape index: {}]
  %s9 = inlined_call_operand.vmem [shape: f32[1,32], index: 9, kind: input, shape index: {}]
  %s10 = inlined_call_operand.vmem [shape: f32[1,32], index: 10, kind: input, shape index: {}]
  %s11 = inlined_call_operand.vmem [shape: f32[1,32], index: 11, kind: input, shape index: {}]
  %s12 = inlined_call_operand.vmem [shape: bf16[32,128], index: 12, kind: input, shape index: {}]
  %s13 = inlined_call_operand.vmem [shape: f32[1,128], index: 13, kind: input, shape index: {}]
  %s14 = inlined_call_operand.vmem [shape: bf16[128,32], index: 14, kind: input, shape index: {}]
  %s15 = inlined_call_operand.vmem [shape: f32[1,32], index: 15, kind: input, shape index: {}]
  %s16 = inlined_call_operand.vmem [shape: f32[2,5,32], index: 16, kind: output, shape index: {}]
  %s17 = sld [smem:[#allocation0]]
  $region97: #{visual_transformer_forward.5} parent=0
    _
  %s19 = ssub.s32 1, %s17
  %s20 = scalar_select 0, %s19, %s17
  loop: start=0, step=1, limit=4
  $region2: #{visual_transformer_forward.5} parent=0 // loop_pre_header
    _
  $region3: #{visual_transformer_forward.5} parent=0 // loop_header
    %s22 = sphi 0, %s26
    %p23 = scmp.ge.s32.totalorder %s22, 4
    %s32 = sphi 0, %s34
    %s35 = sphi 0, %s32
    %s36 = sphi 0, %s35
    %s52 = sphi 0, %s36
    %s56 = sphi 0, %s56
    %s58 = sphi 0, %s56
    %s59 = sphi 0, %s58
    %s73 = sphi 0, %s59
    %s77 = sphi 0, %s77
    %s79 = sphi 0, %s77
    %s80 = sphi 0, %s79
    %s94 = sphi 0, %s80
    %s98 = sphi 0, %s98
    %s100 = sphi 0, %s98
    %s101 = sphi 0, %s100
    %s115 = sphi 0, %s101
    %s119 = sphi 0, %s119
    %s121 = sphi 0, %s119
    %s122 = sphi 0, %s121
    %s136 = sphi 0, %s122
    %s140 = sphi 0, %s140
    %s142 = sphi 0, %s140
    %s143 = sphi 0, %s142
    %s157 = sphi 0, %s143
    %s161 = sphi 0, %s161
    %s163 = sphi 0, %s161
    %s164 = sphi 0, %s163
    %s178 = sphi 0, %s164
    %s182 = sphi 0, %s182
    %s184 = sphi 0, %s182
    %s185 = sphi 0, %s184
    %s199 = sphi 0, %s185
    %s203 = sphi 0, %s203
    %s205 = sphi 0, %s203
    %s206 = sphi 0, %s205
    %s220 = sphi 0, %s206
    %s224 = sphi 0, %s224
    %s226 = sphi 0, %s224
    %s227 = sphi 0, %s226
    %s241 = sphi 0, %s227
    %s245 = sphi 0, %s245
    %s247 = sphi 0, %s245
    %s248 = sphi 0, %s247
    %s262 = sphi 0, %s248
    %s266 = sphi 0, %s266
    %s268 = sphi 0, %s266
    %s269 = sphi 0, %s268
    %s283 = sphi 0, %s269
    %s287 = sphi 0, %s287
    %s289 = sphi 0, %s287
    %s290 = sphi 0, %s289
    %s304 = sphi 0, %s290
    %s308 = sphi 0, %s308
    %s310 = sphi 0, %s308
    %s311 = sphi 0, %s310
    %s325 = sphi 0, %s311
    %s329 = sphi 0, %s329
    %s331 = sphi 0, %s329
    %s332 = sphi 0, %s331
    %s346 = sphi 0, %s332
    %s350 = sphi 0, %s350
    %s352 = sphi 0, %s350
    %s353 = sphi 0, %s352
    %s367 = sphi 0, %s353
    %s373 = sphi 0, %s375
    %s376 = sphi 0, %s373
    %s377 = sphi 0, %s376
    %s393 = sphi 0, %s377
  $region4: #{visual_transformer_forward.5} parent=0 // loop_header_branch
    %25 = sbr.rel (%p23) target = $region8
  $region5: #{visual_transformer_forward.5} parent=0 // loop_body
    %s27 = ssub.s32 %s22, 1
    %s28 = ssub.s32 %s22, 2
    %s29 = sadd.s32 %s22, 1
    %s30 = ssub.s32 %s22, %s29
    %p31 = scmp.eq.s32.totalorder %s30, 0
    %s33 = sadd.s32 %s32, 1
    %s34 = scalar_select %p31, %s32, %s33
    %p37 = pneg %p31
    %p38 = scmp.eq.s32.totalorder %s22, 1
    %p39 = por %p37, %p38
    %p40 = scmp.ne.s32.totalorder %s32, %s35
    %p41 = scmp.eq.s32.totalorder %s22, 0
    %p42 = por %p40, %p41
    %p43 = scmp.ne.s32.totalorder %s32, %s35
    %p44 = scmp.eq.s32.totalorder %s27, 1
    %p45 = por %p43, %p44
    %p46 = scmp.ne.s32.totalorder %s35, %s36
    %p47 = scmp.eq.s32.totalorder %s27, 0
    %p48 = por %p46, %p47
    %p49 = scmp.ne.s32.totalorder %s35, %s36
    %p50 = scmp.eq.s32.totalorder %s28, 1
    %p51 = por %p49, %p50
    %p53 = scmp.ne.s32.totalorder %s36, %s52
    %p54 = scmp.eq.s32.totalorder %s28, 0
    %p55 = por %p53, %p54
    %s57 = sadd.s32 %s56, 1
    %p60 = scmp.eq.s32.totalorder %s22, 1
    %p61 = scmp.ne.s32.totalorder %s56, %s58
    %p62 = scmp.eq.s32.totalorder %s22, 0
    %p63 = por %p61, %p62
    %p64 = scmp.ne.s32.totalorder %s56, %s58
    %p65 = scmp.eq.s32.totalorder %s27, 1
    %p66 = por %p64, %p65
    %p67 = scmp.ne.s32.totalorder %s58, %s59
    %p68 = scmp.eq.s32.totalorder %s27, 0
    %p69 = por %p67, %p68
    %p70 = scmp.ne.s32.totalorder %s58, %s59
    %p71 = scmp.eq.s32.totalorder %s28, 1
    %p72 = por %p70, %p71
    %p74 = scmp.ne.s32.totalorder %s59, %s73
    %p75 = scmp.eq.s32.totalorder %s28, 0
    %p76 = por %p74, %p75
    %s78 = sadd.s32 %s77, 1
    %p81 = scmp.eq.s32.totalorder %s22, 1
    %p82 = scmp.ne.s32.totalorder %s77, %s79
    %p83 = scmp.eq.s32.totalorder %s22, 0
    %p84 = por %p82, %p83
    %p85 = scmp.ne.s32.totalorder %s77, %s79
    %p86 = scmp.eq.s32.totalorder %s27, 1
    %p87 = por %p85, %p86
    %p88 = scmp.ne.s32.totalorder %s79, %s80
    %p89 = scmp.eq.s32.totalorder %s27, 0
    %p90 = por %p88, %p89
    %p91 = scmp.ne.s32.totalorder %s79, %s80
    %p92 = scmp.eq.s32.totalorder %s28, 1
    %p93 = por %p91, %p92
    %p95 = scmp.ne.s32.totalorder %s80, %s94
    %p96 = scmp.eq.s32.totalorder %s28, 0
    %p97 = por %p95, %p96
    %s99 = sadd.s32 %s98, 1
    %p102 = scmp.eq.s32.totalorder %s22, 1
    %p103 = scmp.ne.s32.totalorder %s98, %s100
    %p104 = scmp.eq.s32.totalorder %s22, 0
    %p105 = por %p103, %p104
    %p106 = scmp.ne.s32.totalorder %s98, %s100
    %p107 = scmp.eq.s32.totalorder %s27, 1
    %p108 = por %p106, %p107
    %p109 = scmp.ne.s32.totalorder %s100, %s101
    %p110 = scmp.eq.s32.totalorder %s27, 0
    %p111 = por %p109, %p110
    %p112 = scmp.ne.s32.totalorder %s100, %s101
    %p113 = scmp.eq.s32.totalorder %s28, 1
    %p114 = por %p112, %p113
    %p116 = scmp.ne.s32.totalorder %s101, %s115
    %p117 = scmp.eq.s32.totalorder %s28, 0
    %p118 = por %p116, %p117
    %s120 = sadd.s32 %s119, 1
    %p123 = scmp.eq.s32.totalorder %s22, 1
    %p124 = scmp.ne.s32.totalorder %s119, %s121
    %p125 = scmp.eq.s32.totalorder %s22, 0
    %p126 = por %p124, %p125
    %p127 = scmp.ne.s32.totalorder %s119, %s121
    %p128 = scmp.eq.s32.totalorder %s27, 1
    %p129 = por %p127, %p128
    %p130 = scmp.ne.s32.totalorder %s121, %s122
    %p131 = scmp.eq.s32.totalorder %s27, 0
    %p132 = por %p130, %p131
    %p133 = scmp.ne.s32.totalorder %s121, %s122
    %p134 = scmp.eq.s32.totalorder %s28, 1
    %p135 = por %p133, %p134
    %p137 = scmp.ne.s32.totalorder %s122, %s136
    %p138 = scmp.eq.s32.totalorder %s28, 0
    %p139 = por %p137, %p138
    %s141 = sadd.s32 %s140, 1
    %p144 = scmp.eq.s32.totalorder %s22, 1
    %p145 = scmp.ne.s32.totalorder %s140, %s142
    %p146 = scmp.eq.s32.totalorder %s22, 0
    %p147 = por %p145, %p146
    %p148 = scmp.ne.s32.totalorder %s140, %s142
    %p149 = scmp.eq.s32.totalorder %s27, 1
    %p150 = por %p148, %p149
    %p151 = scmp.ne.s32.totalorder %s142, %s143
    %p152 = scmp.eq.s32.totalorder %s27, 0
    %p153 = por %p151, %p152
    %p154 = scmp.ne.s32.totalorder %s142, %s143
    %p155 = scmp.eq.s32.totalorder %s28, 1
    %p156 = por %p154, %p155
    %p158 = scmp.ne.s32.totalorder %s143, %s157
    %p159 = scmp.eq.s32.totalorder %s28, 0
    %p160 = por %p158, %p159
    %s162 = sadd.s32 %s161, 1
    %p165 = scmp.eq.s32.totalorder %s22, 1
    %p166 = scmp.ne.s32.totalorder %s161, %s163
    %p167 = scmp.eq.s32.totalorder %s22, 0
    %p168 = por %p166, %p167
    %p169 = scmp.ne.s32.totalorder %s161, %s163
    %p170 = scmp.eq.s32.totalorder %s27, 1
    %p171 = por %p169, %p170
    %p172 = scmp.ne.s32.totalorder %s163, %s164
    %p173 = scmp.eq.s32.totalorder %s27, 0
    %p174 = por %p172, %p173
    %p175 = scmp.ne.s32.totalorder %s163, %s164
    %p176 = scmp.eq.s32.totalorder %s28, 1
    %p177 = por %p175, %p176
    %p179 = scmp.ne.s32.totalorder %s164, %s178
    %p180 = scmp.eq.s32.totalorder %s28, 0
    %p181 = por %p179, %p180
    %s183 = sadd.s32 %s182, 1
    %p186 = scmp.eq.s32.totalorder %s22, 1
    %p187 = scmp.ne.s32.totalorder %s182, %s184
    %p188 = scmp.eq.s32.totalorder %s22, 0
    %p189 = por %p187, %p188
    %p190 = scmp.ne.s32.totalorder %s182, %s184
    %p191 = scmp.eq.s32.totalorder %s27, 1
    %p192 = por %p190, %p191
    %p193 = scmp.ne.s32.totalorder %s184, %s185
    %p194 = scmp.eq.s32.totalorder %s27, 0
    %p195 = por %p193, %p194
    %p196 = scmp.ne.s32.totalorder %s184, %s185
    %p197 = scmp.eq.s32.totalorder %s28, 1
    %p198 = por %p196, %p197
    %p200 = scmp.ne.s32.totalorder %s185, %s199
    %p201 = scmp.eq.s32.totalorder %s28, 0
    %p202 = por %p200, %p201
    %s204 = sadd.s32 %s203, 1
    %p207 = scmp.eq.s32.totalorder %s22, 1
    %p208 = scmp.ne.s32.totalorder %s203, %s205
    %p209 = scmp.eq.s32.totalorder %s22, 0
    %p210 = por %p208, %p209
    %p211 = scmp.ne.s32.totalorder %s203, %s205
    %p212 = scmp.eq.s32.totalorder %s27, 1
    %p213 = por %p211, %p212
    %p214 = scmp.ne.s32.totalorder %s205, %s206
    %p215 = scmp.eq.s32.totalorder %s27, 0
    %p216 = por %p214, %p215
    %p217 = scmp.ne.s32.totalorder %s205, %s206
    %p218 = scmp.eq.s32.totalorder %s28, 1
    %p219 = por %p217, %p218
    %p221 = scmp.ne.s32.totalorder %s206, %s220
    %p222 = scmp.eq.s32.totalorder %s28, 0
    %p223 = por %p221, %p222
    %s225 = sadd.s32 %s224, 1
    %p228 = scmp.eq.s32.totalorder %s22, 1
    %p229 = scmp.ne.s32.totalorder %s224, %s226
    %p230 = scmp.eq.s32.totalorder %s22, 0
    %p231 = por %p229, %p230
    %p232 = scmp.ne.s32.totalorder %s224, %s226
    %p233 = scmp.eq.s32.totalorder %s27, 1
    %p234 = por %p232, %p233
    %p235 = scmp.ne.s32.totalorder %s226, %s227
    %p236 = scmp.eq.s32.totalorder %s27, 0
    %p237 = por %p235, %p236
    %p238 = scmp.ne.s32.totalorder %s226, %s227
    %p239 = scmp.eq.s32.totalorder %s28, 1
    %p240 = por %p238, %p239
    %p242 = scmp.ne.s32.totalorder %s227, %s241
    %p243 = scmp.eq.s32.totalorder %s28, 0
    %p244 = por %p242, %p243
    %s246 = sadd.s32 %s245, 1
    %p249 = scmp.eq.s32.totalorder %s22, 1
    %p250 = scmp.ne.s32.totalorder %s245, %s247
    %p251 = scmp.eq.s32.totalorder %s22, 0
    %p252 = por %p250, %p251
    %p253 = scmp.ne.s32.totalorder %s245, %s247
    %p254 = scmp.eq.s32.totalorder %s27, 1
    %p255 = por %p253, %p254
    %p256 = scmp.ne.s32.totalorder %s247, %s248
    %p257 = scmp.eq.s32.totalorder %s27, 0
    %p258 = por %p256, %p257
    %p259 = scmp.ne.s32.totalorder %s247, %s248
    %p260 = scmp.eq.s32.totalorder %s28, 1
    %p261 = por %p259, %p260
    %p263 = scmp.ne.s32.totalorder %s248, %s262
    %p264 = scmp.eq.s32.totalorder %s28, 0
    %p265 = por %p263, %p264
    %s267 = sadd.s32 %s266, 1
    %p270 = scmp.eq.s32.totalorder %s22, 1
    %p271 = scmp.ne.s32.totalorder %s266, %s268
    %p272 = scmp.eq.s32.totalorder %s22, 0
    %p273 = por %p271, %p272
    %p274 = scmp.ne.s32.totalorder %s266, %s268
    %p275 = scmp.eq.s32.totalorder %s27, 1
    %p276 = por %p274, %p275
    %p277 = scmp.ne.s32.totalorder %s268, %s269
    %p278 = scmp.eq.s32.totalorder %s27, 0
    %p279 = por %p277, %p278
    %p280 = scmp.ne.s32.totalorder %s268, %s269
    %p281 = scmp.eq.s32.totalorder %s28, 1
    %p282 = por %p280, %p281
    %p284 = scmp.ne.s32.totalorder %s269, %s283
    %p285 = scmp.eq.s32.totalorder %s28, 0
    %p286 = por %p284, %p285
    %s288 = sadd.s32 %s287, 1
    %p291 = scmp.eq.s32.totalorder %s22, 1
    %p292 = scmp.ne.s32.totalorder %s287, %s289
    %p293 = scmp.eq.s32.totalorder %s22, 0
    %p294 = por %p292, %p293
    %p295 = scmp.ne.s32.totalorder %s287, %s289
    %p296 = scmp.eq.s32.totalorder %s27, 1
    %p297 = por %p295, %p296
    %p298 = scmp.ne.s32.totalorder %s289, %s290
    %p299 = scmp.eq.s32.totalorder %s27, 0
    %p300 = por %p298, %p299
    %p301 = scmp.ne.s32.totalorder %s289, %s290
    %p302 = scmp.eq.s32.totalorder %s28, 1
    %p303 = por %p301, %p302
    %p305 = scmp.ne.s32.totalorder %s290, %s304
    %p306 = scmp.eq.s32.totalorder %s28, 0
    %p307 = por %p305, %p306
    %s309 = sadd.s32 %s308, 1
    %p312 = scmp.eq.s32.totalorder %s22, 1
    %p313 = scmp.ne.s32.totalorder %s308, %s310
    %p314 = scmp.eq.s32.totalorder %s22, 0
    %p315 = por %p313, %p314
    %p316 = scmp.ne.s32.totalorder %s308, %s310
    %p317 = scmp.eq.s32.totalorder %s27, 1
    %p318 = por %p316, %p317
    %p319 = scmp.ne.s32.totalorder %s310, %s311
    %p320 = scmp.eq.s32.totalorder %s27, 0
    %p321 = por %p319, %p320
    %p322 = scmp.ne.s32.totalorder %s310, %s311
    %p323 = scmp.eq.s32.totalorder %s28, 1
    %p324 = por %p322, %p323
    %p326 = scmp.ne.s32.totalorder %s311, %s325
    %p327 = scmp.eq.s32.totalorder %s28, 0
    %p328 = por %p326, %p327
    %s330 = sadd.s32 %s329, 1
    %p333 = scmp.eq.s32.totalorder %s22, 1
    %p334 = scmp.ne.s32.totalorder %s329, %s331
    %p335 = scmp.eq.s32.totalorder %s22, 0
    %p336 = por %p334, %p335
    %p337 = scmp.ne.s32.totalorder %s329, %s331
    %p338 = scmp.eq.s32.totalorder %s27, 1
    %p339 = por %p337, %p338
    %p340 = scmp.ne.s32.totalorder %s331, %s332
    %p341 = scmp.eq.s32.totalorder %s27, 0
    %p342 = por %p340, %p341
    %p343 = scmp.ne.s32.totalorder %s331, %s332
    %p344 = scmp.eq.s32.totalorder %s28, 1
    %p345 = por %p343, %p344
    %p347 = scmp.ne.s32.totalorder %s332, %s346
    %p348 = scmp.eq.s32.totalorder %s28, 0
    %p349 = por %p347, %p348
    %s351 = sadd.s32 %s350, 1
    %p354 = scmp.eq.s32.totalorder %s22, 1
    %p355 = scmp.ne.s32.totalorder %s350, %s352
    %p356 = scmp.eq.s32.totalorder %s22, 0
    %p357 = por %p355, %p356
    %p358 = scmp.ne.s32.totalorder %s350, %s352
    %p359 = scmp.eq.s32.totalorder %s27, 1
    %p360 = por %p358, %p359
    %p361 = scmp.ne.s32.totalorder %s352, %s353
    %p362 = scmp.eq.s32.totalorder %s27, 0
    %p363 = por %p361, %p362
    %p364 = scmp.ne.s32.totalorder %s352, %s353
    %p365 = scmp.eq.s32.totalorder %s28, 1
    %p366 = por %p364, %p365
    %p368 = scmp.ne.s32.totalorder %s353, %s367
    %p369 = scmp.eq.s32.totalorder %s28, 0
    %p370 = por %p368, %p369
    %s371 = ssub.s32 %s22, %s29
    %p372 = scmp.eq.s32.totalorder %s371, 0
    %s374 = sadd.s32 %s373, 1
    %s375 = scalar_select %p372, %s373, %s374
    %p378 = pneg %p372
    %p379 = scmp.eq.s32.totalorder %s22, 1
    %p380 = por %p378, %p379
    %p381 = scmp.ne.s32.totalorder %s373, %s376
    %p382 = scmp.eq.s32.totalorder %s22, 0
    %p383 = por %p381, %p382
    %p384 = scmp.ne.s32.totalorder %s373, %s376
    %p385 = scmp.eq.s32.totalorder %s27, 1
    %p386 = por %p384, %p385
    %p387 = scmp.ne.s32.totalorder %s376, %s377
    %p388 = scmp.eq.s32.totalorder %s27, 0
    %p389 = por %p387, %p388
    %p390 = scmp.ne.s32.totalorder %s376, %s377
    %p391 = scmp.eq.s32.totalorder %s28, 1
    %p392 = por %p390, %p391
    %p394 = scmp.ne.s32.totalorder %s377, %s393
    %p395 = scmp.eq.s32.totalorder %s28, 0
    %p396 = por %p394, %p395
    %p397 = scmp.le.s32.totalorder 1, %s22
    %p398 = scmp.lt.s32.totalorder %s22, 3
    %p399 = pnand %p397, %p398
    %p400 = pneg %p399
    // Predicated region
    $region9: #{visual_transformer_forward.5} parent=5 // pred_check
      _
    $region10: #{visual_transformer_forward.5} parent=5 // pred_check_branch
      %402 = sbr.rel (%p399) target = $region12
    $region11: #{visual_transformer_forward.5} parent=5 // pred_region
      %s403 = ssub.s32 %s22, 1
      // Predicated region
      $region13: #{visual_transformer_forward.5} parent=11 // pred_check
        %p404 = pneg %p69
      $region14: #{visual_transformer_forward.5} parent=11 // pred_check_branch
        %406 = sbr.rel (%p404) target = $region16
      $region15: #{visual_transformer_forward.5} parent=11 // pred_region
        _
      $region16: #{visual_transformer_forward.5} parent=11 // pred_fallthru
        _
      // Predicated region
      $region17: #{visual_transformer_forward.5} parent=11 // pred_check
        %p407 = pneg %p90
      $region18: #{visual_transformer_forward.5} parent=11 // pred_check_branch
        %409 = sbr.rel (%p407) target = $region20
      $region19: #{visual_transformer_forward.5} parent=11 // pred_region
        _
      $region20: #{visual_transformer_forward.5} parent=11 // pred_fallthru
        _
      // Predicated region
      $region21: #{visual_transformer_forward.5} parent=11 // pred_check
        %p410 = pneg %p111
      $region22: #{visual_transformer_forward.5} parent=11 // pred_check_branch
        %412 = sbr.rel (%p410) target = $region24
      $region23: #{visual_transformer_forward.5} parent=11 // pred_region
        _
      $region24: #{visual_transformer_forward.5} parent=11 // pred_fallthru
        _
      // Predicated region
      $region25: #{visual_transformer_forward.5} parent=11 // pred_check
        %p413 = pneg %p132
      $region26: #{visual_transformer_forward.5} parent=11 // pred_check_branch
        %415 = sbr.rel (%p413) target = $region28
      $region27: #{visual_transformer_forward.5} parent=11 // pred_region
        _
      $region28: #{visual_transformer_forward.5} parent=11 // pred_fallthru
        _
      // Predicated region
      $region29: #{visual_transformer_forward.5} parent=11 // pred_check
        %p416 = pneg %p153
      $region30: #{visual_transformer_forward.5} parent=11 // pred_check_branch
        %418 = sbr.rel (%p416) target = $region32
      $region31: #{visual_transformer_forward.5} parent=11 // pred_region
        _
      $region32: #{visual_transformer_forward.5} parent=11 // pred_fallthru
        _
      // Predicated region
      $region33: #{visual_transformer_forward.5} parent=11 // pred_check
        %p419 = pneg %p174
      $region34: #{visual_transformer_forward.5} parent=11 // pred_check_branch
        %421 = sbr.rel (%p419) target = $region36
      $region35: #{visual_transformer_forward.5} parent=11 // pred_region
        _
      $region36: #{visual_transformer_forward.5} parent=11 // pred_fallthru
        _
      // Predicated region
      $region37: #{visual_transformer_forward.5} parent=11 // pred_check
        %p422 = pneg %p195
      $region38: #{visual_transformer_forward.5} parent=11 // pred_check_branch
        %424 = sbr.rel (%p422) target = $region40
      $region39: #{visual_transformer_forward.5} parent=11 // pred_region
        _
      $region40: #{visual_transformer_forward.5} parent=11 // pred_fallthru
        _
      // Predicated region
      $region41: #{visual_transformer_forward.5} parent=11 // pred_check
        %p425 = pneg %p216
      $region42: #{visual_transformer_forward.5} parent=11 // pred_check_branch
        %427 = sbr.rel (%p425) target = $region44
      $region43: #{visual_transformer_forward.5} parent=11 // pred_region
        _
      $region44: #{visual_transformer_forward.5} parent=11 // pred_fallthru
        _
      // Predicated region
      $region45: #{visual_transformer_forward.5} parent=11 // pred_check
        %p428 = pneg %p237
      $region46: #{visual_transformer_forward.5} parent=11 // pred_check_branch
        %430 = sbr.rel (%p428) target = $region48
      $region47: #{visual_transformer_forward.5} parent=11 // pred_region
        _
      $region48: #{visual_transformer_forward.5} parent=11 // pred_fallthru
        _
      // Predicated region
      $region49: #{visual_transformer_forward.5} parent=11 // pred_check
        %p431 = pneg %p258
      $region50: #{visual_transformer_forward.5} parent=11 // pred_check_branch
        %433 = sbr.rel (%p431) target = $region52
      $region51: #{visual_transformer_forward.5} parent=11 // pred_region
        _
      $region52: #{visual_transformer_forward.5} parent=11 // pred_fallthru
        _
      // Predicated region
      $region53: #{visual_transformer_forward.5} parent=11 // pred_check
        %p434 = pneg %p279
      $region54: #{visual_transformer_forward.5} parent=11 // pred_check_branch
        %436 = sbr.rel (%p434) target = $region56
      $region55: #{visual_transformer_forward.5} parent=11 // pred_region
        _
      $region56: #{visual_transformer_forward.5} parent=11 // pred_fallthru
        _
      // Predicated region
      $region57: #{visual_transformer_forward.5} parent=11 // pred_check
        %p437 = pneg %p300
      $region58: #{visual_transformer_forward.5} parent=11 // pred_check_branch
        %439 = sbr.rel (%p437) target = $region60
      $region59: #{visual_transformer_forward.5} parent=11 // pred_region
        _
      $region60: #{visual_transformer_forward.5} parent=11 // pred_fallthru
        _
      // Predicated region
      $region61: #{visual_transformer_forward.5} parent=11 // pred_check
        %p440 = pneg %p321
      $region62: #{visual_transformer_forward.5} parent=11 // pred_check_branch
        %442 = sbr.rel (%p440) target = $region64
      $region63: #{visual_transformer_forward.5} parent=11 // pred_region
        _
      $region64: #{visual_transformer_forward.5} parent=11 // pred_fallthru
        _
      // Predicated region
      $region65: #{visual_transformer_forward.5} parent=11 // pred_check
        %p443 = pneg %p342
      $region66: #{visual_transformer_forward.5} parent=11 // pred_check_branch
        %445 = sbr.rel (%p443) target = $region68
      $region67: #{visual_transformer_forward.5} parent=11 // pred_region
        _
      $region68: #{visual_transformer_forward.5} parent=11 // pred_fallthru
        _
      // Predicated region
      $region69: #{visual_transformer_forward.5} parent=11 // pred_check
        %p446 = pneg %p363
      $region70: #{visual_transformer_forward.5} parent=11 // pred_check_branch
        %448 = sbr.rel (%p446) target = $region72
      $region71: #{visual_transformer_forward.5} parent=11 // pred_region
        _
      $region72: #{visual_transformer_forward.5} parent=11 // pred_fallthru
        _
    $region12: #{visual_transformer_forward.5} parent=5 // pred_fallthru
      _
    %p449 = scmp.lt.s32.totalorder %s22, 2
    // Predicated region
    $region73: #{visual_transformer_forward.5} parent=5 // pred_check
      %p450 = pneg %p449
    $region74: #{visual_transformer_forward.5} parent=5 // pred_check_branch
      %452 = sbr.rel (%p450) target = $region76
    $region75: #{visual_transformer_forward.5} parent=5 // pred_region
      // Predicated region
      $region77: #{visual_transformer_forward.5} parent=75 // pred_check
        %p453 = pneg %p42
      $region78: #{visual_transformer_forward.5} parent=75 // pred_check_branch
        %455 = sbr.rel (%p453) target = $region80
      $region79: #{visual_transformer_forward.5} parent=75 // pred_region
        %p456 = scmp.lt.s32.totalorder %s22, 1
        %s457 = scalar_select %p456, %s22, 1
        %s458 = smul.addr %s457, 8
        %s459 = scalar_lea.vmem %s0, %s458
      $region80: #{visual_transformer_forward.5} parent=75 // pred_fallthru
        _
    $region76: #{visual_transformer_forward.5} parent=5 // pred_fallthru
      _
    %p460 = scmp.le.s32.totalorder 1, %s22
    %p461 = scmp.lt.s32.totalorder %s22, 3
    %p462 = pnand %p460, %p461
    %p463 = pneg %p462
    // Predicated region
    $region81: #{visual_transformer_forward.5} parent=5 // pred_check
      _
    $region82: #{visual_transformer_forward.5} parent=5 // pred_check_branch
      %465 = sbr.rel (%p462) target = $region84
    $region83: #{visual_transformer_forward.5} parent=5 // pred_region
      %s466 = ssub.s32 %s22, 1
      %p467 = scmp.lt.s32.totalorder %s27, 1
      %s468 = scalar_select %p467, %s27, 1
      %s469 = smul.addr %s468, 8
      %s470 = scalar_lea.vmem %s0, %s469
      %p471 = pneg %p48
      %p472 = pneg %p45
      %p473 = pneg %p69
      %p474 = pneg %p66
      %p475 = pneg %p90
      %p476 = pneg %p87
      %p477 = pneg %p111
      %p478 = pneg %p108
      %p479 = pneg %p132
      %p480 = pneg %p129
      %p481 = pneg %p153
      %p482 = pneg %p150
      %p483 = pneg %p174
      %p484 = pneg %p171
      %p485 = pneg %p195
      %p486 = pneg %p192
      %p487 = pneg %p216
      %p488 = pneg %p213
      %p489 = pneg %p237
      %p490 = pneg %p234
      %p491 = pneg %p258
      %p492 = pneg %p255
      %p493 = pneg %p279
      %p494 = pneg %p276
      %p495 = pneg %p300
      %p496 = pneg %p297
      %p497 = pneg %p321
      %p498 = pneg %p318
      %p499 = pneg %p342
      %p500 = pneg %p339
      %p501 = pneg %p363
      %p502 = pneg %p360
      %p503 = pneg %p389
      %p504 = pneg %p386
      %p505 = scmp.lt.s32.totalorder %s27, 1
      %s506 = scalar_select %p505, %s27, 1
      %s507 = smul.addr %s506, 8
      %s508 = scalar_lea.vmem %s16, %s507
      %p509 = scmp.lt.s32.totalorder %s27, 1
      %s510 = scalar_select %p509, %s27, 1
      %s511 = smul.addr %s510, 8
      %s512 = scalar_lea.vmem %s0, %s511
      %p513 = scmp.lt.s32.totalorder %s27, 1
      %s514 = scalar_select %p513, %s27, 1
      %s515 = smul.addr %s514, 8
      %s516 = scalar_lea.vmem %s16, %s515
      %v518 = vld [vmem:[%s512] sm:$0x1f]
      %v519 = vld [vmem:[%s1] sm:$0x1f]
      %v520 = vadd.f32 %v518, %v519
      %v521 = vld [vmem:[%s2] sm:$0x1]
      %v522 = vld [vmem:[%s3] sm:$0x1]
      %vm523 = vcmask 258048
      %v524 = vsel %vm523, %v520, 0.0
      %525 = vadd.xlane.f32.xlu0 %v524
      %v526 = vpop.xlane.xlu0 %525
      %v527 = vrcp.pop 32.0
      %v528 = vmul.f32 32.0, %v527
      %v529 = vsub.f32 1.0, %v528
      %v530 = vmul.f32 %v527, %v529
      %v531 = vadd.f32 %v527, %v530
      %vm532 = vweird.f32 %v527
      %v533 = vsel %vm532, %v527, %v531
      %v534 = vmul.f32 %v526, %v533
      %v535 = vmul.f32 %v520, %v520
      %v536 = vsel %vm523, %v535, 0.0
      %537 = vadd.xlane.f32.xlu0 %v536
      %v538 = vpop.xlane.xlu0 %537
      %v539 = vmul.f32 %v538, %v533
      %v540 = vmul.f32 %v534, %v534
      %v541 = vsub.f32 %v539, %v540
      %v542 = vsub.f32 %v520, %v534
      %v543 = vadd.f32 %v541, 1e-05
      %v544 = vrsqrt.pop %v543
      %v545 = vmul.f32 %v544, %v543
      %v546 = vmul.f32 %v545, %v544
      %v547 = vmul.f32 0.5, %v546
      %v548 = vsub.f32 1.5, %v547
      %v549 = vmul.f32 %v544, %v548
      %vm550 = vweird.f32 %v543
      %vm551 = vweird.f32 %v544
      %vm552 = vmor %vm550, %vm551
      %v553 = vsel %vm552, %v544, %v549
      %v554 = vmul.f32 %v542, %v553
      %v556 = vperm.slane %v521, 0
      %v558 = vmul.f32 %v554, %v556
      %v560 = vperm.slane %v522, 0
      %v562 = vadd.f32 %v558, %v560
      %v563 = vld [vmem:[%s4] sm:$0x1]
      %v564 = vld [vmem:[%s5] sm:$0x1]
      %v565 = vld [vmem:[%s6] sm:$0xf]
      %v566 = vld [vmem:[%s6 + $0x4] sm:$0xf]
      %v567 = vld [vmem:[%s6 + $0x8] sm:$0xf]
      %v568 = vld [vmem:[%s6 + $0xc] sm:$0xf]
      %v569 = vld [vmem:[%s7] sm:$0x1]
      %v570 = vld [vmem:[%s8] sm:$0xf]
      %v571 = vld [vmem:[%s8 + $0x4] sm:$0xf]
      %v572 = vld [vmem:[%s8 + $0x8] sm:$0xf]
      %v573 = vld [vmem:[%s8 + $0xc] sm:$0xf]
      %v574 = vld [vmem:[%s9] sm:$0x1]
      %v575 = vsel %vm523, %v562, 0.0
      %576 = vadd.xlane.f32.xlu0 %v575
      %v577 = vpop.xlane.xlu0 %576
      %v578 = vmul.f32 %v577, %v533
      %v579 = vmul.f32 %v562, %v562
      %v580 = vsel %vm523, %v579, 0.0
      %581 = vadd.xlane.f32.xlu0 %v580
      %v582 = vpop.xlane.xlu0 %581
      %v583 = vmul.f32 %v582, %v533
      %v584 = vmul.f32 %v578, %v578
      %v585 = vsub.f32 %v583, %v584
      %v586 = vsub.f32 %v562, %v578
      %v587 = vadd.f32 %v585, 1e-05
      %v588 = vrsqrt.pop %v587
      %v589 = vmul.f32 %v588, %v587
      %v590 = vmul.f32 %v589, %v588
      %v591 = vmul.f32 0.5, %v590
      %v592 = vsub.f32 1.5, %v591
      %v593 = vmul.f32 %v588, %v592
      %vm594 = vweird.f32 %v587
      %vm595 = vweird.f32 %v588
      %vm596 = vmor %vm594, %vm595
      %v597 = vsel %vm596, %v588, %v593
      %v598 = vmul.f32 %v586, %v597
      %v600 = vperm.slane %v563, 0
      %v602 = vmul.f32 %v598, %v600
      %v604 = vperm.slane %v564, 0
      %v606 = vadd.f32 %v602, %v604
      %v607 = vpack.c.bf16 %v606, %v606
      %v609 = vperm.slane %v569, 0
      %v615 = vunpack.c.l.b16 %v565
      %v616 = vunpack.c.l.b16 %v566
      %v617 = vunpack.c.l.b16 %v567
      %v618 = vunpack.c.l.b16 %v568
      %v619 = vpack.c.b16 %v616, %v615
      %v620 = vpack.c.b16 %v618, %v617
      %vm623 = vcmask 261120
      %v625 = vsel %vm623, %v607, 0
      %627 = vmatpush.bf16.msra.mxu0 0
      %628 = vmatpush.bf16.msra.mxu0 0
      %629 = vmatpush.bf16.msra.mxu0 0
      %630 = vmatpush.bf16.msra.mxu0 0
      %631 = vmatpush.bf16.msra.mxu0 0
      %632 = vmatpush.bf16.msra.mxu0 0
      %633 = vmatpush.bf16.msra.mxu0 %v620
      %634 = vmatpush.bf16.msra.mxu0 %v619
      %635 = vmatmul.bf16.gmra.mxu0 %v625
      %v636 = vpop.f32.mrf.mxu0
      %v637 = vadd.f32 %v609, %v636
      %v638 = vpop.f32.mrf.mxu0
      %639 = vdwg.mxu0
      %v640 = vpack.c.bf16 %v637, %v637
      %642 = vrot.lane.b32.xlu0 %v640, 120
      %v643 = vpop.permute.xlu0 %642
      %644 = vrot.lane.b32.xlu0 %v640, 112
      %v645 = vpop.permute.xlu0 %644
      %646 = vrot.lane.b32.xlu0 %v640, 104
      %v647 = vpop.permute.xlu0 %646
      %v649 = vunpack.c.l.s4 1983009808
      %v650 = vunpack.c.0.s8 %v649
      %v651 = vperm.slane %v640, %v650
      %v654 = vunpack.c.l.s4 1983009808
      %v655 = vunpack.c.0.s8 %v654
      %v656 = vperm.slane %v645, %v655
      %v657 = vrot.slane %v656, 4
      %vm658 = vcmask 1047556
      %v659 = vsel %vm658, %v657, %v651
      %v660 = vrot.slane %v651, 4
      %v661 = vsel %vm658, %v656, %v660
      %v663 = vunpack.c.l.s4 1934713408
      %v664 = vunpack.c.0.s8 %v663
      %v665 = vperm.slane %v659, %v664
      %v666 = vrot.slane %v665, 4
      %v667 = vsel %vm658, 0, %v666
      %v669 = vunpack.c.l.s4 1934713408
      %v670 = vunpack.c.0.s8 %v669
      %v671 = vperm.slane %v661, %v670
      %v674 = vunpack.c.l.s4 1983009808
      %v675 = vunpack.c.0.s8 %v674
      %v676 = vperm.slane %v643, %v675
      %v679 = vunpack.c.l.s4 1983009808
      %v680 = vunpack.c.0.s8 %v679
      %v681 = vperm.slane %v647, %v680
      %v682 = vrot.slane %v681, 4
      %v683 = vsel %vm658, %v682, %v676
      %v684 = vrot.slane %v676, 4
      %v685 = vsel %vm658, %v681, %v684
      %v687 = vunpack.c.l.s4 1934713408
      %v688 = vunpack.c.0.s8 %v687
      %v689 = vperm.slane %v683, %v688
      %v690 = vrot.slane %v689, 4
      %v691 = vsel %vm658, 0, %v690
      %v693 = vunpack.c.l.s4 1934713408
      %v694 = vunpack.c.0.s8 %v693
      %v695 = vperm.slane %v685, %v694
      %v698 = vpack.i.b16 %v689, %v665
      %v700 = vshrl.u32 %v665, 16
      %v701 = vshrl.u32 %v689, 16
      %v702 = vpack.i.b16 %v701, %v700
      %v705 = vpack.i.b16 %v691, %v667
      %v706 = vshrl.u32 %v667, 16
      %v707 = vshrl.u32 %v691, 16
      %v708 = vpack.i.b16 %v707, %v706
      %v711 = vpack.i.b16 %v695, %v671
      %v713 = vrot.slane %v711, 4
      %v714 = vsel %vm658, %v713, %v698
      %v716 = vunpack.c.l.s4 1983009808
      %v717 = vunpack.c.0.s8 %v716
      %v718 = vperm.slane %v714, %v717
      %v720 = vrot.slane %v705, 4
      %v721 = vsel %vm658, %v720, %v718
      %v723 = vunpack.c.l.s4 1934713408
      %v724 = vunpack.c.0.s8 %v723
      %v725 = vperm.slane %v721, %v724
      %v726 = vrot.slane %v725, 4
      %v727 = vsel %vm658, 0, %v726
      %v730 = vrot.slane %v708, 4
      %v731 = vsel %vm658, %v730, %v702
      %v733 = vunpack.c.l.s4 1934713408
      %v734 = vunpack.c.0.s8 %v733
      %v735 = vperm.slane %v731, %v734
      %v736 = vrot.slane %v735, 4
      %v737 = vsel %vm658, 0, %v736
      %v740 = vpack.i.b16 %v735, %v725
      %v741 = vshrl.u32 %v725, 16
      %v742 = vshrl.u32 %v735, 16
      %v743 = vpack.i.b16 %v742, %v741
      %v746 = vpack.i.b16 %v737, %v727
      %v747 = vshrl.u32 %v727, 16
      %v748 = vshrl.u32 %v737, 16
      %v749 = vpack.i.b16 %v748, %v747
      %750 = vrot.lane.b32.xlu0 %v640, 96
      %v751 = vpop.permute.xlu0 %750
      %752 = vrot.lane.b32.xlu0 %v643, 96
      %v753 = vpop.permute.xlu0 %752
      %754 = vrot.lane.b32.xlu0 %v645, 96
      %v755 = vpop.permute.xlu0 %754
      %756 = vrot.lane.b32.xlu0 %v647, 96
      %v757 = vpop.permute.xlu0 %756
      %v760 = vunpack.c.l.s4 1983009808
      %v761 = vunpack.c.0.s8 %v760
      %v762 = vperm.slane %v751, %v761
      %v765 = vunpack.c.l.s4 1983009808
      %v766 = vunpack.c.0.s8 %v765
      %v767 = vperm.slane %v755, %v766
      %v768 = vrot.slane %v767, 4
      %v769 = vsel %vm658, %v768, %v762
      %v770 = vrot.slane %v762, 4
      %v771 = vsel %vm658, %v767, %v770
      %v773 = vunpack.c.l.s4 1934713408
      %v774 = vunpack.c.0.s8 %v773
      %v775 = vperm.slane %v769, %v774
      %v776 = vrot.slane %v775, 4
      %v777 = vsel %vm658, 0, %v776
      %v779 = vunpack.c.l.s4 1934713408
      %v780 = vunpack.c.0.s8 %v779
      %v781 = vperm.slane %v771, %v780
      %v784 = vunpack.c.l.s4 1983009808
      %v785 = vunpack.c.0.s8 %v784
      %v786 = vperm.slane %v753, %v785
      %v789 = vunpack.c.l.s4 1983009808
      %v790 = vunpack.c.0.s8 %v789
      %v791 = vperm.slane %v757, %v790
      %v792 = vrot.slane %v791, 4
      %v793 = vsel %vm658, %v792, %v786
      %v794 = vrot.slane %v786, 4
      %v795 = vsel %vm658, %v791, %v794
      %v797 = vunpack.c.l.s4 1934713408
      %v798 = vunpack.c.0.s8 %v797
      %v799 = vperm.slane %v793, %v798
      %v800 = vrot.slane %v799, 4
      %v801 = vsel %vm658, 0, %v800
      %v803 = vunpack.c.l.s4 1934713408
      %v804 = vunpack.c.0.s8 %v803
      %v805 = vperm.slane %v795, %v804
      %v808 = vpack.i.b16 %v799, %v775
      %v810 = vshrl.u32 %v775, 16
      %v811 = vshrl.u32 %v799, 16
      %v812 = vpack.i.b16 %v811, %v810
      %v815 = vpack.i.b16 %v801, %v777
      %v816 = vshrl.u32 %v777, 16
      %v817 = vshrl.u32 %v801, 16
      %v818 = vpack.i.b16 %v817, %v816
      %v821 = vpack.i.b16 %v805, %v781
      %v823 = vrot.slane %v821, 4
      %v824 = vsel %vm658, %v823, %v808
      %v826 = vunpack.c.l.s4 1983009808
      %v827 = vunpack.c.0.s8 %v826
      %v828 = vperm.slane %v824, %v827
      %v830 = vrot.slane %v815, 4
      %v831 = vsel %vm658, %v830, %v828
      %v833 = vunpack.c.l.s4 1934713408
      %v834 = vunpack.c.0.s8 %v833
      %v835 = vperm.slane %v831, %v834
      %v836 = vrot.slane %v835, 4
      %v837 = vsel %vm658, 0, %v836
      %v840 = vrot.slane %v818, 4
      %v841 = vsel %vm658, %v840, %v812
      %v843 = vunpack.c.l.s4 1934713408
      %v844 = vunpack.c.0.s8 %v843
      %v845 = vperm.slane %v841, %v844
      %v846 = vrot.slane %v845, 4
      %v847 = vsel %vm658, 0, %v846
      %v850 = vpack.i.b16 %v845, %v835
      %v851 = vshrl.u32 %v835, 16
      %v852 = vshrl.u32 %v845, 16
      %v853 = vpack.i.b16 %v852, %v851
      %v856 = vpack.i.b16 %v847, %v837
      %v857 = vshrl.u32 %v837, 16
      %v858 = vshrl.u32 %v847, 16
      %v859 = vpack.i.b16 %v858, %v857
      %860 = vrot.lane.b32.xlu0 %v640, 64
      %v861 = vpop.permute.xlu0 %860
      %862 = vrot.lane.b32.xlu0 %v643, 64
      %v863 = vpop.permute.xlu0 %862
      %864 = vrot.lane.b32.xlu0 %v645, 64
      %v865 = vpop.permute.xlu0 %864
      %866 = vrot.lane.b32.xlu0 %v647, 64
      %v867 = vpop.permute.xlu0 %866
      %v870 = vunpack.c.l.s4 1983009808
      %v871 = vunpack.c.0.s8 %v870
      %v872 = vperm.slane %v861, %v871
      %v875 = vunpack.c.l.s4 1983009808
      %v876 = vunpack.c.0.s8 %v875
      %v877 = vperm.slane %v865, %v876
      %v878 = vrot.slane %v877, 4
      %v879 = vsel %vm658, %v878, %v872
      %v880 = vrot.slane %v872, 4
      %v881 = vsel %vm658, %v877, %v880
      %v883 = vunpack.c.l.s4 1934713408
      %v884 = vunpack.c.0.s8 %v883
      %v885 = vperm.slane %v879, %v884
      %v886 = vrot.slane %v885, 4
      %v887 = vsel %vm658, 0, %v886
      %v889 = vunpack.c.l.s4 1934713408
      %v890 = vunpack.c.0.s8 %v889
      %v891 = vperm.slane %v881, %v890
      %v894 = vunpack.c.l.s4 1983009808
      %v895 = vunpack.c.0.s8 %v894
      %v896 = vperm.slane %v863, %v895
      %v899 = vunpack.c.l.s4 1983009808
      %v900 = vunpack.c.0.s8 %v899
      %v901 = vperm.slane %v867, %v900
      %v902 = vrot.slane %v901, 4
      %v903 = vsel %vm658, %v902, %v896
      %v904 = vrot.slane %v896, 4
      %v905 = vsel %vm658, %v901, %v904
      %v907 = vunpack.c.l.s4 1934713408
      %v908 = vunpack.c.0.s8 %v907
      %v909 = vperm.slane %v903, %v908
      %v910 = vrot.slane %v909, 4
      %v911 = vsel %vm658, 0, %v910
      %v913 = vunpack.c.l.s4 1934713408
      %v914 = vunpack.c.0.s8 %v913
      %v915 = vperm.slane %v905, %v914
      %v918 = vpack.i.b16 %v909, %v885
      %v920 = vshrl.u32 %v885, 16
      %v921 = vshrl.u32 %v909, 16
      %v922 = vpack.i.b16 %v921, %v920
      %v925 = vpack.i.b16 %v911, %v887
      %v926 = vshrl.u32 %v887, 16
      %v927 = vshrl.u32 %v911, 16
      %v928 = vpack.i.b16 %v927, %v926
      %v931 = vpack.i.b16 %v915, %v891
      %v933 = vrot.slane %v931, 4
      %v934 = vsel %vm658, %v933, %v918
      %v936 = vunpack.c.l.s4 1983009808
      %v937 = vunpack.c.0.s8 %v936
      %v938 = vperm.slane %v934, %v937
      %v940 = vrot.slane %v925, 4
      %v941 = vsel %vm658, %v940, %v938
      %v943 = vunpack.c.l.s4 1934713408
      %v944 = vunpack.c.0.s8 %v943
      %v945 = vperm.slane %v941, %v944
      %v946 = vrot.slane %v945, 4
      %v947 = vsel %vm658, 0, %v946
      %v950 = vrot.slane %v928, 4
      %v951 = vsel %vm658, %v950, %v922
      %v953 = vunpack.c.l.s4 1934713408
      %v954 = vunpack.c.0.s8 %v953
      %v955 = vperm.slane %v951, %v954
      %v956 = vrot.slane %v955, 4
      %v957 = vsel %vm658, 0, %v956
      %v960 = vpack.i.b16 %v955, %v945
      %v961 = vshrl.u32 %v945, 16
      %v962 = vshrl.u32 %v955, 16
      %v963 = vpack.i.b16 %v962, %v961
      %v966 = vpack.i.b16 %v957, %v947
      %v967 = vshrl.u32 %v947, 16
      %v968 = vshrl.u32 %v957, 16
      %v969 = vpack.i.b16 %v968, %v967
      %vm970 = vcmask 64512
      %v972 = vsel %vm970, %v740, 0
      %v975 = vsel %vm970, %v850, 0
      %977 = vmatpush.bf16.xpose.msra.mxu0 0
      %978 = vmatpush.bf16.xpose.msra.mxu0 0
      %979 = vmatpush.bf16.xpose.msra.mxu0 0
      %980 = vmatpush.bf16.xpose.msra.mxu0 0
      %981 = vmatpush.bf16.xpose.msra.mxu0 0
      %982 = vmatpush.bf16.xpose.msra.mxu0 0
      %983 = vmatpush.bf16.xpose.msra.mxu0 0
      %984 = vmatpush.bf16.xpose.msra.mxu0 %v975
      %985 = vmatmul.bf16.gmra.mxu0 %v972
      %v986 = vpop.f32.mrf.mxu0
      %v987 = vadd.f32 0.0, %v986
      %v988 = vpop.f32.mrf.mxu0
      %989 = vdwg.mxu0
      %v991 = vsel %vm970, %v743, 0
      %v994 = vsel %vm970, %v853, 0
      %996 = vmatpush.bf16.xpose.msra.mxu0 0
      %997 = vmatpush.bf16.xpose.msra.mxu0 0
      %998 = vmatpush.bf16.xpose.msra.mxu0 0
      %999 = vmatpush.bf16.xpose.msra.mxu0 0
      %1000 = vmatpush.bf16.xpose.msra.mxu0 0
      %1001 = vmatpush.bf16.xpose.msra.mxu0 0
      %1002 = vmatpush.bf16.xpose.msra.mxu0 0
      %1003 = vmatpush.bf16.xpose.msra.mxu0 %v994
      %1004 = vmatmul.bf16.gmra.mxu0 %v991
      %v1005 = vpop.f32.mrf.mxu0
      %v1006 = vadd.f32 0.0, %v1005
      %v1007 = vpop.f32.mrf.mxu0
      %1008 = vdwg.mxu0
      %v1010 = vsel %vm970, %v746, 0
      %v1013 = vsel %vm970, %v856, 0
      %1015 = vmatpush.bf16.xpose.msra.mxu0 0
      %1016 = vmatpush.bf16.xpose.msra.mxu0 0
      %1017 = vmatpush.bf16.xpose.msra.mxu0 0
      %1018 = vmatpush.bf16.xpose.msra.mxu0 0
      %1019 = vmatpush.bf16.xpose.msra.mxu0 0
      %1020 = vmatpush.bf16.xpose.msra.mxu0 0
      %1021 = vmatpush.bf16.xpose.msra.mxu0 0
      %1022 = vmatpush.bf16.xpose.msra.mxu0 %v1013
      %1023 = vmatmul.bf16.gmra.mxu0 %v1010
      %v1024 = vpop.f32.mrf.mxu0
      %v1025 = vadd.f32 0.0, %v1024
      %v1026 = vpop.f32.mrf.mxu0
      %1027 = vdwg.mxu0
      %v1029 = vsel %vm970, %v749, 0
      %v1032 = vsel %vm970, %v859, 0
      %1034 = vmatpush.bf16.xpose.msra.mxu0 0
      %1035 = vmatpush.bf16.xpose.msra.mxu0 0
      %1036 = vmatpush.bf16.xpose.msra.mxu0 0
      %1037 = vmatpush.bf16.xpose.msra.mxu0 0
      %1038 = vmatpush.bf16.xpose.msra.mxu0 0
      %1039 = vmatpush.bf16.xpose.msra.mxu0 0
      %1040 = vmatpush.bf16.xpose.msra.mxu0 0
      %1041 = vmatpush.bf16.xpose.msra.mxu0 %v1032
      %1042 = vmatmul.bf16.gmra.mxu0 %v1029
      %v1043 = vpop.f32.mrf.mxu0
      %v1044 = vadd.f32 0.0, %v1043
      %v1045 = vpop.f32.mrf.mxu0
      %1046 = vdwg.mxu0
      %vm1047 = vcmask 36864
      %v1048 = vsel %vm1047, %v987, -inf
      %1049 = vmax.xlane.f32.xlu0 %v1048
      %v1050 = vpop.xlane.xlu0 %1049
      %v1051 = vsel %vm1047, %v1006, -inf
      %1052 = vmax.xlane.f32.xlu0 %v1051
      %v1053 = vpop.xlane.xlu0 %1052
      %v1054 = vsel %vm1047, %v1025, -inf
      %1055 = vmax.xlane.f32.xlu0 %v1054
      %v1056 = vpop.xlane.xlu0 %1055
      %v1057 = vsel %vm1047, %v1044, -inf
      %1058 = vmax.xlane.f32.xlu0 %v1057
      %v1059 = vpop.xlane.xlu0 %1058
      %v1060 = vsub.f32 %v987, %v1050
      %v1061 = vsub.f32 %v1006, %v1053
      %v1062 = vsub.f32 %v1025, %v1056
      %v1063 = vsub.f32 %v1044, %v1059
      %v1064 = vmul.f32 %v1060, 1.442695
      %v1065 = vpow.pop %v1064
      %v1066 = vmul.f32 %v1061, 1.442695
      %v1067 = vpow.pop %v1066
      %v1068 = vmul.f32 %v1062, 1.442695
      %v1069 = vpow.pop %v1068
      %v1070 = vmul.f32 %v1063, 1.442695
      %v1071 = vpow.pop %v1070
      %v1072 = vsel %vm1047, %v1065, 0.0
      %1073 = vadd.xlane.f32.xlu0 %v1072
      %v1074 = vpop.xlane.xlu0 %1073
      %v1075 = vsel %vm1047, %v1067, 0.0
      %1076 = vadd.xlane.f32.xlu0 %v1075
      %v1077 = vpop.xlane.xlu0 %1076
      %v1078 = vsel %vm1047, %v1069, 0.0
      %1079 = vadd.xlane.f32.xlu0 %v1078
      %v1080 = vpop.xlane.xlu0 %1079
      %v1081 = vsel %vm1047, %v1071, 0.0
      %1082 = vadd.xlane.f32.xlu0 %v1081
      %v1083 = vpop.xlane.xlu0 %1082
      %v1084 = vrcp.pop %v1074
      %v1085 = vrcp.pop %v1077
      %v1086 = vrcp.pop %v1080
      %v1087 = vrcp.pop %v1083
      %v1088 = vmul.f32 %v1065, %v1084
      %v1089 = vmul.f32 %v1067, %v1085
      %v1090 = vmul.f32 %v1069, %v1086
      %v1091 = vmul.f32 %v1071, %v1087
      %v1092 = vpack.c.bf16 %v1088, %v1088
      %v1093 = vpack.c.bf16 %v1089, %v1089
      %v1094 = vpack.c.bf16 %v1090, %v1090
      %v1095 = vpack.c.bf16 %v1091, %v1091
      %vm1096 = vcmask 39936
      %v1098 = vsel %vm1096, %v1092, 0
      %vm1100 = vcmask 1041408
      %vm1101 = vcmask 1042432
      %v1102 = vsel %vm1100, 4294967295, 65535
      %v1103 = vsel %vm1101, %v1102, 0
      %v1105 = vand.u32 %v960, %v1103
      %1107 = vmatpush.bf16.msra.mxu0 0
      %1108 = vmatpush.bf16.msra.mxu0 0
      %1109 = vmatpush.bf16.msra.mxu0 0
      %1110 = vmatpush.bf16.msra.mxu0 0
      %1111 = vmatpush.bf16.msra.mxu0 0
      %1112 = vmatpush.bf16.msra.mxu0 0
      %1113 = vmatpush.bf16.msra.mxu0 0
      %1114 = vmatpush.bf16.msra.mxu0 %v1105
      %1115 = vmatmul.bf16.gmra.mxu0 %v1098
      %v1116 = vpop.f32.mrf.mxu0
      %v1117 = vadd.f32 0.0, %v1116
      %v1118 = vpop.f32.mrf.mxu0
      %1119 = vdwg.mxu0
      %v1121 = vsel %vm1096, %v1093, 0
      %v1124 = vand.u32 %v963, %v1103
      %1126 = vmatpush.bf16.msra.mxu0 0
      %1127 = vmatpush.bf16.msra.mxu0 0
      %1128 = vmatpush.bf16.msra.mxu0 0
      %1129 = vmatpush.bf16.msra.mxu0 0
      %1130 = vmatpush.bf16.msra.mxu0 0
      %1131 = vmatpush.bf16.msra.mxu0 0
      %1132 = vmatpush.bf16.msra.mxu0 0
      %1133 = vmatpush.bf16.msra.mxu0 %v1124
      %1134 = vmatmul.bf16.gmra.mxu0 %v1121
      %v1135 = vpop.f32.mrf.mxu0
      %v1136 = vadd.f32 0.0, %v1135
      %v1137 = vpop.f32.mrf.mxu0
      %1138 = vdwg.mxu0
      %v1140 = vsel %vm1096, %v1094, 0
      %v1143 = vand.u32 %v966, %v1103
      %1145 = vmatpush.bf16.msra.mxu0 0
      %1146 = vmatpush.bf16.msra.mxu0 0
      %1147 = vmatpush.bf16.msra.mxu0 0
      %1148 = vmatpush.bf16.msra.mxu0 0
      %1149 = vmatpush.bf16.msra.mxu0 0
      %1150 = vmatpush.bf16.msra.mxu0 0
      %1151 = vmatpush.bf16.msra.mxu0 0
      %1152 = vmatpush.bf16.msra.mxu0 %v1143
      %1153 = vmatmul.bf16.gmra.mxu0 %v1140
      %v1154 = vpop.f32.mrf.mxu0
      %v1155 = vadd.f32 0.0, %v1154
      %v1156 = vpop.f32.mrf.mxu0
      %1157 = vdwg.mxu0
      %v1159 = vsel %vm1096, %v1095, 0
      %v1162 = vand.u32 %v969, %v1103
      %1164 = vmatpush.bf16.msra.mxu0 0
      %1165 = vmatpush.bf16.msra.mxu0 0
      %1166 = vmatpush.bf16.msra.mxu0 0
      %1167 = vmatpush.bf16.msra.mxu0 0
      %1168 = vmatpush.bf16.msra.mxu0 0
      %1169 = vmatpush.bf16.msra.mxu0 0
      %1170 = vmatpush.bf16.msra.mxu0 0
      %1171 = vmatpush.bf16.msra.mxu0 %v1162
      %1172 = vmatmul.bf16.gmra.mxu0 %v1159
      %v1173 = vpop.f32.mrf.mxu0
      %v1174 = vadd.f32 0.0, %v1173
      %v1175 = vpop.f32.mrf.mxu0
      %1176 = vdwg.mxu0
      %v1177 = vpack.c.bf16 %v1117, %v1117
      %v1179 = vunpack.c.l.s4 1983009808
      %v1180 = vunpack.c.0.s8 %v1179
      %v1181 = vperm.slane %v1177, %v1180
      %v1182 = vpack.c.bf16 %v1155, %v1155
      %v1184 = vunpack.c.l.s4 1983009808
      %v1185 = vunpack.c.0.s8 %v1184
      %v1186 = vperm.slane %v1182, %v1185
      %v1187 = vrot.slane %v1186, 4
      %v1188 = vsel %vm658, %v1187, %v1181
      %v1189 = vrot.slane %v1181, 4
      %v1190 = vsel %vm658, %v1186, %v1189
      %v1192 = vunpack.c.l.s4 1934713408
      %v1193 = vunpack.c.0.s8 %v1192
      %v1194 = vperm.slane %v1188, %v1193
      %v1195 = vrot.slane %v1194, 4
      %v1196 = vsel %vm658, 0, %v1195
      %v1198 = vunpack.c.l.s4 1934713408
      %v1199 = vunpack.c.0.s8 %v1198
      %v1200 = vperm.slane %v1190, %v1199
      %v1201 = vpack.c.bf16 %v1136, %v1136
      %v1203 = vunpack.c.l.s4 1983009808
      %v1204 = vunpack.c.0.s8 %v1203
      %v1205 = vperm.slane %v1201, %v1204
      %v1206 = vpack.c.bf16 %v1174, %v1174
      %v1208 = vunpack.c.l.s4 1983009808
      %v1209 = vunpack.c.0.s8 %v1208
      %v1210 = vperm.slane %v1206, %v1209
      %v1211 = vrot.slane %v1210, 4
      %v1212 = vsel %vm658, %v1211, %v1205
      %v1213 = vrot.slane %v1205, 4
      %v1214 = vsel %vm658, %v1210, %v1213
      %v1216 = vunpack.c.l.s4 1934713408
      %v1217 = vunpack.c.0.s8 %v1216
      %v1218 = vperm.slane %v1212, %v1217
      %v1219 = vrot.slane %v1218, 4
      %v1220 = vsel %vm658, 0, %v1219
      %v1222 = vunpack.c.l.s4 1934713408
      %v1223 = vunpack.c.0.s8 %v1222
      %v1224 = vperm.slane %v1214, %v1223
      %v1227 = vpack.i.b16 %v1218, %v1194
      %v1229 = vshrl.u32 %v1194, 16
      %v1230 = vshrl.u32 %v1218, 16
      %v1231 = vpack.i.b16 %v1230, %v1229
      %v1234 = vpack.i.b16 %v1220, %v1196
      %v1235 = vshrl.u32 %v1196, 16
      %v1236 = vshrl.u32 %v1220, 16
      %v1237 = vpack.i.b16 %v1236, %v1235
      %v1240 = vpack.i.b16 %v1224, %v1200
      %v1242 = vrot.slane %v1240, 4
      %v1243 = vsel %vm658, %v1242, %v1227
      %v1245 = vunpack.c.l.s4 1983009808
      %v1246 = vunpack.c.0.s8 %v1245
      %v1247 = vperm.slane %v1243, %v1246
      %v1249 = vrot.slane %v1234, 4
      %v1250 = vsel %vm658, %v1249, %v1247
      %v1252 = vunpack.c.l.s4 1934713408
      %v1253 = vunpack.c.0.s8 %v1252
      %v1254 = vperm.slane %v1250, %v1253
      %v1255 = vrot.slane %v1254, 4
      %v1256 = vsel %vm658, 0, %v1255
      %v1259 = vrot.slane %v1237, 4
      %v1260 = vsel %vm658, %v1259, %v1231
      %v1262 = vunpack.c.l.s4 1934713408
      %v1263 = vunpack.c.0.s8 %v1262
      %v1264 = vperm.slane %v1260, %v1263
      %v1265 = vrot.slane %v1264, 4
      %v1266 = vsel %vm658, 0, %v1265
      %v1269 = vpack.i.b16 %v1264, %v1254
      %v1270 = vshrl.u32 %v1254, 16
      %v1271 = vshrl.u32 %v1264, 16
      %v1272 = vpack.i.b16 %v1271, %v1270
      %v1275 = vpack.i.b16 %v1266, %v1256
      %v1276 = vshrl.u32 %v1256, 16
      %v1277 = vshrl.u32 %v1266, 16
      %v1278 = vpack.i.b16 %v1277, %v1276
      %v1279 = vunpack.c.l.b16 %v1272
      %v1280 = vpack.c.b16 %v1279, %v1279
      %1281 = vrot.lane.b32.xlu0 %v1280, 8
      %v1282 = vpop.permute.xlu0 %1281
      %v1283 = vunpack.c.l.b16 %v1275
      %v1284 = vpack.c.b16 %v1283, %v1283
      %1285 = vrot.lane.b32.xlu0 %v1284, 16
      %v1286 = vpop.permute.xlu0 %1285
      %v1287 = vunpack.c.l.b16 %v1278
      %v1288 = vpack.c.b16 %v1287, %v1287
      %1289 = vrot.lane.b32.xlu0 %v1288, 24
      %v1290 = vpop.permute.xlu0 %1289
      %v1293 = vsel %vm970, %v1269, %v1282
      %vm1294 = vcmask 130048
      %v1296 = vsel %vm1294, %v1293, %v1286
      %vm1297 = vcmask 195584
      %v1299 = vsel %vm1297, %v1296, %v1290
      %v1301 = vperm.slane %v574, 0
      %v1307 = vunpack.c.l.b16 %v570
      %v1308 = vunpack.c.l.b16 %v571
      %v1309 = vunpack.c.l.b16 %v572
      %v1310 = vunpack.c.l.b16 %v573
      %v1311 = vpack.c.b16 %v1308, %v1307
      %v1312 = vpack.c.b16 %v1310, %v1309
      %v1315 = vsel %vm623, %v1299, 0
      %1317 = vmatpush.bf16.msra.mxu0 0
      %1318 = vmatpush.bf16.msra.mxu0 0
      %1319 = vmatpush.bf16.msra.mxu0 0
      %1320 = vmatpush.bf16.msra.mxu0 0
      %1321 = vmatpush.bf16.msra.mxu0 0
      %1322 = vmatpush.bf16.msra.mxu0 0
      %1323 = vmatpush.bf16.msra.mxu0 %v1312
      %1324 = vmatpush.bf16.msra.mxu0 %v1311
      %1325 = vmatmul.bf16.gmra.mxu0 %v1315
      %v1326 = vpop.f32.mrf.mxu0
      %v1327 = vadd.f32 %v1301, %v1326
      %v1328 = vpop.f32.mrf.mxu0
      %1329 = vdwg.mxu0
      %v1330 = vadd.f32 %v562, %v1327
      %v1331 = vld [vmem:[%s10] sm:$0x1]
      %v1332 = vld [vmem:[%s11] sm:$0x1]
      %v1333 = vld [vmem:[%s12] sm:$0xf]
      %v1334 = vld [vmem:[%s12 + $0x4] sm:$0xf]
      %v1335 = vld [vmem:[%s12 + $0x8] sm:$0xf]
      %v1336 = vld [vmem:[%s12 + $0xc] sm:$0xf]
      %v1337 = vld [vmem:[%s13] sm:$0x1]
      %v1338 = vld [vmem:[%s14] sm:$0xf]
      %v1339 = vld [vmem:[%s14 + $0x4] sm:$0xf]
      %v1340 = vld [vmem:[%s14 + $0x8] sm:$0xf]
      %v1341 = vld [vmem:[%s14 + $0xc] sm:$0xf]
      %v1342 = vld [vmem:[%s14 + $0x10] sm:$0xf]
      %v1343 = vld [vmem:[%s14 + $0x14] sm:$0xf]
      %v1344 = vld [vmem:[%s14 + $0x18] sm:$0xf]
      %v1345 = vld [vmem:[%s14 + $0x1c] sm:$0xf]
      %v1346 = vld [vmem:[%s14 + $0x20] sm:$0xf]
      %v1347 = vld [vmem:[%s14 + $0x24] sm:$0xf]
      %v1348 = vld [vmem:[%s14 + $0x28] sm:$0xf]
      %v1349 = vld [vmem:[%s14 + $0x2c] sm:$0xf]
      %v1350 = vld [vmem:[%s14 + $0x30] sm:$0xf]
      %v1351 = vld [vmem:[%s14 + $0x34] sm:$0xf]
      %v1352 = vld [vmem:[%s14 + $0x38] sm:$0xf]
      %v1353 = vld [vmem:[%s14 + $0x3c] sm:$0xf]
      %v1354 = vld [vmem:[%s15] sm:$0x1]
      %v1355 = vsel %vm523, %v1330, 0.0
      %1356 = vadd.xlane.f32.xlu0 %v1355
      %v1357 = vpop.xlane.xlu0 %1356
      %v1358 = vmul.f32 %v1357, %v533
      %v1359 = vmul.f32 %v1330, %v1330
      %v1360 = vsel %vm523, %v1359, 0.0
      %1361 = vadd.xlane.f32.xlu0 %v1360
      %v1362 = vpop.xlane.xlu0 %1361
      %v1363 = vmul.f32 %v1362, %v533
      %v1364 = vmul.f32 %v1358, %v1358
      %v1365 = vsub.f32 %v1363, %v1364
      %v1366 = vsub.f32 %v1330, %v1358
      %v1367 = vadd.f32 %v1365, 1e-05
      %v1368 = vrsqrt.pop %v1367
      %v1369 = vmul.f32 %v1368, %v1367
      %v1370 = vmul.f32 %v1369, %v1368
      %v1371 = vmul.f32 0.5, %v1370
      %v1372 = vsub.f32 1.5, %v1371
      %v1373 = vmul.f32 %v1368, %v1372
      %vm1374 = vweird.f32 %v1367
      %vm1375 = vweird.f32 %v1368
      %vm1376 = vmor %vm1374, %vm1375
      %v1377 = vsel %vm1376, %v1368, %v1373
      %v1378 = vmul.f32 %v1366, %v1377
      %v1380 = vperm.slane %v1331, 0
      %v1382 = vmul.f32 %v1378, %v1380
      %v1384 = vperm.slane %v1332, 0
      %v1386 = vadd.f32 %v1382, %v1384
      %v1387 = vpack.c.bf16 %v1386, %v1386
      %v1389 = vperm.slane %v1337, 0
      %v1395 = vunpack.c.l.b16 %v1333
      %v1396 = vunpack.c.l.b16 %v1334
      %v1397 = vunpack.c.l.b16 %v1335
      %v1398 = vunpack.c.l.b16 %v1336
      %v1399 = vpack.c.b16 %v1396, %v1395
      %v1400 = vpack.c.b16 %v1398, %v1397
      %v1404 = vsel %vm623, %v1387, 0
      %1406 = vmatpush.bf16.msra.mxu0 0
      %1407 = vmatpush.bf16.msra.mxu0 0
      %1408 = vmatpush.bf16.msra.mxu0 0
      %1409 = vmatpush.bf16.msra.mxu0 0
      %1410 = vmatpush.bf16.msra.mxu0 0
      %1411 = vmatpush.bf16.msra.mxu0 0
      %1412 = vmatpush.bf16.msra.mxu0 %v1400
      %1413 = vmatpush.bf16.msra.mxu0 %v1399
      %1414 = vmatmul.bf16.gmra.mxu0 %v1404
      %v1415 = vpop.f32.mrf.mxu0
      %v1416 = vadd.f32 %v1389, %v1415
      %v1417 = vpop.f32.mrf.mxu0
      %1418 = vdwg.mxu0
      %v1419 = vmul.f32 %v1416, 0.5
      %v1420 = vmul.f32 %v1416, 0.70710677
      %v1421 = vmul.f32 %v1420, %v1420
      %v1422 = vmin.f32 16.0, %v1421
      %v1423 = vmul.f32 %v1422, 2.1237322e-06
      %v1424 = vadd.f32 %v1423, 0.00028619796
      %v1425 = vmul.f32 %v1422, %v1424
      %v1426 = vadd.f32 %v1425, 0.0036580483
      %v1427 = vmul.f32 %v1422, %v1426
      %v1428 = vadd.f32 %v1427, 0.05243302
      %v1429 = vmul.f32 %v1422, %v1428
      %v1430 = vadd.f32 %v1429, 0.18741608
      %v1431 = vmul.f32 %v1422, %v1430
      %v1432 = vadd.f32 %v1431, 1.1283791
      %v1433 = vmul.f32 %v1420, %v1432
      %v1434 = vmul.f32 %v1422, 3.8918573e-05
      %v1435 = vadd.f32 %v1434, 0.001143296
      %v1436 = vmul.f32 %v1422, %v1435
      %v1437 = vadd.f32 %v1436, 0.014752088
      %v1438 = vmul.f32 %v1422, %v1437
      %v1439 = vadd.f32 %v1438, 0.112945676
      %v1440 = vmul.f32 %v1422, %v1439
      %v1441 = vadd.f32 %v1440, 0.4994258
      %v1442 = vmul.f32 %v1422, %v1441
      %v1443 = vadd.f32 %v1442, 1.0
      %v1444 = vrcp.pop %v1443
      %v1445 = vmul.f32 %v1443, %v1444
      %v1446 = vsub.f32 1.0, %v1445
      %v1447 = vmul.f32 %v1444, %v1446
      %v1448 = vadd.f32 %v1444, %v1447
      %vm1449 = vweird.f32 %v1443
      %vm1450 = vweird.f32 %v1444
      %vm1451 = vmor %vm1449, %vm1450
      %v1452 = vsel %vm1451, %v1444, %v1448
      %v1453 = vand.u32 2147483647, %v1443
      %vm1454 = vcmp.eq.f32.partialorder %v1453, 8.507059e+37
      %v1455 = vand.u32 %v1443, 2147483648
      %v1456 = vor.u32 1.1754944e-38, %v1455
      %v1457 = vsel %vm1454, %v1456, %v1452
      %v1458 = vmul.f32 %v1433, %v1457
      %v1459 = vmin.f32 %v1458, 1.0
      %v1460 = vmax.f32 %v1459, -1.0
      %v1461 = vadd.f32 %v1460, 1.0
      %v1462 = vmul.f32 %v1419, %v1461
      %v1463 = vpack.c.bf16 %v1462, %v1462
      %v1465 = vperm.slane %v1354, 0
      %v1483 = vunpack.c.l.b16 %v1338
      %v1484 = vunpack.c.l.b16 %v1339
      %v1485 = vunpack.c.l.b16 %v1340
      %v1486 = vunpack.c.l.b16 %v1341
      %v1487 = vunpack.c.l.b16 %v1342
      %v1488 = vunpack.c.l.b16 %v1343
      %v1489 = vunpack.c.l.b16 %v1344
      %v1490 = vunpack.c.l.b16 %v1345
      %v1491 = vunpack.c.l.b16 %v1346
      %v1492 = vunpack.c.l.b16 %v1347
      %v1493 = vunpack.c.l.b16 %v1348
      %v1494 = vunpack.c.l.b16 %v1349
      %v1495 = vunpack.c.l.b16 %v1350
      %v1496 = vunpack.c.l.b16 %v1351
      %v1497 = vunpack.c.l.b16 %v1352
      %v1498 = vunpack.c.l.b16 %v1353
      %v1499 = vpack.c.b16 %v1484, %v1483
      %v1500 = vpack.c.b16 %v1486, %v1485
      %v1501 = vpack.c.b16 %v1488, %v1487
      %v1502 = vpack.c.b16 %v1490, %v1489
      %v1503 = vpack.c.b16 %v1492, %v1491
      %v1504 = vpack.c.b16 %v1494, %v1493
      %v1505 = vpack.c.b16 %v1496, %v1495
      %v1506 = vpack.c.b16 %v1498, %v1497
      %1515 = vmatpush.bf16.msra.mxu0 %v1506
      %1516 = vmatpush.bf16.msra.mxu0 %v1505
      %1517 = vmatpush.bf16.msra.mxu0 %v1504
      %1518 = vmatpush.bf16.msra.mxu0 %v1503
      %1519 = vmatpush.bf16.msra.mxu0 %v1502
      %1520 = vmatpush.bf16.msra.mxu0 %v1501
      %1521 = vmatpush.bf16.msra.mxu0 %v1500
      %1522 = vmatpush.bf16.msra.mxu0 %v1499
      %1523 = vmatmul.bf16.gmra.mxu0 %v1463
      %v1524 = vpop.f32.mrf.mxu0
      %v1525 = vadd.f32 %v1465, %v1524
      %v1526 = vpop.f32.mrf.mxu0
      %1527 = vdwg.mxu0
      %v1528 = vadd.f32 %v1330, %v1525
      %1529 = vst.msk [vmem:[%s516] sm:$0x1f] %vm523, %v1528
      %p1530 = scmp.lt.s32.totalorder %s27, 1
      %s1531 = scalar_select %p1530, %s27, 1
      %s1532 = smul.addr %s1531, 8
      %s1533 = scalar_lea.vmem %s16, %s1532
      // Predicated region
      $region85: #{visual_transformer_forward.5} parent=83 // pred_check
        %p1534 = pneg %p386
      $region86: #{visual_transformer_forward.5} parent=83 // pred_check_branch
        %1536 = sbr.rel (%p1534) target = $region88
      $region87: #{visual_transformer_forward.5} parent=83 // pred_region
        _
      $region88: #{visual_transformer_forward.5} parent=83 // pred_fallthru
        _
    $region84: #{visual_transformer_forward.5} parent=5 // pred_fallthru
      _
    %p1537 = scmp.le.s32.totalorder 2, %s22
    // Predicated region
    $region89: #{visual_transformer_forward.5} parent=5 // pred_check
      %p1538 = pneg %p1537
    $region90: #{visual_transformer_forward.5} parent=5 // pred_check_branch
      %1540 = sbr.rel (%p1538) target = $region92
    $region91: #{visual_transformer_forward.5} parent=5 // pred_region
      %s1541 = ssub.s32 %s22, 2
      // Predicated region
      $region93: #{visual_transformer_forward.5} parent=91 // pred_check
        %p1542 = pneg %p392
      $region94: #{visual_transformer_forward.5} parent=91 // pred_check_branch
        %1544 = sbr.rel (%p1542) target = $region96
      $region95: #{visual_transformer_forward.5} parent=91 // pred_region
        %p1545 = scmp.lt.s32.totalorder %s28, 1
        %s1546 = scalar_select %p1545, %s28, 1
        %s1547 = smul.addr %s1546, 8
        %s1548 = scalar_lea.vmem %s16, %s1547
      $region96: #{visual_transformer_forward.5} parent=91 // pred_fallthru
        _
    $region92: #{visual_transformer_forward.5} parent=5 // pred_fallthru
      _
  $region6: #{visual_transformer_forward.5} parent=0 // loop_footer
    %s26 = sadd.s32 1, %s22
  $region7: #{visual_transformer_forward.5} parent=0 // loop_footer_branch
    %21 = sbr.rel target = $region3
  $region8: #{visual_transformer_forward.5} parent=0 // loop_exit
    _

</llo_original>
